<compile_context>
chip_gen: v6e
topology: v6e:2x2x1
jax: 0.10.0
libtpu: 0.0.40
codegen_flags: <defaults>
</compile_context>

<pallas_src>
import numpy as np
import jax
import jax.numpy as jnp
from jax.experimental import pallas as pl
from jax.experimental.pallas import tpu as pltpu

# ---- problem sizes (ETTh1: 7 features) -------------------------------------
B = 2            # batch
T = 96           # input_len
D_IN = 7         # input_dim
E = 64           # embed_dim
H_BP = 32        # boundary-predictor hidden
NUM_HEADS = 2
HEAD_DIM = E // NUM_HEADS
BOUNDARY_THRESHOLD = 0.2


# --------------------------- Pallas kernel ----------------------------------
def idealdpm_kernel(x_ref, w_in_ref, b_in_ref,
                    wqkv_ref, bqkv_ref, wo_ref, bo_ref,
                    w1_ref, b1_ref, w2r_ref, b2_ref,
                    wp_ref, bp_ref,
                    out_ref, score_ref):
    """One grid step == one batch sample (grid=(B,), 'parallel')."""
    f32 = jnp.float32
    i32 = jnp.int32

    # 1) input projection: (T, D_IN) @ (D_IN, E)
    h = jnp.dot(x_ref[...], w_in_ref[...], preferred_element_type=f32) + b_in_ref[...]

    # 2) fused QKV projection (1/sqrt(head_dim) folded into the Q columns host-side)
    qkv = jnp.dot(h, wqkv_ref[...], preferred_element_type=f32) + bqkv_ref[...]   # (T, 3E)
    q = qkv[:, :E]
    k = qkv[:, E:2 * E]
    v = qkv[:, 2 * E:]

    # 2b) 2-head self-attention with full-width (T, E) operands; non-head lanes
    #     of K/V are zeroed by a lane mask (exact zero products), so the MXU
    #     contraction stays 64 lanes wide and no 32-lane sub-tile slices occur.
    lane_e = jax.lax.broadcasted_iota(i32, (1, E), 1)                  # (1, E)
    wo = wo_ref[...]
    attn = jnp.zeros((T, E), f32)
    for hh in range(NUM_HEADS):                       # static unroll (2 heads)
        c = hh * HEAD_DIM
        head_mask = (lane_e >= c) & (lane_e < c + HEAD_DIM)            # (1, E)
        k_h = jnp.where(head_mask, k, 0.0)
        v_h = jnp.where(head_mask, v, 0.0)
        logits = jax.lax.dot_general(q, k_h, (((1,), (1,)), ((), ())),
                                     preferred_element_type=f32)       # (T, T)
        logits = logits - jnp.max(logits, axis=-1, keepdims=True)
        p = jnp.exp(logits)
        # exact normalization on purpose: downstream boundary scores sit near
        # the 0.2 threshold and must stay stable vs the f32 reference.
        p = p / jnp.sum(p, axis=-1, keepdims=True)
        ctx = jnp.dot(p, v_h, preferred_element_type=f32)              # (T, E), non-head cols 0
        attn = attn + jnp.dot(ctx, wo, preferred_element_type=f32)     # == ctx_head @ wo[rows]
    attn = attn + bo_ref[...]                                          # (T, E)
    # dropout(p=0.1): identity (eval-mode semantics)
    # TODO(synk): training-mode dropout (random mask) not implemented in-kernel.

    # 3) boundary predictor; scores emitted lane-dense directly as a (1, T) row
    h1 = jnp.maximum(
        jnp.dot(attn, w1_ref[...], preferred_element_type=f32) + b1_ref[...],
        0.0)                                                            # (T, 32)
    # w2 is passed pre-transposed (1, 32); contract lane dims (transpose-rhs form)
    s_row = jax.lax.dot_general(w2r_ref[...], h1, (((1,), (1,)), ((), ())),
                                preferred_element_type=f32)            # (1, T)
    s_row = jax.nn.sigmoid(s_row + b2_ref[...])
    score_ref[0] = s_row

    # 4) dynamic patching for this sample
    tlane = jax.lax.broadcasted_iota(i32, (1, T), 1)                   # (1, T) time
    prow = jax.lax.broadcasted_iota(i32, (T, 1), 0)                    # (T, 1) patch id
    # boundaries = {0} U {t in [1, T-2] : s[t] > thr}
    is_b = jnp.where(
        (tlane == 0)
        | ((s_row > BOUNDARY_THRESHOLD) & (tlane >= 1) & (tlane <= T - 2)),
        1.0, 0.0).astype(f32)                                           # (1, T)
    # inclusive prefix sum along lanes via ONE MXU matmul with the lower-
    # triangular matrix tri[p, t] = (p <= t); replaces 7 serial shift+adds.
    tri = jnp.where(prow <= tlane, 1.0, 0.0).astype(f32)                # (T, T)
    cum = jnp.dot(is_b, tri, preferred_element_type=f32)                # (1, T)
    patch_id = (cum + 0.5).astype(i32) - 1                              # exact small ints
    # onehotT[p, t] = 1 iff timestep t belongs to patch p (int compare)
    onehotT = jnp.where(patch_id == prow, 1.0, 0.0).astype(f32)         # (T, T)
    seg = jnp.dot(onehotT, attn, preferred_element_type=f32)            # (P, E)
    cnt = jnp.sum(onehotT, axis=1, keepdims=True)                       # (P, 1) exact ints
    means = seg * (1.0 / jnp.maximum(cnt, 1.0))       # empty patch rows stay 0

    # 5) output projection, written straight into this sample's output block
    out_ref[...] = (jnp.dot(means, wp_ref[...], preferred_element_type=f32)
                    + bp_ref[...])


def idealdpm_pallas(x, params):
    (w_in, b_in, wq, bq, wk, bk, wv, bv, wo, bo,
     w1, b1, w2, b2, wp, bp) = params
    scale = float(1.0 / np.sqrt(HEAD_DIM))
    # host-side packing: fold the attention scale into Q, fuse Q|K|V,
    # and hand w2 over already transposed so the kernel can emit a lane-dense
    # score row with a supported (transpose-rhs) dot_general.
    wqkv = jnp.concatenate([wq * scale, wk, wv], axis=1)       # (E, 3E)
    bqkv = jnp.concatenate([bq * scale, bk, bv], axis=1)       # (1, 3E)
    w2r = w2.reshape(1, H_BP)                                  # (1, 32)
    x2 = x.reshape(B * T, D_IN)                                # sample b -> rows [b*T, (b+1)*T)

    def weight_spec(a):
        # constant index_map -> weight block stays VMEM-resident across steps
        return pl.BlockSpec(a.shape, lambda b: (0,) * a.ndim)

    out2, scores = pl.pallas_call(
        idealdpm_kernel,
        out_shape=(jax.ShapeDtypeStruct((B * T, E), jnp.float32),
                   jax.ShapeDtypeStruct((B, 1, T), jnp.float32)),
        grid=(B,),
        in_specs=[pl.BlockSpec((T, D_IN), lambda b: (b, 0)),
                  weight_spec(w_in), weight_spec(b_in),
                  weight_spec(wqkv), weight_spec(bqkv),
                  weight_spec(wo), weight_spec(bo),
                  weight_spec(w1), weight_spec(b1),
                  weight_spec(w2r), weight_spec(b2),
                  weight_spec(wp), weight_spec(bp)],
        out_specs=(pl.BlockSpec((T, E), lambda b: (b, 0)),
                   pl.BlockSpec((1, 1, T), lambda b: (b, 0, 0))),
        compiler_params=pltpu.CompilerParams(
            dimension_semantics=("parallel",)),   # feeds both TCs on v7x
    )(x2, w_in, b_in, wqkv, bqkv, wo, bo, w1, b1, w2r, b2, wp, bp)
    return out2.reshape(B, T, E), scores.reshape(B, T)


# ------------------------- pure-JAX reference --------------------------------
def reference_forward(x, params):
    (w_in, b_in, wq, bq, wk, bk, wv, bv, wo, bo,
     w1, b1, w2, b2, wp, bp) = params

    def one(xb):
        h = xb @ w_in + b_in
        q, k, v = h @ wq + bq, h @ wk + bk, h @ wv + bv
        hd = E // NUM_HEADS
        ctx = []
        for hh in range(NUM_HEADS):
            qs = q[:, hh * hd:(hh + 1) * hd] / np.sqrt(hd)
            ks = k[:, hh * hd:(hh + 1) * hd]
            vs = v[:, hh * hd:(hh + 1) * hd]
            p = jax.nn.softmax(qs @ ks.T, axis=-1)
            ctx.append(p @ vs)
        attn_out = jnp.concatenate(ctx, -1) @ wo + bo
        s = jax.nn.sigmoid(jnp.maximum(attn_out @ w1 + b1, 0.0) @ w2 + b2)  # (T,1)
        t = jnp.arange(T)[:, None]
        is_b = ((t == 0) | ((s > BOUNDARY_THRESHOLD) & (t >= 1) & (t <= T - 2))
                ).astype(jnp.float32)
        pid = jnp.cumsum(is_b[:, 0]) - 1.0
        onehot = (pid[:, None] == jnp.arange(T)[None, :].astype(jnp.float32)
                  ).astype(jnp.float32)                                     # (T, P)
        seg_sum = onehot.T @ attn_out
        seg_cnt = onehot.sum(0)[:, None]
        means = jnp.where(seg_cnt > 0.5, seg_sum / jnp.maximum(seg_cnt, 1.0), 0.0)
        return means @ wp + bp, s

    return jax.vmap(one)(x)


# --------------------------------- main ---------------------------------------
if __name__ == "__main__":
    key = jax.random.PRNGKey(0)
    ks = jax.random.split(key, 20)

    def init(k, shape, scale):
        return jax.random.normal(k, shape, jnp.float32) * scale

    w_in = init(ks[0], (D_IN, E), 1.0 / np.sqrt(D_IN));  b_in = init(ks[1], (1, E), 0.02)
    wq = init(ks[2], (E, E), 1.0 / np.sqrt(E));          bq = init(ks[3], (1, E), 0.02)
    wk = init(ks[4], (E, E), 1.0 / np.sqrt(E));          bk = init(ks[5], (1, E), 0.02)
    wv = init(ks[6], (E, E), 1.0 / np.sqrt(E));          bv = init(ks[7], (1, E), 0.02)
    wo = init(ks[8], (E, E), 1.0 / np.sqrt(E));          bo = init(ks[9], (1, E), 0.02)
    w1 = init(ks[10], (E, H_BP), 1.0 / np.sqrt(E));      b1 = init(ks[11], (1, H_BP), 0.02)
    w2 = init(ks[12], (H_BP, 1), 1.0 / np.sqrt(H_BP))
    b2 = jnp.full((1, 1), -1.4, jnp.float32)             # centers sigmoid near threshold
    wp = init(ks[13], (E, E), 1.0 / np.sqrt(E));         bp = init(ks[14], (1, E), 0.02)
    params = (w_in, b_in, wq, bq, wk, bk, wv, bv, wo, bo, w1, b1, w2, b2, wp, bp)

    x = jax.random.normal(ks[15], (B, T, D_IN), jnp.float32)

    out_padded, scores = idealdpm_pallas(x, params)
    out_padded = jax.block_until_ready(out_padded)
    scores = jax.block_until_ready(scores)

    # host-side glue: data-dependent crop to max_len + the module's print.
    scores_np = np.asarray(scores)                                       # (B, T)
    patch_counts = [1 + int(np.sum(scores_np[b, 1:T - 1] > BOUNDARY_THRESHOLD))
                    for b in range(B)]
    max_len = max(patch_counts)
    result = np.asarray(out_padded)[:, :max_len, :]      # == torch output (B, max_len, E)
    print(f"[IdealDPM] Patch counts per sample in batch: {patch_counts}")

    # correctness check against a pure-JAX reference of the same math
    ref_out, ref_scores = reference_forward(x, params)
    ref_out = np.asarray(jax.block_until_ready(ref_out))
    ref_scores = np.asarray(jax.block_until_ready(ref_scores))[:, :, 0]
    assert np.allclose(scores_np, ref_scores, atol=1e-3, rtol=1e-3)
    # patch structure must agree (boundary decisions feed the output shape)
    kernel_mask = scores_np[:, 1:T - 1] > BOUNDARY_THRESHOLD
    ref_mask = ref_scores[:, 1:T - 1] > BOUNDARY_THRESHOLD
    assert np.array_equal(kernel_mask, ref_mask), "patch structure mismatch vs reference"
    assert np.allclose(np.asarray(out_padded), ref_out, atol=1e-2, rtol=1e-2)
    assert result.shape == (B, max_len, E)

    print("KERNEL_OK")
</pallas_src>

<mosaic_0001>
module attributes {stable_mosaic.version = 11 : i64} {
  func.func @idealdpm_kernel(%arg0: i32, %arg1: memref<96x7xf32, #tpu.memory_space<vmem>>, %arg2: memref<7x64xf32, #tpu.memory_space<vmem>>, %arg3: memref<1x64xf32, #tpu.memory_space<vmem>>, %arg4: memref<64x192xf32, #tpu.memory_space<vmem>>, %arg5: memref<1x192xf32, #tpu.memory_space<vmem>>, %arg6: memref<64x64xf32, #tpu.memory_space<vmem>>, %arg7: memref<1x64xf32, #tpu.memory_space<vmem>>, %arg8: memref<64x32xf32, #tpu.memory_space<vmem>>, %arg9: memref<1x32xf32, #tpu.memory_space<vmem>>, %arg10: memref<1x32xf32, #tpu.memory_space<vmem>>, %arg11: memref<1x1xf32, #tpu.memory_space<vmem>>, %arg12: memref<64x64xf32, #tpu.memory_space<vmem>>, %arg13: memref<1x64xf32, #tpu.memory_space<vmem>>, %arg14: memref<96x64xf32, #tpu.memory_space<vmem>>, %arg15: memref<1x1x96xf32, #tpu.memory_space<vmem>>) attributes {dimension_semantics = [#tpu.dimension_semantics<parallel>], iteration_bounds = array<i64: 2>, scalar_prefetch = 0 : i64, scratch_operands = 0 : i64, tpu.core_type = #tpu.core_type<tc>, window_params = [{transform_indices = @transform_0, window_bounds = array<i64: 96, 7>}, {pipeline_mode = #tpu.pipeline_mode<synchronous>, transform_indices = @transform_1, window_bounds = array<i64: 7, 64>}, {pipeline_mode = #tpu.pipeline_mode<synchronous>, transform_indices = @transform_2, window_bounds = array<i64: 1, 64>}, {pipeline_mode = #tpu.pipeline_mode<synchronous>, transform_indices = @transform_3, window_bounds = array<i64: 64, 192>}, {pipeline_mode = #tpu.pipeline_mode<synchronous>, transform_indices = @transform_4, window_bounds = array<i64: 1, 192>}, {pipeline_mode = #tpu.pipeline_mode<synchronous>, transform_indices = @transform_5, window_bounds = array<i64: 64, 64>}, {pipeline_mode = #tpu.pipeline_mode<synchronous>, transform_indices = @transform_6, window_bounds = array<i64: 1, 64>}, {pipeline_mode = #tpu.pipeline_mode<synchronous>, transform_indices = @transform_7, window_bounds = array<i64: 64, 32>}, {pipeline_mode = #tpu.pipeline_mode<synchronous>, transform_indices = @transform_8, window_bounds = array<i64: 1, 32>}, {pipeline_mode = #tpu.pipeline_mode<synchronous>, transform_indices = @transform_9, window_bounds = array<i64: 1, 32>}, {pipeline_mode = #tpu.pipeline_mode<synchronous>, transform_indices = @transform_10, window_bounds = array<i64: 1, 1>}, {pipeline_mode = #tpu.pipeline_mode<synchronous>, transform_indices = @transform_11, window_bounds = array<i64: 64, 64>}, {pipeline_mode = #tpu.pipeline_mode<synchronous>, transform_indices = @transform_12, window_bounds = array<i64: 1, 64>}, {transform_indices = @transform_13, window_bounds = array<i64: 96, 64>}, {transform_indices = @transform_14, window_bounds = array<i64: 1, 1, 96>}]} {
    %c0 = arith.constant 0 : index
    %c0_0 = arith.constant 0 : index
    %0 = vector.load %arg1[%c0, %c0_0] : memref<96x7xf32, #tpu.memory_space<vmem>>, vector<96x7xf32>
    %c0_1 = arith.constant 0 : index
    %c0_2 = arith.constant 0 : index
    %1 = vector.load %arg2[%c0_1, %c0_2] : memref<7x64xf32, #tpu.memory_space<vmem>>, vector<7x64xf32>
    %cst = arith.constant dense<0.000000e+00> : vector<96x64xf32>
    %2 = tpu.matmul %0, %1, %cst {dimension_numbers = #tpu.dot_dimension_numbers<[1], [0], [0], [1], [0, 0, 1, 1], [], []>} : vector<96x7xf32>, vector<7x64xf32>, vector<96x64xf32> -> vector<96x64xf32>
    %c0_3 = arith.constant 0 : index
    %c0_4 = arith.constant 0 : index
    %3 = vector.load %arg3[%c0_3, %c0_4] : memref<1x64xf32, #tpu.memory_space<vmem>>, vector<1x64xf32>
    %4 = vector.broadcast %3 : vector<1x64xf32> to vector<96x64xf32>
    %5 = arith.addf %2, %4 : vector<96x64xf32>
    %c0_5 = arith.constant 0 : index
    %c0_6 = arith.constant 0 : index
    %6 = vector.load %arg4[%c0_5, %c0_6] : memref<64x192xf32, #tpu.memory_space<vmem>>, vector<64x192xf32>
    %cst_7 = arith.constant dense<0.000000e+00> : vector<96x192xf32>
    %7 = tpu.matmul %5, %6, %cst_7 {dimension_numbers = #tpu.dot_dimension_numbers<[1], [0], [0], [1], [0, 0, 1, 1], [], []>} : vector<96x64xf32>, vector<64x192xf32>, vector<96x192xf32> -> vector<96x192xf32>
    %c0_8 = arith.constant 0 : index
    %c0_9 = arith.constant 0 : index
    %8 = vector.load %arg5[%c0_8, %c0_9] : memref<1x192xf32, #tpu.memory_space<vmem>>, vector<1x192xf32>
    %9 = vector.broadcast %8 : vector<1x192xf32> to vector<96x192xf32>
    %10 = arith.addf %7, %9 : vector<96x192xf32>
    %11 = vector.extract_strided_slice %10 {offsets = [0, 0], sizes = [96, 64], strides = [1, 1]} : vector<96x192xf32> to vector<96x64xf32>
    %12 = vector.extract_strided_slice %10 {offsets = [0, 64], sizes = [96, 64], strides = [1, 1]} : vector<96x192xf32> to vector<96x64xf32>
    %13 = vector.extract_strided_slice %10 {offsets = [0, 128], sizes = [96, 64], strides = [1, 1]} : vector<96x192xf32> to vector<96x64xf32>
    %14 = tpu.iota {dimensions = array<i32: 1>} : vector<1x64xi32>
    %c0_10 = arith.constant 0 : index
    %c0_11 = arith.constant 0 : index
    %15 = vector.load %arg6[%c0_10, %c0_11] : memref<64x64xf32, #tpu.memory_space<vmem>>, vector<64x64xf32>
    %cst_12 = arith.constant 0.000000e+00 : f32
    %16 = vector.broadcast %cst_12 : f32 to vector<96x64xf32>
    %c0_i32 = arith.constant 0 : i32
    %17 = vector.broadcast %c0_i32 : i32 to vector<1x64xi32>
    %18 = arith.cmpi sge, %14, %17 : vector<1x64xi32>
    %c32_i32 = arith.constant 32 : i32
    %19 = vector.broadcast %c32_i32 : i32 to vector<1x64xi32>
    %20 = arith.cmpi slt, %14, %19 : vector<1x64xi32>
    %21 = arith.andi %18, %20 : vector<1x64xi1>
    %cst_13 = arith.constant 0.000000e+00 : f32
    %22 = vector.shape_cast %21 : vector<1x64xi1> to vector<1x64xi1>
    %23 = vector.broadcast %22 : vector<1x64xi1> to vector<96x64xi1>
    %24 = vector.broadcast %cst_13 : f32 to vector<96x64xf32>
    %25 = arith.select %23, %12, %24 : vector<96x64xi1>, vector<96x64xf32>
    %cst_14 = arith.constant 0.000000e+00 : f32
    %26 = vector.shape_cast %21 : vector<1x64xi1> to vector<1x64xi1>
    %27 = vector.broadcast %26 : vector<1x64xi1> to vector<96x64xi1>
    %28 = vector.broadcast %cst_14 : f32 to vector<96x64xf32>
    %29 = arith.select %27, %13, %28 : vector<96x64xi1>, vector<96x64xf32>
    %cst_15 = arith.constant dense<0.000000e+00> : vector<96x96xf32>
    %30 = tpu.matmul %11, %25, %cst_15 {dimension_numbers = #tpu.dot_dimension_numbers<[1], [1], [0], [0], [0, 0, 1, 0], [], []>} : vector<96x64xf32>, vector<96x64xf32>, vector<96x96xf32> -> vector<96x96xf32>
    %cst_16 = arith.constant dense<0xFF800000> : vector<96xf32>
    %31 = vector.multi_reduction <maximumf>, %30, %cst_16 [1] : vector<96x96xf32> to vector<96xf32>
    %32 = vector.shape_cast %31 : vector<96xf32> to vector<96x1xf32>
    %33 = vector.broadcast %32 : vector<96x1xf32> to vector<96x96xf32>
    %34 = arith.subf %30, %33 : vector<96x96xf32>
    %35 = math.exp %34 : vector<96x96xf32>
    %cst_17 = arith.constant dense<0.000000e+00> : vector<96xf32>
    %36 = vector.multi_reduction <add>, %35, %cst_17 [1] : vector<96x96xf32> to vector<96xf32>
    %37 = vector.shape_cast %36 : vector<96xf32> to vector<96x1xf32>
    %38 = vector.broadcast %37 : vector<96x1xf32> to vector<96x96xf32>
    %39 = arith.divf %35, %38 : vector<96x96xf32>
    %cst_18 = arith.constant dense<0.000000e+00> : vector<96x64xf32>
    %40 = tpu.matmul %39, %29, %cst_18 {dimension_numbers = #tpu.dot_dimension_numbers<[1], [0], [0], [1], [0, 0, 1, 1], [], []>} : vector<96x96xf32>, vector<96x64xf32>, vector<96x64xf32> -> vector<96x64xf32>
    %cst_19 = arith.constant dense<0.000000e+00> : vector<96x64xf32>
    %41 = tpu.matmul %40, %15, %cst_19 {dimension_numbers = #tpu.dot_dimension_numbers<[1], [0], [0], [1], [0, 0, 1, 1], [], []>} : vector<96x64xf32>, vector<64x64xf32>, vector<96x64xf32> -> vector<96x64xf32>
    %42 = arith.addf %16, %41 : vector<96x64xf32>
    %c32_i32_20 = arith.constant 32 : i32
    %43 = vector.broadcast %c32_i32_20 : i32 to vector<1x64xi32>
    %44 = arith.cmpi sge, %14, %43 : vector<1x64xi32>
    %c64_i32 = arith.constant 64 : i32
    %45 = vector.broadcast %c64_i32 : i32 to vector<1x64xi32>
    %46 = arith.cmpi slt, %14, %45 : vector<1x64xi32>
    %47 = arith.andi %44, %46 : vector<1x64xi1>
    %cst_21 = arith.constant 0.000000e+00 : f32
    %48 = vector.shape_cast %47 : vector<1x64xi1> to vector<1x64xi1>
    %49 = vector.broadcast %48 : vector<1x64xi1> to vector<96x64xi1>
    %50 = vector.broadcast %cst_21 : f32 to vector<96x64xf32>
    %51 = arith.select %49, %12, %50 : vector<96x64xi1>, vector<96x64xf32>
    %cst_22 = arith.constant 0.000000e+00 : f32
    %52 = vector.shape_cast %47 : vector<1x64xi1> to vector<1x64xi1>
    %53 = vector.broadcast %52 : vector<1x64xi1> to vector<96x64xi1>
    %54 = vector.broadcast %cst_22 : f32 to vector<96x64xf32>
    %55 = arith.select %53, %13, %54 : vector<96x64xi1>, vector<96x64xf32>
    %cst_23 = arith.constant dense<0.000000e+00> : vector<96x96xf32>
    %56 = tpu.matmul %11, %51, %cst_23 {dimension_numbers = #tpu.dot_dimension_numbers<[1], [1], [0], [0], [0, 0, 1, 0], [], []>} : vector<96x64xf32>, vector<96x64xf32>, vector<96x96xf32> -> vector<96x96xf32>
    %cst_24 = arith.constant dense<0xFF800000> : vector<96xf32>
    %57 = vector.multi_reduction <maximumf>, %56, %cst_24 [1] : vector<96x96xf32> to vector<96xf32>
    %58 = vector.shape_cast %57 : vector<96xf32> to vector<96x1xf32>
    %59 = vector.broadcast %58 : vector<96x1xf32> to vector<96x96xf32>
    %60 = arith.subf %56, %59 : vector<96x96xf32>
    %61 = math.exp %60 : vector<96x96xf32>
    %cst_25 = arith.constant dense<0.000000e+00> : vector<96xf32>
    %62 = vector.multi_reduction <add>, %61, %cst_25 [1] : vector<96x96xf32> to vector<96xf32>
    %63 = vector.shape_cast %62 : vector<96xf32> to vector<96x1xf32>
    %64 = vector.broadcast %63 : vector<96x1xf32> to vector<96x96xf32>
    %65 = arith.divf %61, %64 : vector<96x96xf32>
    %cst_26 = arith.constant dense<0.000000e+00> : vector<96x64xf32>
    %66 = tpu.matmul %65, %55, %cst_26 {dimension_numbers = #tpu.dot_dimension_numbers<[1], [0], [0], [1], [0, 0, 1, 1], [], []>} : vector<96x96xf32>, vector<96x64xf32>, vector<96x64xf32> -> vector<96x64xf32>
    %cst_27 = arith.constant dense<0.000000e+00> : vector<96x64xf32>
    %67 = tpu.matmul %66, %15, %cst_27 {dimension_numbers = #tpu.dot_dimension_numbers<[1], [0], [0], [1], [0, 0, 1, 1], [], []>} : vector<96x64xf32>, vector<64x64xf32>, vector<96x64xf32> -> vector<96x64xf32>
    %68 = arith.addf %42, %67 : vector<96x64xf32>
    %c0_28 = arith.constant 0 : index
    %c0_29 = arith.constant 0 : index
    %69 = vector.load %arg7[%c0_28, %c0_29] : memref<1x64xf32, #tpu.memory_space<vmem>>, vector<1x64xf32>
    %70 = vector.broadcast %69 : vector<1x64xf32> to vector<96x64xf32>
    %71 = arith.addf %68, %70 : vector<96x64xf32>
    %c0_30 = arith.constant 0 : index
    %c0_31 = arith.constant 0 : index
    %72 = vector.load %arg8[%c0_30, %c0_31] : memref<64x32xf32, #tpu.memory_space<vmem>>, vector<64x32xf32>
    %cst_32 = arith.constant dense<0.000000e+00> : vector<96x32xf32>
    %73 = tpu.matmul %71, %72, %cst_32 {dimension_numbers = #tpu.dot_dimension_numbers<[1], [0], [0], [1], [0, 0, 1, 1], [], []>} : vector<96x64xf32>, vector<64x32xf32>, vector<96x32xf32> -> vector<96x32xf32>
    %c0_33 = arith.constant 0 : index
    %c0_34 = arith.constant 0 : index
    %74 = vector.load %arg9[%c0_33, %c0_34] : memref<1x32xf32, #tpu.memory_space<vmem>>, vector<1x32xf32>
    %75 = vector.broadcast %74 : vector<1x32xf32> to vector<96x32xf32>
    %76 = arith.addf %73, %75 : vector<96x32xf32>
    %cst_35 = arith.constant 0.000000e+00 : f32
    %77 = vector.broadcast %cst_35 : f32 to vector<96x32xf32>
    %78 = arith.maximumf %76, %77 : vector<96x32xf32>
    %c0_36 = arith.constant 0 : index
    %c0_37 = arith.constant 0 : index
    %79 = vector.load %arg10[%c0_36, %c0_37] : memref<1x32xf32, #tpu.memory_space<vmem>>, vector<1x32xf32>
    %cst_38 = arith.constant dense<0.000000e+00> : vector<1x96xf32>
    %80 = tpu.matmul %79, %78, %cst_38 {dimension_numbers = #tpu.dot_dimension_numbers<[1], [1], [0], [0], [0, 0, 1, 0], [], []>} : vector<1x32xf32>, vector<96x32xf32>, vector<1x96xf32> -> vector<1x96xf32>
    %c0_39 = arith.constant 0 : index
    %c0_40 = arith.constant 0 : index
    %81 = vector.load %arg11[%c0_39, %c0_40] : memref<1x1xf32, #tpu.memory_space<vmem>>, vector<1x1xf32>
    %82 = vector.broadcast %81 : vector<1x1xf32> to vector<1x96xf32>
    %83 = arith.addf %80, %82 : vector<1x96xf32>
    %84 = arith.negf %83 : vector<1x96xf32>
    %85 = math.exp %84 : vector<1x96xf32>
    %cst_41 = arith.constant 1.000000e+00 : f32
    %86 = vector.broadcast %cst_41 : f32 to vector<1x96xf32>
    %87 = arith.addf %86, %85 : vector<1x96xf32>
    %88 = arith.divf %86, %87 : vector<1x96xf32>
    %c0_42 = arith.constant 0 : index
    %c0_43 = arith.constant 0 : index
    %c0_44 = arith.constant 0 : index
    %89 = vector.load %arg15[%c0_42, %c0_43, %c0_44] : memref<1x1x96xf32, #tpu.memory_space<vmem>>, vector<1x1x96xf32>
    %90 = vector.shape_cast %89 : vector<1x1x96xf32> to vector<1x96xf32>
    %91 = vector.shape_cast %88 : vector<1x96xf32> to vector<1x1x96xf32>
    tpu.vector_store %arg15[%c0_42, %c0_43, %c0_44], %91 {strides = array<i32>} : memref<1x1x96xf32, #tpu.memory_space<vmem>>, vector<1x1x96xf32>,
    %92 = tpu.iota {dimensions = array<i32: 1>} : vector<1x96xi32>
    %93 = tpu.iota {dimensions = array<i32: 0>} : vector<96x1xi32>
    %c0_i32_45 = arith.constant 0 : i32
    %94 = vector.broadcast %c0_i32_45 : i32 to vector<1x96xi32>
    %95 = arith.cmpi eq, %92, %94 : vector<1x96xi32>
    %cst_46 = arith.constant 2.000000e-01 : f32
    %96 = vector.broadcast %cst_46 : f32 to vector<1x96xf32>
    %97 = arith.cmpf ogt, %88, %96 : vector<1x96xf32>
    %c1_i32 = arith.constant 1 : i32
    %98 = vector.broadcast %c1_i32 : i32 to vector<1x96xi32>
    %99 = arith.cmpi sge, %92, %98 : vector<1x96xi32>
    %100 = arith.andi %97, %99 : vector<1x96xi1>
    %c94_i32 = arith.constant 94 : i32
    %101 = vector.broadcast %c94_i32 : i32 to vector<1x96xi32>
    %102 = arith.cmpi sle, %92, %101 : vector<1x96xi32>
    %103 = arith.andi %100, %102 : vector<1x96xi1>
    %104 = arith.ori %95, %103 : vector<1x96xi1>
    %cst_47 = arith.constant 1.000000e+00 : f32
    %cst_48 = arith.constant 0.000000e+00 : f32
    %105 = vector.broadcast %cst_47 : f32 to vector<1x96xf32>
    %106 = vector.broadcast %cst_48 : f32 to vector<1x96xf32>
    %107 = arith.select %104, %105, %106 : vector<1x96xi1>, vector<1x96xf32>
    %108 = vector.broadcast %93 : vector<96x1xi32> to vector<96x96xi32>
    %109 = vector.broadcast %92 : vector<1x96xi32> to vector<96x96xi32>
    %110 = arith.cmpi sle, %108, %109 : vector<96x96xi32>
    %cst_49 = arith.constant 1.000000e+00 : f32
    %cst_50 = arith.constant 0.000000e+00 : f32
    %111 = vector.broadcast %cst_49 : f32 to vector<96x96xf32>
    %112 = vector.broadcast %cst_50 : f32 to vector<96x96xf32>
    %113 = arith.select %110, %111, %112 : vector<96x96xi1>, vector<96x96xf32>
    %cst_51 = arith.constant dense<0.000000e+00> : vector<1x96xf32>
    %114 = tpu.matmul %107, %113, %cst_51 {dimension_numbers = #tpu.dot_dimension_numbers<[1], [0], [0], [1], [0, 0, 1, 1], [], []>} : vector<1x96xf32>, vector<96x96xf32>, vector<1x96xf32> -> vector<1x96xf32>
    %cst_52 = arith.constant 5.000000e-01 : f32
    %115 = vector.broadcast %cst_52 : f32 to vector<1x96xf32>
    %116 = arith.addf %114, %115 : vector<1x96xf32>
    %117 = arith.fptosi %116 : vector<1x96xf32> to vector<1x96xi32>
    %c1_i32_53 = arith.constant 1 : i32
    %118 = vector.broadcast %c1_i32_53 : i32 to vector<1x96xi32>
    %119 = arith.subi %117, %118 : vector<1x96xi32>
    %120 = vector.broadcast %119 : vector<1x96xi32> to vector<96x96xi32>
    %121 = vector.broadcast %93 : vector<96x1xi32> to vector<96x96xi32>
    %122 = arith.cmpi eq, %120, %121 : vector<96x96xi32>
    %cst_54 = arith.constant 1.000000e+00 : f32
    %cst_55 = arith.constant 0.000000e+00 : f32
    %123 = vector.broadcast %cst_54 : f32 to vector<96x96xf32>
    %124 = vector.broadcast %cst_55 : f32 to vector<96x96xf32>
    %125 = arith.select %122, %123, %124 : vector<96x96xi1>, vector<96x96xf32>
    %cst_56 = arith.constant dense<0.000000e+00> : vector<96x64xf32>
    %126 = tpu.matmul %125, %71, %cst_56 {dimension_numbers = #tpu.dot_dimension_numbers<[1], [0], [0], [1], [0, 0, 1, 1], [], []>} : vector<96x96xf32>, vector<96x64xf32>, vector<96x64xf32> -> vector<96x64xf32>
    %cst_57 = arith.constant dense<0.000000e+00> : vector<96xf32>
    %127 = vector.multi_reduction <add>, %125, %cst_57 [1] : vector<96x96xf32> to vector<96xf32>
    %128 = vector.shape_cast %127 : vector<96xf32> to vector<96x1xf32>
    %cst_58 = arith.constant 1.000000e+00 : f32
    %129 = vector.broadcast %cst_58 : f32 to vector<96x1xf32>
    %130 = arith.maximumf %128, %129 : vector<96x1xf32>
    %cst_59 = arith.constant 1.000000e+00 : f32
    %131 = vector.broadcast %cst_59 : f32 to vector<96x1xf32>
    %132 = arith.divf %131, %130 : vector<96x1xf32>
    %133 = vector.broadcast %132 : vector<96x1xf32> to vector<96x64xf32>
    %134 = arith.mulf %126, %133 : vector<96x64xf32>
    %c0_60 = arith.constant 0 : index
    %c0_61 = arith.constant 0 : index
    %135 = vector.load %arg12[%c0_60, %c0_61] : memref<64x64xf32, #tpu.memory_space<vmem>>, vector<64x64xf32>
    %cst_62 = arith.constant dense<0.000000e+00> : vector<96x64xf32>
    %136 = tpu.matmul %134, %135, %cst_62 {dimension_numbers = #tpu.dot_dimension_numbers<[1], [0], [0], [1], [0, 0, 1, 1], [], []>} : vector<96x64xf32>, vector<64x64xf32>, vector<96x64xf32> -> vector<96x64xf32>
    %c0_63 = arith.constant 0 : index
    %c0_64 = arith.constant 0 : index
    %137 = vector.load %arg13[%c0_63, %c0_64] : memref<1x64xf32, #tpu.memory_space<vmem>>, vector<1x64xf32>
    %138 = vector.broadcast %137 : vector<1x64xf32> to vector<96x64xf32>
    %139 = arith.addf %136, %138 : vector<96x64xf32>
    %c0_65 = arith.constant 0 : index
    %c0_66 = arith.constant 0 : index
    %140 = vector.load %arg14[%c0_65, %c0_66] : memref<96x64xf32, #tpu.memory_space<vmem>>, vector<96x64xf32>
    tpu.vector_store %arg14[%c0_65, %c0_66], %139 {strides = array<i32>} : memref<96x64xf32, #tpu.memory_space<vmem>>, vector<96x64xf32>,
    return
  }
  func.func @transform_0(%arg0: i32) -> (i32, i32) {
    %c0_i32 = arith.constant 0 : i32
    %c0_i32_0 = arith.constant 0 : i32
    return %arg0, %c0_i32 : i32, i32
  }
  func.func @transform_1(%arg0: i32) -> (i32, i32) {
    %c0_i32 = arith.constant 0 : i32
    %c0_i32_0 = arith.constant 0 : i32
    %c0_i32_1 = arith.constant 0 : i32
    return %c0_i32, %c0_i32_0 : i32, i32
  }
  func.func @transform_2(%arg0: i32) -> (i32, i32) {
    %c0_i32 = arith.constant 0 : i32
    %c0_i32_0 = arith.constant 0 : i32
    %c0_i32_1 = arith.constant 0 : i32
    return %c0_i32, %c0_i32_0 : i32, i32
  }
  func.func @transform_3(%arg0: i32) -> (i32, i32) {
    %c0_i32 = arith.constant 0 : i32
    %c0_i32_0 = arith.constant 0 : i32
    %c0_i32_1 = arith.constant 0 : i32
    return %c0_i32, %c0_i32_0 : i32, i32
  }
  func.func @transform_4(%arg0: i32) -> (i32, i32) {
    %c0_i32 = arith.constant 0 : i32
    %c0_i32_0 = arith.constant 0 : i32
    %c0_i32_1 = arith.constant 0 : i32
    return %c0_i32, %c0_i32_0 : i32, i32
  }
  func.func @transform_5(%arg0: i32) -> (i32, i32) {
    %c0_i32 = arith.constant 0 : i32
    %c0_i32_0 = arith.constant 0 : i32
    %c0_i32_1 = arith.constant 0 : i32
    return %c0_i32, %c0_i32_0 : i32, i32
  }
  func.func @transform_6(%arg0: i32) -> (i32, i32) {
    %c0_i32 = arith.constant 0 : i32
    %c0_i32_0 = arith.constant 0 : i32
    %c0_i32_1 = arith.constant 0 : i32
    return %c0_i32, %c0_i32_0 : i32, i32
  }
  func.func @transform_7(%arg0: i32) -> (i32, i32) {
    %c0_i32 = arith.constant 0 : i32
    %c0_i32_0 = arith.constant 0 : i32
    %c0_i32_1 = arith.constant 0 : i32
    return %c0_i32, %c0_i32_0 : i32, i32
  }
  func.func @transform_8(%arg0: i32) -> (i32, i32) {
    %c0_i32 = arith.constant 0 : i32
    %c0_i32_0 = arith.constant 0 : i32
    %c0_i32_1 = arith.constant 0 : i32
    return %c0_i32, %c0_i32_0 : i32, i32
  }
  func.func @transform_9(%arg0: i32) -> (i32, i32) {
    %c0_i32 = arith.constant 0 : i32
    %c0_i32_0 = arith.constant 0 : i32
    %c0_i32_1 = arith.constant 0 : i32
    return %c0_i32, %c0_i32_0 : i32, i32
  }
  func.func @transform_10(%arg0: i32) -> (i32, i32) {
    %c0_i32 = arith.constant 0 : i32
    %c0_i32_0 = arith.constant 0 : i32
    %c0_i32_1 = arith.constant 0 : i32
    return %c0_i32, %c0_i32_0 : i32, i32
  }
  func.func @transform_11(%arg0: i32) -> (i32, i32) {
    %c0_i32 = arith.constant 0 : i32
    %c0_i32_0 = arith.constant 0 : i32
    %c0_i32_1 = arith.constant 0 : i32
    return %c0_i32, %c0_i32_0 : i32, i32
  }
  func.func @transform_12(%arg0: i32) -> (i32, i32) {
    %c0_i32 = arith.constant 0 : i32
    %c0_i32_0 = arith.constant 0 : i32
    %c0_i32_1 = arith.constant 0 : i32
    return %c0_i32, %c0_i32_0 : i32, i32
  }
  func.func @transform_13(%arg0: i32) -> (i32, i32) {
    %c0_i32 = arith.constant 0 : i32
    %c0_i32_0 = arith.constant 0 : i32
    return %arg0, %c0_i32 : i32, i32
  }
  func.func @transform_14(%arg0: i32) -> (i32, i32, i32) {
    %c0_i32 = arith.constant 0 : i32
    %c0_i32_0 = arith.constant 0 : i32
    %c0_i32_1 = arith.constant 0 : i32
    return %arg0, %c0_i32, %c0_i32_0 : i32, i32, i32
  }
}

</mosaic_0001>

<llo_original>
// kernel: tpu_custom_call.1
$region0: #{tpu_custom_call.1}
  #allocation0 [shape = 'u32[]', space=smem, size = 0x4, offset = 0x4, fixed_abs, tag = 'smem constant byte address 0x4 - core index']
  #allocation1 [shape = 'u32[144,128]{1,0:T(1,128)}', space=vmem, size = 0x12000, scoped, tag = 'internal scratch']
  #allocation2 [shape = 'f32[1,1]{1,0:T(1,128)S(1)}', space=vmem, size = 0x200, scoped, tag = 'scoped memory for tpu_custom_call.1']
  %s0 = inlined_call_operand.vmem [shape: f32[192,7], index: 0, kind: input, shape index: {}]
  %s1 = inlined_call_operand.vmem [shape: f32[7,64], index: 1, kind: input, shape index: {}]
  %s2 = inlined_call_operand.vmem [shape: f32[1,64], index: 2, kind: input, shape index: {}]
  %s3 = inlined_call_operand.vmem [shape: f32[64,192], index: 3, kind: input, shape index: {}]
  %s4 = inlined_call_operand.vmem [shape: f32[1,192], index: 4, kind: input, shape index: {}]
  %s5 = inlined_call_operand.vmem [shape: f32[64,64], index: 5, kind: input, shape index: {}]
  %s6 = inlined_call_operand.vmem [shape: f32[1,64], index: 6, kind: input, shape index: {}]
  %s7 = inlined_call_operand.vmem [shape: f32[64,32], index: 7, kind: input, shape index: {}]
  %s8 = inlined_call_operand.vmem [shape: f32[1,32], index: 8, kind: input, shape index: {}]
  %s9 = inlined_call_operand.vmem [shape: f32[1,32], index: 9, kind: input, shape index: {}]
  %s10 = inlined_call_operand.<no memory space> [shape: f32[1,1], index: 10, kind: input, shape index: {}]
  %s11 = inlined_call_operand.vmem [shape: f32[64,64], index: 11, kind: input, shape index: {}]
  %s12 = inlined_call_operand.vmem [shape: f32[1,64], index: 12, kind: input, shape index: {}]
  %s13 = inlined_call_operand.vmem [shape: f32[192,64], index: 13, kind: output, shape index: {0}]
  %s14 = inlined_call_operand.hbm [shape: f32[2,1,96], index: 14, kind: output, shape index: {1}]
  %15 = xla_tuple %s13, %s14
  %s16 = sld [smem:[#allocation0]]
  $region93: #{tpu_custom_call.1} parent=0
    _
  %s18 = ssub.s32 1, %s16
  %s19 = scalar_select 0, %s18, %s16
  %v20 = vstv %s10
  %21 = vst [vmem:[#allocation2] sm:$0x1] %v20
  $region1: #{tpu_custom_call.1} parent=0
    #allocation3 [shape = 'u8[1024]{0}', space=vmem, size = 0x400, scoped, tag = 'output window, operand 1']
    #allocation4 [shape = 's32[2]{0}', space=sflag, size = 0x8, scoped, tag = 'scoped memory for tpu_custom_call.1']
    %22 = vsyncpa [#allocation4], 0
    %s23 = scalar_lea.sflag [#allocation4], 1
    %24 = vsyncpa %s23, 0
    loop: start=0, step=1, limit=4
    $region2: #{tpu_custom_call.1} parent=1 // loop_pre_header
      _
    $region3: #{tpu_custom_call.1} parent=1 // loop_header
      %s26 = sphi 0, %s30
      %p27 = scmp.ge.s32.totalorder %s26, 4
      %s36 = sphi 0, %s38
      %s39 = sphi 0, %s36
      %s40 = sphi 0, %s39
      %s56 = sphi 0, %s40
      %s60 = sphi 0, %s60
      %s62 = sphi 0, %s60
      %s63 = sphi 0, %s62
      %s77 = sphi 0, %s63
      %s81 = sphi 0, %s81
      %s83 = sphi 0, %s81
      %s84 = sphi 0, %s83
      %s98 = sphi 0, %s84
      %s102 = sphi 0, %s102
      %s104 = sphi 0, %s102
      %s105 = sphi 0, %s104
      %s119 = sphi 0, %s105
      %s123 = sphi 0, %s123
      %s125 = sphi 0, %s123
      %s126 = sphi 0, %s125
      %s140 = sphi 0, %s126
      %s144 = sphi 0, %s144
      %s146 = sphi 0, %s144
      %s147 = sphi 0, %s146
      %s161 = sphi 0, %s147
      %s165 = sphi 0, %s165
      %s167 = sphi 0, %s165
      %s168 = sphi 0, %s167
      %s182 = sphi 0, %s168
      %s186 = sphi 0, %s186
      %s188 = sphi 0, %s186
      %s189 = sphi 0, %s188
      %s203 = sphi 0, %s189
      %s207 = sphi 0, %s207
      %s209 = sphi 0, %s207
      %s210 = sphi 0, %s209
      %s224 = sphi 0, %s210
      %s228 = sphi 0, %s228
      %s230 = sphi 0, %s228
      %s231 = sphi 0, %s230
      %s245 = sphi 0, %s231
      %s249 = sphi 0, %s249
      %s251 = sphi 0, %s249
      %s252 = sphi 0, %s251
      %s266 = sphi 0, %s252
      %s270 = sphi 0, %s270
      %s272 = sphi 0, %s270
      %s273 = sphi 0, %s272
      %s287 = sphi 0, %s273
      %s291 = sphi 0, %s291
      %s293 = sphi 0, %s291
      %s294 = sphi 0, %s293
      %s308 = sphi 0, %s294
      %s314 = sphi 0, %s316
      %s317 = sphi 0, %s314
      %s318 = sphi 0, %s317
      %s334 = sphi 0, %s318
      %s340 = sphi 0, %s342
      %s343 = sphi 0, %s340
      %s344 = sphi 0, %s343
      %s360 = sphi 0, %s344
    $region4: #{tpu_custom_call.1} parent=1 // loop_header_branch
      %29 = sbr.rel (%p27) target = $region8
    $region5: #{tpu_custom_call.1} parent=1 // loop_body
      %s31 = ssub.s32 %s26, 1
      %s32 = ssub.s32 %s26, 2
      %s33 = sadd.s32 %s26, 1
      %s34 = ssub.s32 %s26, %s33
      %p35 = scmp.eq.s32.totalorder %s34, 0
      %s37 = sadd.s32 %s36, 1
      %s38 = scalar_select %p35, %s36, %s37
      %p41 = pneg %p35
      %p42 = scmp.eq.s32.totalorder %s26, 1
      %p43 = por %p41, %p42
      %p44 = scmp.ne.s32.totalorder %s36, %s39
      %p45 = scmp.eq.s32.totalorder %s26, 0
      %p46 = por %p44, %p45
      %p47 = scmp.ne.s32.totalorder %s36, %s39
      %p48 = scmp.eq.s32.totalorder %s31, 1
      %p49 = por %p47, %p48
      %p50 = scmp.ne.s32.totalorder %s39, %s40
      %p51 = scmp.eq.s32.totalorder %s31, 0
      %p52 = por %p50, %p51
      %p53 = scmp.ne.s32.totalorder %s39, %s40
      %p54 = scmp.eq.s32.totalorder %s32, 1
      %p55 = por %p53, %p54
      %p57 = scmp.ne.s32.totalorder %s40, %s56
      %p58 = scmp.eq.s32.totalorder %s32, 0
      %p59 = por %p57, %p58
      %s61 = sadd.s32 %s60, 1
      %p64 = scmp.eq.s32.totalorder %s26, 1
      %p65 = scmp.ne.s32.totalorder %s60, %s62
      %p66 = scmp.eq.s32.totalorder %s26, 0
      %p67 = por %p65, %p66
      %p68 = scmp.ne.s32.totalorder %s60, %s62
      %p69 = scmp.eq.s32.totalorder %s31, 1
      %p70 = por %p68, %p69
      %p71 = scmp.ne.s32.totalorder %s62, %s63
      %p72 = scmp.eq.s32.totalorder %s31, 0
      %p73 = por %p71, %p72
      %p74 = scmp.ne.s32.totalorder %s62, %s63
      %p75 = scmp.eq.s32.totalorder %s32, 1
      %p76 = por %p74, %p75
      %p78 = scmp.ne.s32.totalorder %s63, %s77
      %p79 = scmp.eq.s32.totalorder %s32, 0
      %p80 = por %p78, %p79
      %s82 = sadd.s32 %s81, 1
      %p85 = scmp.eq.s32.totalorder %s26, 1
      %p86 = scmp.ne.s32.totalorder %s81, %s83
      %p87 = scmp.eq.s32.totalorder %s26, 0
      %p88 = por %p86, %p87
      %p89 = scmp.ne.s32.totalorder %s81, %s83
      %p90 = scmp.eq.s32.totalorder %s31, 1
      %p91 = por %p89, %p90
      %p92 = scmp.ne.s32.totalorder %s83, %s84
      %p93 = scmp.eq.s32.totalorder %s31, 0
      %p94 = por %p92, %p93
      %p95 = scmp.ne.s32.totalorder %s83, %s84
      %p96 = scmp.eq.s32.totalorder %s32, 1
      %p97 = por %p95, %p96
      %p99 = scmp.ne.s32.totalorder %s84, %s98
      %p100 = scmp.eq.s32.totalorder %s32, 0
      %p101 = por %p99, %p100
      %s103 = sadd.s32 %s102, 1
      %p106 = scmp.eq.s32.totalorder %s26, 1
      %p107 = scmp.ne.s32.totalorder %s102, %s104
      %p108 = scmp.eq.s32.totalorder %s26, 0
      %p109 = por %p107, %p108
      %p110 = scmp.ne.s32.totalorder %s102, %s104
      %p111 = scmp.eq.s32.totalorder %s31, 1
      %p112 = por %p110, %p111
      %p113 = scmp.ne.s32.totalorder %s104, %s105
      %p114 = scmp.eq.s32.totalorder %s31, 0
      %p115 = por %p113, %p114
      %p116 = scmp.ne.s32.totalorder %s104, %s105
      %p117 = scmp.eq.s32.totalorder %s32, 1
      %p118 = por %p116, %p117
      %p120 = scmp.ne.s32.totalorder %s105, %s119
      %p121 = scmp.eq.s32.totalorder %s32, 0
      %p122 = por %p120, %p121
      %s124 = sadd.s32 %s123, 1
      %p127 = scmp.eq.s32.totalorder %s26, 1
      %p128 = scmp.ne.s32.totalorder %s123, %s125
      %p129 = scmp.eq.s32.totalorder %s26, 0
      %p130 = por %p128, %p129
      %p131 = scmp.ne.s32.totalorder %s123, %s125
      %p132 = scmp.eq.s32.totalorder %s31, 1
      %p133 = por %p131, %p132
      %p134 = scmp.ne.s32.totalorder %s125, %s126
      %p135 = scmp.eq.s32.totalorder %s31, 0
      %p136 = por %p134, %p135
      %p137 = scmp.ne.s32.totalorder %s125, %s126
      %p138 = scmp.eq.s32.totalorder %s32, 1
      %p139 = por %p137, %p138
      %p141 = scmp.ne.s32.totalorder %s126, %s140
      %p142 = scmp.eq.s32.totalorder %s32, 0
      %p143 = por %p141, %p142
      %s145 = sadd.s32 %s144, 1
      %p148 = scmp.eq.s32.totalorder %s26, 1
      %p149 = scmp.ne.s32.totalorder %s144, %s146
      %p150 = scmp.eq.s32.totalorder %s26, 0
      %p151 = por %p149, %p150
      %p152 = scmp.ne.s32.totalorder %s144, %s146
      %p153 = scmp.eq.s32.totalorder %s31, 1
      %p154 = por %p152, %p153
      %p155 = scmp.ne.s32.totalorder %s146, %s147
      %p156 = scmp.eq.s32.totalorder %s31, 0
      %p157 = por %p155, %p156
      %p158 = scmp.ne.s32.totalorder %s146, %s147
      %p159 = scmp.eq.s32.totalorder %s32, 1
      %p160 = por %p158, %p159
      %p162 = scmp.ne.s32.totalorder %s147, %s161
      %p163 = scmp.eq.s32.totalorder %s32, 0
      %p164 = por %p162, %p163
      %s166 = sadd.s32 %s165, 1
      %p169 = scmp.eq.s32.totalorder %s26, 1
      %p170 = scmp.ne.s32.totalorder %s165, %s167
      %p171 = scmp.eq.s32.totalorder %s26, 0
      %p172 = por %p170, %p171
      %p173 = scmp.ne.s32.totalorder %s165, %s167
      %p174 = scmp.eq.s32.totalorder %s31, 1
      %p175 = por %p173, %p174
      %p176 = scmp.ne.s32.totalorder %s167, %s168
      %p177 = scmp.eq.s32.totalorder %s31, 0
      %p178 = por %p176, %p177
      %p179 = scmp.ne.s32.totalorder %s167, %s168
      %p180 = scmp.eq.s32.totalorder %s32, 1
      %p181 = por %p179, %p180
      %p183 = scmp.ne.s32.totalorder %s168, %s182
      %p184 = scmp.eq.s32.totalorder %s32, 0
      %p185 = por %p183, %p184
      %s187 = sadd.s32 %s186, 1
      %p190 = scmp.eq.s32.totalorder %s26, 1
      %p191 = scmp.ne.s32.totalorder %s186, %s188
      %p192 = scmp.eq.s32.totalorder %s26, 0
      %p193 = por %p191, %p192
      %p194 = scmp.ne.s32.totalorder %s186, %s188
      %p195 = scmp.eq.s32.totalorder %s31, 1
      %p196 = por %p194, %p195
      %p197 = scmp.ne.s32.totalorder %s188, %s189
      %p198 = scmp.eq.s32.totalorder %s31, 0
      %p199 = por %p197, %p198
      %p200 = scmp.ne.s32.totalorder %s188, %s189
      %p201 = scmp.eq.s32.totalorder %s32, 1
      %p202 = por %p200, %p201
      %p204 = scmp.ne.s32.totalorder %s189, %s203
      %p205 = scmp.eq.s32.totalorder %s32, 0
      %p206 = por %p204, %p205
      %s208 = sadd.s32 %s207, 1
      %p211 = scmp.eq.s32.totalorder %s26, 1
      %p212 = scmp.ne.s32.totalorder %s207, %s209
      %p213 = scmp.eq.s32.totalorder %s26, 0
      %p214 = por %p212, %p213
      %p215 = scmp.ne.s32.totalorder %s207, %s209
      %p216 = scmp.eq.s32.totalorder %s31, 1
      %p217 = por %p215, %p216
      %p218 = scmp.ne.s32.totalorder %s209, %s210
      %p219 = scmp.eq.s32.totalorder %s31, 0
      %p220 = por %p218, %p219
      %p221 = scmp.ne.s32.totalorder %s209, %s210
      %p222 = scmp.eq.s32.totalorder %s32, 1
      %p223 = por %p221, %p222
      %p225 = scmp.ne.s32.totalorder %s210, %s224
      %p226 = scmp.eq.s32.totalorder %s32, 0
      %p227 = por %p225, %p226
      %s229 = sadd.s32 %s228, 1
      %p232 = scmp.eq.s32.totalorder %s26, 1
      %p233 = scmp.ne.s32.totalorder %s228, %s230
      %p234 = scmp.eq.s32.totalorder %s26, 0
      %p235 = por %p233, %p234
      %p236 = scmp.ne.s32.totalorder %s228, %s230
      %p237 = scmp.eq.s32.totalorder %s31, 1
      %p238 = por %p236, %p237
      %p239 = scmp.ne.s32.totalorder %s230, %s231
      %p240 = scmp.eq.s32.totalorder %s31, 0
      %p241 = por %p239, %p240
      %p242 = scmp.ne.s32.totalorder %s230, %s231
      %p243 = scmp.eq.s32.totalorder %s32, 1
      %p244 = por %p242, %p243
      %p246 = scmp.ne.s32.totalorder %s231, %s245
      %p247 = scmp.eq.s32.totalorder %s32, 0
      %p248 = por %p246, %p247
      %s250 = sadd.s32 %s249, 1
      %p253 = scmp.eq.s32.totalorder %s26, 1
      %p254 = scmp.ne.s32.totalorder %s249, %s251
      %p255 = scmp.eq.s32.totalorder %s26, 0
      %p256 = por %p254, %p255
      %p257 = scmp.ne.s32.totalorder %s249, %s251
      %p258 = scmp.eq.s32.totalorder %s31, 1
      %p259 = por %p257, %p258
      %p260 = scmp.ne.s32.totalorder %s251, %s252
      %p261 = scmp.eq.s32.totalorder %s31, 0
      %p262 = por %p260, %p261
      %p263 = scmp.ne.s32.totalorder %s251, %s252
      %p264 = scmp.eq.s32.totalorder %s32, 1
      %p265 = por %p263, %p264
      %p267 = scmp.ne.s32.totalorder %s252, %s266
      %p268 = scmp.eq.s32.totalorder %s32, 0
      %p269 = por %p267, %p268
      %s271 = sadd.s32 %s270, 1
      %p274 = scmp.eq.s32.totalorder %s26, 1
      %p275 = scmp.ne.s32.totalorder %s270, %s272
      %p276 = scmp.eq.s32.totalorder %s26, 0
      %p277 = por %p275, %p276
      %p278 = scmp.ne.s32.totalorder %s270, %s272
      %p279 = scmp.eq.s32.totalorder %s31, 1
      %p280 = por %p278, %p279
      %p281 = scmp.ne.s32.totalorder %s272, %s273
      %p282 = scmp.eq.s32.totalorder %s31, 0
      %p283 = por %p281, %p282
      %p284 = scmp.ne.s32.totalorder %s272, %s273
      %p285 = scmp.eq.s32.totalorder %s32, 1
      %p286 = por %p284, %p285
      %p288 = scmp.ne.s32.totalorder %s273, %s287
      %p289 = scmp.eq.s32.totalorder %s32, 0
      %p290 = por %p288, %p289
      %s292 = sadd.s32 %s291, 1
      %p295 = scmp.eq.s32.totalorder %s26, 1
      %p296 = scmp.ne.s32.totalorder %s291, %s293
      %p297 = scmp.eq.s32.totalorder %s26, 0
      %p298 = por %p296, %p297
      %p299 = scmp.ne.s32.totalorder %s291, %s293
      %p300 = scmp.eq.s32.totalorder %s31, 1
      %p301 = por %p299, %p300
      %p302 = scmp.ne.s32.totalorder %s293, %s294
      %p303 = scmp.eq.s32.totalorder %s31, 0
      %p304 = por %p302, %p303
      %p305 = scmp.ne.s32.totalorder %s293, %s294
      %p306 = scmp.eq.s32.totalorder %s32, 1
      %p307 = por %p305, %p306
      %p309 = scmp.ne.s32.totalorder %s294, %s308
      %p310 = scmp.eq.s32.totalorder %s32, 0
      %p311 = por %p309, %p310
      %s312 = ssub.s32 %s26, %s33
      %p313 = scmp.eq.s32.totalorder %s312, 0
      %s315 = sadd.s32 %s314, 1
      %s316 = scalar_select %p313, %s314, %s315
      %p319 = pneg %p313
      %p320 = scmp.eq.s32.totalorder %s26, 1
      %p321 = por %p319, %p320
      %p322 = scmp.ne.s32.totalorder %s314, %s317
      %p323 = scmp.eq.s32.totalorder %s26, 0
      %p324 = por %p322, %p323
      %p325 = scmp.ne.s32.totalorder %s314, %s317
      %p326 = scmp.eq.s32.totalorder %s31, 1
      %p327 = por %p325, %p326
      %p328 = scmp.ne.s32.totalorder %s317, %s318
      %p329 = scmp.eq.s32.totalorder %s31, 0
      %p330 = por %p328, %p329
      %p331 = scmp.ne.s32.totalorder %s317, %s318
      %p332 = scmp.eq.s32.totalorder %s32, 1
      %p333 = por %p331, %p332
      %p335 = scmp.ne.s32.totalorder %s318, %s334
      %p336 = scmp.eq.s32.totalorder %s32, 0
      %p337 = por %p335, %p336
      %s338 = ssub.s32 %s26, %s33
      %p339 = scmp.eq.s32.totalorder %s338, 0
      %s341 = sadd.s32 %s340, 1
      %s342 = scalar_select %p339, %s340, %s341
      %p345 = pneg %p339
      %p346 = scmp.eq.s32.totalorder %s26, 1
      %p347 = por %p345, %p346
      %p348 = scmp.ne.s32.totalorder %s340, %s343
      %p349 = scmp.eq.s32.totalorder %s26, 0
      %p350 = por %p348, %p349
      %p351 = scmp.ne.s32.totalorder %s340, %s343
      %p352 = scmp.eq.s32.totalorder %s31, 1
      %p353 = por %p351, %p352
      %p354 = scmp.ne.s32.totalorder %s343, %s344
      %p355 = scmp.eq.s32.totalorder %s31, 0
      %p356 = por %p354, %p355
      %p357 = scmp.ne.s32.totalorder %s343, %s344
      %p358 = scmp.eq.s32.totalorder %s32, 1
      %p359 = por %p357, %p358
      %p361 = scmp.ne.s32.totalorder %s344, %s360
      %p362 = scmp.eq.s32.totalorder %s32, 0
      %p363 = por %p361, %p362
      %p364 = scmp.le.s32.totalorder 1, %s26
      %p365 = scmp.lt.s32.totalorder %s26, 3
      %p366 = pnand %p364, %p365
      %p367 = pneg %p366
      // Predicated region
      $region9: #{tpu_custom_call.1} parent=5 // pred_check
        _
      $region10: #{tpu_custom_call.1} parent=5 // pred_check_branch
        %369 = sbr.rel (%p366) target = $region12
      $region11: #{tpu_custom_call.1} parent=5 // pred_region
        %s370 = ssub.s32 %s26, 1
        // Predicated region
        $region13: #{tpu_custom_call.1} parent=11 // pred_check
          %p371 = pneg %p73
        $region14: #{tpu_custom_call.1} parent=11 // pred_check_branch
          %373 = sbr.rel (%p371) target = $region16
        $region15: #{tpu_custom_call.1} parent=11 // pred_region
          _
        $region16: #{tpu_custom_call.1} parent=11 // pred_fallthru
          _
        // Predicated region
        $region17: #{tpu_custom_call.1} parent=11 // pred_check
          %p374 = pneg %p94
        $region18: #{tpu_custom_call.1} parent=11 // pred_check_branch
          %376 = sbr.rel (%p374) target = $region20
        $region19: #{tpu_custom_call.1} parent=11 // pred_region
          _
        $region20: #{tpu_custom_call.1} parent=11 // pred_fallthru
          _
        // Predicated region
        $region21: #{tpu_custom_call.1} parent=11 // pred_check
          %p377 = pneg %p115
        $region22: #{tpu_custom_call.1} parent=11 // pred_check_branch
          %379 = sbr.rel (%p377) target = $region24
        $region23: #{tpu_custom_call.1} parent=11 // pred_region
          _
        $region24: #{tpu_custom_call.1} parent=11 // pred_fallthru
          _
        // Predicated region
        $region25: #{tpu_custom_call.1} parent=11 // pred_check
          %p380 = pneg %p136
        $region26: #{tpu_custom_call.1} parent=11 // pred_check_branch
          %382 = sbr.rel (%p380) target = $region28
        $region27: #{tpu_custom_call.1} parent=11 // pred_region
          _
        $region28: #{tpu_custom_call.1} parent=11 // pred_fallthru
          _
        // Predicated region
        $region29: #{tpu_custom_call.1} parent=11 // pred_check
          %p383 = pneg %p157
        $region30: #{tpu_custom_call.1} parent=11 // pred_check_branch
          %385 = sbr.rel (%p383) target = $region32
        $region31: #{tpu_custom_call.1} parent=11 // pred_region
          _
        $region32: #{tpu_custom_call.1} parent=11 // pred_fallthru
          _
        // Predicated region
        $region33: #{tpu_custom_call.1} parent=11 // pred_check
          %p386 = pneg %p178
        $region34: #{tpu_custom_call.1} parent=11 // pred_check_branch
          %388 = sbr.rel (%p386) target = $region36
        $region35: #{tpu_custom_call.1} parent=11 // pred_region
          _
        $region36: #{tpu_custom_call.1} parent=11 // pred_fallthru
          _
        // Predicated region
        $region37: #{tpu_custom_call.1} parent=11 // pred_check
          %p389 = pneg %p199
        $region38: #{tpu_custom_call.1} parent=11 // pred_check_branch
          %391 = sbr.rel (%p389) target = $region40
        $region39: #{tpu_custom_call.1} parent=11 // pred_region
          _
        $region40: #{tpu_custom_call.1} parent=11 // pred_fallthru
          _
        // Predicated region
        $region41: #{tpu_custom_call.1} parent=11 // pred_check
          %p392 = pneg %p220
        $region42: #{tpu_custom_call.1} parent=11 // pred_check_branch
          %394 = sbr.rel (%p392) target = $region44
        $region43: #{tpu_custom_call.1} parent=11 // pred_region
          _
        $region44: #{tpu_custom_call.1} parent=11 // pred_fallthru
          _
        // Predicated region
        $region45: #{tpu_custom_call.1} parent=11 // pred_check
          %p395 = pneg %p241
        $region46: #{tpu_custom_call.1} parent=11 // pred_check_branch
          %397 = sbr.rel (%p395) target = $region48
        $region47: #{tpu_custom_call.1} parent=11 // pred_region
          _
        $region48: #{tpu_custom_call.1} parent=11 // pred_fallthru
          _
        // Predicated region
        $region49: #{tpu_custom_call.1} parent=11 // pred_check
          %p398 = pneg %p262
        $region50: #{tpu_custom_call.1} parent=11 // pred_check_branch
          %400 = sbr.rel (%p398) target = $region52
        $region51: #{tpu_custom_call.1} parent=11 // pred_region
          _
        $region52: #{tpu_custom_call.1} parent=11 // pred_fallthru
          _
        // Predicated region
        $region53: #{tpu_custom_call.1} parent=11 // pred_check
          %p401 = pneg %p283
        $region54: #{tpu_custom_call.1} parent=11 // pred_check_branch
          %403 = sbr.rel (%p401) target = $region56
        $region55: #{tpu_custom_call.1} parent=11 // pred_region
          _
        $region56: #{tpu_custom_call.1} parent=11 // pred_fallthru
          _
        // Predicated region
        $region57: #{tpu_custom_call.1} parent=11 // pred_check
          %p404 = pneg %p304
        $region58: #{tpu_custom_call.1} parent=11 // pred_check_branch
          %406 = sbr.rel (%p404) target = $region60
        $region59: #{tpu_custom_call.1} parent=11 // pred_region
          _
        $region60: #{tpu_custom_call.1} parent=11 // pred_fallthru
          _
      $region12: #{tpu_custom_call.1} parent=5 // pred_fallthru
        _
      %p407 = scmp.lt.s32.totalorder %s26, 2
      // Predicated region
      $region61: #{tpu_custom_call.1} parent=5 // pred_check
        %p408 = pneg %p407
      $region62: #{tpu_custom_call.1} parent=5 // pred_check_branch
        %410 = sbr.rel (%p408) target = $region64
      $region63: #{tpu_custom_call.1} parent=5 // pred_region
        // Predicated region
        $region65: #{tpu_custom_call.1} parent=63 // pred_check
          %p411 = pneg %p46
        $region66: #{tpu_custom_call.1} parent=63 // pred_check_branch
          %413 = sbr.rel (%p411) target = $region68
        $region67: #{tpu_custom_call.1} parent=63 // pred_region
          %s414 = smul.u32 12, %s26
          %p415 = scmp.lt.s32.totalorder %s414, 23
          %s416 = scalar_select %p415, %s414, 23
          %s417 = smul.addr %s416, 8
          %s418 = scalar_lea.vmem %s0, %s417
          %s419 = smul.u32 12, %s26
        $region68: #{tpu_custom_call.1} parent=63 // pred_fallthru
          _
      $region64: #{tpu_custom_call.1} parent=5 // pred_fallthru
        _
      %p420 = scmp.le.s32.totalorder 1, %s26
      %p421 = scmp.lt.s32.totalorder %s26, 3
      %p422 = pnand %p420, %p421
      %p423 = pneg %p422
      // Predicated region
      $region69: #{tpu_custom_call.1} parent=5 // pred_check
        _
      $region70: #{tpu_custom_call.1} parent=5 // pred_check_branch
        %425 = sbr.rel (%p422) target = $region72
      $region71: #{tpu_custom_call.1} parent=5 // pred_region
        %s426 = ssub.s32 %s26, 1
        %s427 = smul.u32 12, %s31
        %p428 = scmp.lt.s32.totalorder %s427, 23
        %s429 = scalar_select %p428, %s427, 23
        %s430 = smul.addr %s429, 8
        %s431 = scalar_lea.vmem %s0, %s430
        %p432 = pneg %p52
        %p433 = pneg %p49
        %p434 = pneg %p73
        %p435 = pneg %p70
        %p436 = pneg %p94
        %p437 = pneg %p91
        %p438 = pneg %p115
        %p439 = pneg %p112
        %p440 = pneg %p136
        %p441 = pneg %p133
        %p442 = pneg %p157
        %p443 = pneg %p154
        %p444 = pneg %p178
        %p445 = pneg %p175
        %p446 = pneg %p199
        %p447 = pneg %p196
        %p448 = pneg %p220
        %p449 = pneg %p217
        %p450 = pneg %p241
        %p451 = pneg %p238
        %p452 = pneg %p262
        %p453 = pneg %p259
        %p454 = pneg %p283
        %p455 = pneg %p280
        %p456 = pneg %p304
        %p457 = pneg %p301
        %p458 = pneg %p330
        %p459 = pneg %p327
        %s460 = smul.u32 12, %s31
        %p461 = scmp.lt.s32.totalorder %s460, 23
        %s462 = scalar_select %p461, %s460, 23
        %s463 = smul.addr %s462, 8
        %s464 = scalar_lea.vmem %s13, %s463
        %p465 = pneg %p356
        %p466 = pneg %p353
        %s467 = sand.u32 %s343, 1
        %s468 = scalar_lea.sflag [#allocation4], %s467
        %s469 = sand.u32 %s343, 1
        %s470 = scalar_lea.vmem [#allocation3], %s469
        %s471 = smul.u32 12, %s31
        %p472 = scmp.lt.s32.totalorder %s471, 23
        %s473 = scalar_select %p472, %s471, 23
        %s474 = smul.addr %s473, 8
        %s475 = scalar_lea.vmem %s0, %s474
        %s476 = smul.u32 12, %s31
        %s477 = smul.u32 12, %s31
        %p478 = scmp.lt.s32.totalorder %s477, 23
        %s479 = scalar_select %p478, %s477, 23
        %s480 = smul.addr %s479, 8
        %s481 = scalar_lea.vmem %s13, %s480
        %s482 = smul.u32 12, %s31
        %v483 = vld [vmem:[%s475] sm:$0xff]
        %v484 = vld [vmem:[%s475 + $0x8] sm:$0xff]
        %v485 = vld [vmem:[%s475 + $0x10] sm:$0xff]
        %v486 = vld [vmem:[%s475 + $0x18] sm:$0xff]
        %v487 = vld [vmem:[%s475 + $0x20] sm:$0xff]
        %v488 = vld [vmem:[%s475 + $0x28] sm:$0xff]
        %v489 = vld [vmem:[%s475 + $0x30] sm:$0xff]
        %v490 = vld [vmem:[%s475 + $0x38] sm:$0xff]
        %v491 = vld [vmem:[%s475 + $0x40] sm:$0xff]
        %v492 = vld [vmem:[%s475 + $0x48] sm:$0xff]
        %v493 = vld [vmem:[%s475 + $0x50] sm:$0xff]
        %v494 = vld [vmem:[%s475 + $0x58] sm:$0xff]
        %v495 = vld [vmem:[%s1] sm:$0x7f]
        %v496 = vld [vmem:[%s2] sm:$0x1]
        %v498 = vlaneseq
        %v499 = vshrl.u32 %v498, 7
        %v500 = vsub.s32 0, %v499
        %v501 = vrot.slane %v496, %v500
        %vm503 = vcmask 56320
        %v505 = vsel %vm503, %v483, 0
        %v508 = vsel %vm503, %v484, 0
        %v511 = vsel %vm503, %v485, 0
        %v514 = vsel %vm503, %v486, 0
        %v517 = vsel %vm503, %v487, 0
        %v520 = vsel %vm503, %v488, 0
        %v523 = vsel %vm503, %v489, 0
        %v526 = vsel %vm503, %v490, 0
        %v529 = vsel %vm503, %v491, 0
        %v532 = vsel %vm503, %v492, 0
        %v535 = vsel %vm503, %v493, 0
        %v538 = vsel %vm503, %v494, 0
        %vm540 = vcmask 1046528
        %v542 = vsel %vm540, %v495, 0
        %544 = vmatprep.subr.mxu0 0.0
        %545 = vmatpush1.msra.mxu0 0.0
        %546 = vmatprep.subr.mxu0 0.0
        %547 = vmatpush1.msra.mxu0 0.0
        %548 = vmatprep.subr.mxu0 0.0
        %549 = vmatpush1.msra.mxu0 0.0
        %550 = vmatprep.subr.mxu0 0.0
        %551 = vmatpush1.msra.mxu0 0.0
        %552 = vmatprep.subr.mxu0 0.0
        %553 = vmatpush1.msra.mxu0 0.0
        %554 = vmatprep.subr.mxu0 0.0
        %555 = vmatpush1.msra.mxu0 0.0
        %556 = vmatprep.subr.mxu0 0.0
        %557 = vmatpush1.msra.mxu0 0.0
        %558 = vmatprep.subr.mxu0 0.0
        %559 = vmatpush1.msra.mxu0 0.0
        %560 = vmatprep.subr.mxu0 0.0
        %561 = vmatpush1.msra.mxu0 0.0
        %562 = vmatprep.subr.mxu0 0.0
        %563 = vmatpush1.msra.mxu0 0.0
        %564 = vmatprep.subr.mxu0 0.0
        %565 = vmatpush1.msra.mxu0 0.0
        %566 = vmatprep.subr.mxu0 0.0
        %567 = vmatpush1.msra.mxu0 0.0
        %568 = vmatprep.subr.mxu0 0.0
        %569 = vmatpush1.msra.mxu0 0.0
        %570 = vmatprep.subr.mxu0 0.0
        %571 = vmatpush1.msra.mxu0 0.0
        %572 = vmatprep.subr.mxu0 0.0
        %573 = vmatpush1.msra.mxu0 0.0
        %574 = vmatprep.subr.mxu0 0.0
        %575 = vmatpush1.msra.mxu0 %v542
        %576 = vmatprep.subr.mxu0 0.0
        %577 = vmatpush2.msra.mxu0 0.0
        %578 = vmatprep.subr.mxu0 0.0
        %579 = vmatpush2.msra.mxu0 0.0
        %580 = vmatprep.subr.mxu0 0.0
        %581 = vmatpush2.msra.mxu0 0.0
        %582 = vmatprep.subr.mxu0 0.0
        %583 = vmatpush2.msra.mxu0 0.0
        %584 = vmatprep.subr.mxu0 0.0
        %585 = vmatpush2.msra.mxu0 0.0
        %586 = vmatprep.subr.mxu0 0.0
        %587 = vmatpush2.msra.mxu0 0.0
        %588 = vmatprep.subr.mxu0 0.0
        %589 = vmatpush2.msra.mxu0 0.0
        %590 = vmatprep.subr.mxu0 0.0
        %591 = vmatpush2.msra.mxu0 0.0
        %592 = vmatprep.subr.mxu0 0.0
        %593 = vmatpush2.msra.mxu0 0.0
        %594 = vmatprep.subr.mxu0 0.0
        %595 = vmatpush2.msra.mxu0 0.0
        %596 = vmatprep.subr.mxu0 0.0
        %597 = vmatpush2.msra.mxu0 0.0
        %598 = vmatprep.subr.mxu0 0.0
        %599 = vmatpush2.msra.mxu0 0.0
        %600 = vmatprep.subr.mxu0 0.0
        %601 = vmatpush2.msra.mxu0 0.0
        %602 = vmatprep.subr.mxu0 0.0
        %603 = vmatpush2.msra.mxu0 0.0
        %604 = vmatprep.subr.mxu0 0.0
        %605 = vmatpush2.msra.mxu0 0.0
        %606 = vmatprep.subr.mxu0 0.0
        %607 = vmatpush2.msra.mxu0 0.0
        %608 = vmatprep.mubr.f32.mxu0 0.0
        %609 = vmatmul.mubr.f32.gmra.mxu0 %v505
        %v610 = vpop.f32.mrf.mxu0
        %v611 = vadd.f32 %v501, %v610
        %v612 = vpop.f32.mrf.mxu0
        %613 = vmatprep.mubr.f32.mxu0 0.0
        %614 = vmatmul.mubr.f32.gmra.mxu0 %v508
        %v615 = vpop.f32.mrf.mxu0
        %v616 = vadd.f32 %v501, %v615
        %v617 = vpop.f32.mrf.mxu0
        %618 = vmatprep.mubr.f32.mxu0 0.0
        %619 = vmatmul.mubr.f32.gmra.mxu0 %v511
        %v620 = vpop.f32.mrf.mxu0
        %v621 = vadd.f32 %v501, %v620
        %v622 = vpop.f32.mrf.mxu0
        %623 = vmatprep.mubr.f32.mxu0 0.0
        %624 = vmatmul.mubr.f32.gmra.mxu0 %v514
        %v625 = vpop.f32.mrf.mxu0
        %v626 = vadd.f32 %v501, %v625
        %v627 = vpop.f32.mrf.mxu0
        %628 = vmatprep.mubr.f32.mxu0 0.0
        %629 = vmatmul.mubr.f32.gmra.mxu0 %v517
        %v630 = vpop.f32.mrf.mxu0
        %v631 = vadd.f32 %v501, %v630
        %v632 = vpop.f32.mrf.mxu0
        %633 = vmatprep.mubr.f32.mxu0 0.0
        %634 = vmatmul.mubr.f32.gmra.mxu0 %v520
        %v635 = vpop.f32.mrf.mxu0
        %v636 = vadd.f32 %v501, %v635
        %v637 = vpop.f32.mrf.mxu0
        %638 = vmatprep.mubr.f32.mxu0 0.0
        %639 = vmatmul.mubr.f32.gmra.mxu0 %v523
        %v640 = vpop.f32.mrf.mxu0
        %v641 = vadd.f32 %v501, %v640
        %v642 = vpop.f32.mrf.mxu0
        %643 = vmatprep.mubr.f32.mxu0 0.0
        %644 = vmatmul.mubr.f32.gmra.mxu0 %v526
        %v645 = vpop.f32.mrf.mxu0
        %v646 = vadd.f32 %v501, %v645
        %v647 = vpop.f32.mrf.mxu0
        %648 = vmatprep.mubr.f32.mxu0 0.0
        %649 = vmatmul.mubr.f32.gmra.mxu0 %v529
        %v650 = vpop.f32.mrf.mxu0
        %v651 = vadd.f32 %v501, %v650
        %v652 = vpop.f32.mrf.mxu0
        %653 = vmatprep.mubr.f32.mxu0 0.0
        %654 = vmatmul.mubr.f32.gmra.mxu0 %v532
        %v655 = vpop.f32.mrf.mxu0
        %v656 = vadd.f32 %v501, %v655
        %v657 = vpop.f32.mrf.mxu0
        %658 = vmatprep.mubr.f32.mxu0 0.0
        %659 = vmatmul.mubr.f32.gmra.mxu0 %v535
        %v660 = vpop.f32.mrf.mxu0
        %v661 = vadd.f32 %v501, %v660
        %v662 = vpop.f32.mrf.mxu0
        %663 = vmatprep.mubr.f32.mxu0 0.0
        %664 = vmatmul.mubr.f32.gmra.mxu0 %v538
        %v665 = vpop.f32.mrf.mxu0
        %v666 = vadd.f32 %v501, %v665
        %v667 = vpop.f32.mrf.mxu0
        %668 = vdwg.mxu0
        %v669 = vld [vmem:[%s3] sm:$0xff]
        %v670 = vld [vmem:[%s3 + $0x8] sm:$0xff]
        %v671 = vld [vmem:[%s3 + $0x10] sm:$0xff]
        %v672 = vld [vmem:[%s3 + $0x18] sm:$0xff]
        %v673 = vld [vmem:[%s3 + $0x20] sm:$0xff]
        %v674 = vld [vmem:[%s3 + $0x28] sm:$0xff]
        %v675 = vld [vmem:[%s3 + $0x30] sm:$0xff]
        %v676 = vld [vmem:[%s3 + $0x38] sm:$0xff]
        %v677 = vld [vmem:[%s3 + $0x40] sm:$0xff]
        %v678 = vld [vmem:[%s3 + $0x48] sm:$0xff]
        %v679 = vld [vmem:[%s3 + $0x50] sm:$0xff]
        %v680 = vld [vmem:[%s3 + $0x58] sm:$0xff]
        %v681 = vld [vmem:[%s3 + $0x60] sm:$0xff]
        %v682 = vld [vmem:[%s3 + $0x68] sm:$0xff]
        %v683 = vld [vmem:[%s3 + $0x70] sm:$0xff]
        %v684 = vld [vmem:[%s3 + $0x78] sm:$0xff]
        %v685 = vld [vmem:[%s4] sm:$0x3]
        %v687 = vlaneseq
        %v688 = vshrl.u32 %v687, 7
        %v689 = vsub.s32 0, %v688
        %v690 = vrot.slane %v685, %v689
        %v691 = vlaneseq
        %v692 = vshrl.u32 %v691, 7
        %v693 = vsub.s32 1, %v692
        %v694 = vrot.slane %v685, %v693
        %vm697 = vcmask 523264
        %v699 = vsel %vm697, %v611, 0
        %v702 = vsel %vm697, %v616, 0
        %v705 = vsel %vm697, %v621, 0
        %v708 = vsel %vm697, %v626, 0
        %v711 = vsel %vm697, %v631, 0
        %v714 = vsel %vm697, %v636, 0
        %v717 = vsel %vm697, %v641, 0
        %v720 = vsel %vm697, %v646, 0
        %v723 = vsel %vm697, %v651, 0
        %v726 = vsel %vm697, %v656, 0
        %v729 = vsel %vm697, %v661, 0
        %v732 = vsel %vm697, %v666, 0
        %734 = vmatprep.subr.mxu0 0.0
        %735 = vmatpush1.msra.mxu0 0.0
        %736 = vmatprep.subr.mxu0 0.0
        %737 = vmatpush1.msra.mxu0 0.0
        %738 = vmatprep.subr.mxu0 0.0
        %739 = vmatpush1.msra.mxu0 0.0
        %740 = vmatprep.subr.mxu0 0.0
        %741 = vmatpush1.msra.mxu0 0.0
        %742 = vmatprep.subr.mxu0 0.0
        %743 = vmatpush1.msra.mxu0 0.0
        %744 = vmatprep.subr.mxu0 0.0
        %745 = vmatpush1.msra.mxu0 0.0
        %746 = vmatprep.subr.mxu0 0.0
        %747 = vmatpush1.msra.mxu0 0.0
        %748 = vmatprep.subr.mxu0 0.0
        %749 = vmatpush1.msra.mxu0 0.0
        %750 = vmatprep.subr.mxu0 %v684
        %751 = vmatpush1.msra.mxu0 %v683
        %752 = vmatprep.subr.mxu0 %v682
        %753 = vmatpush1.msra.mxu0 %v681
        %754 = vmatprep.subr.mxu0 %v680
        %755 = vmatpush1.msra.mxu0 %v679
        %756 = vmatprep.subr.mxu0 %v678
        %757 = vmatpush1.msra.mxu0 %v677
        %758 = vmatprep.subr.mxu0 %v676
        %759 = vmatpush1.msra.mxu0 %v675
        %760 = vmatprep.subr.mxu0 %v674
        %761 = vmatpush1.msra.mxu0 %v673
        %762 = vmatprep.subr.mxu0 %v672
        %763 = vmatpush1.msra.mxu0 %v671
        %764 = vmatprep.subr.mxu0 %v670
        %765 = vmatpush1.msra.mxu0 %v669
        %766 = vmatprep.subr.mxu0 0.0
        %767 = vmatpush2.msra.mxu0 0.0
        %768 = vmatprep.subr.mxu0 0.0
        %769 = vmatpush2.msra.mxu0 0.0
        %770 = vmatprep.subr.mxu0 0.0
        %771 = vmatpush2.msra.mxu0 0.0
        %772 = vmatprep.subr.mxu0 0.0
        %773 = vmatpush2.msra.mxu0 0.0
        %774 = vmatprep.subr.mxu0 0.0
        %775 = vmatpush2.msra.mxu0 0.0
        %776 = vmatprep.subr.mxu0 0.0
        %777 = vmatpush2.msra.mxu0 0.0
        %778 = vmatprep.subr.mxu0 0.0
        %779 = vmatpush2.msra.mxu0 0.0
        %780 = vmatprep.subr.mxu0 0.0
        %781 = vmatpush2.msra.mxu0 0.0
        %782 = vmatprep.subr.mxu0 0.0
        %783 = vmatpush2.msra.mxu0 0.0
        %784 = vmatprep.subr.mxu0 0.0
        %785 = vmatpush2.msra.mxu0 0.0
        %786 = vmatprep.subr.mxu0 0.0
        %787 = vmatpush2.msra.mxu0 0.0
        %788 = vmatprep.subr.mxu0 0.0
        %789 = vmatpush2.msra.mxu0 0.0
        %790 = vmatprep.subr.mxu0 0.0
        %791 = vmatpush2.msra.mxu0 0.0
        %792 = vmatprep.subr.mxu0 0.0
        %793 = vmatpush2.msra.mxu0 0.0
        %794 = vmatprep.subr.mxu0 0.0
        %795 = vmatpush2.msra.mxu0 0.0
        %796 = vmatprep.subr.mxu0 0.0
        %797 = vmatpush2.msra.mxu0 0.0
        %798 = vmatprep.mubr.f32.mxu0 0.0
        %799 = vmatmul.mubr.f32.gmra.mxu0 %v699
        %v800 = vpop.f32.mrf.mxu0
        %v801 = vadd.f32 %v690, %v800
        %v802 = vpop.f32.mrf.mxu0
        %v803 = vadd.f32 %v694, %v802
        %804 = vmatprep.mubr.f32.mxu0 0.0
        %805 = vmatmul.mubr.f32.gmra.mxu0 %v702
        %v806 = vpop.f32.mrf.mxu0
        %v807 = vadd.f32 %v690, %v806
        %v808 = vpop.f32.mrf.mxu0
        %v809 = vadd.f32 %v694, %v808
        %810 = vmatprep.mubr.f32.mxu0 0.0
        %811 = vmatmul.mubr.f32.gmra.mxu0 %v705
        %v812 = vpop.f32.mrf.mxu0
        %v813 = vadd.f32 %v690, %v812
        %v814 = vpop.f32.mrf.mxu0
        %v815 = vadd.f32 %v694, %v814
        %816 = vmatprep.mubr.f32.mxu0 0.0
        %817 = vmatmul.mubr.f32.gmra.mxu0 %v708
        %v818 = vpop.f32.mrf.mxu0
        %v819 = vadd.f32 %v690, %v818
        %v820 = vpop.f32.mrf.mxu0
        %v821 = vadd.f32 %v694, %v820
        %822 = vmatprep.mubr.f32.mxu0 0.0
        %823 = vmatmul.mubr.f32.gmra.mxu0 %v711
        %v824 = vpop.f32.mrf.mxu0
        %v825 = vadd.f32 %v690, %v824
        %v826 = vpop.f32.mrf.mxu0
        %v827 = vadd.f32 %v694, %v826
        %828 = vmatprep.mubr.f32.mxu0 0.0
        %829 = vmatmul.mubr.f32.gmra.mxu0 %v714
        %v830 = vpop.f32.mrf.mxu0
        %v831 = vadd.f32 %v690, %v830
        %v832 = vpop.f32.mrf.mxu0
        %v833 = vadd.f32 %v694, %v832
        %834 = vmatprep.mubr.f32.mxu0 0.0
        %835 = vmatmul.mubr.f32.gmra.mxu0 %v717
        %v836 = vpop.f32.mrf.mxu0
        %v837 = vadd.f32 %v690, %v836
        %v838 = vpop.f32.mrf.mxu0
        %v839 = vadd.f32 %v694, %v838
        %840 = vmatprep.mubr.f32.mxu0 0.0
        %841 = vmatmul.mubr.f32.gmra.mxu0 %v720
        %v842 = vpop.f32.mrf.mxu0
        %v843 = vadd.f32 %v690, %v842
        %v844 = vpop.f32.mrf.mxu0
        %v845 = vadd.f32 %v694, %v844
        %846 = vmatprep.mubr.f32.mxu0 0.0
        %847 = vmatmul.mubr.f32.gmra.mxu0 %v723
        %v848 = vpop.f32.mrf.mxu0
        %v849 = vadd.f32 %v690, %v848
        %v850 = vpop.f32.mrf.mxu0
        %v851 = vadd.f32 %v694, %v850
        %852 = vmatprep.mubr.f32.mxu0 0.0
        %853 = vmatmul.mubr.f32.gmra.mxu0 %v726
        %v854 = vpop.f32.mrf.mxu0
        %v855 = vadd.f32 %v690, %v854
        %v856 = vpop.f32.mrf.mxu0
        %v857 = vadd.f32 %v694, %v856
        %858 = vmatprep.mubr.f32.mxu0 0.0
        %859 = vmatmul.mubr.f32.gmra.mxu0 %v729
        %v860 = vpop.f32.mrf.mxu0
        %v861 = vadd.f32 %v690, %v860
        %v862 = vpop.f32.mrf.mxu0
        %v863 = vadd.f32 %v694, %v862
        %864 = vmatprep.mubr.f32.mxu0 0.0
        %865 = vmatmul.mubr.f32.gmra.mxu0 %v732
        %v866 = vpop.f32.mrf.mxu0
        %v867 = vadd.f32 %v690, %v866
        %v868 = vpop.f32.mrf.mxu0
        %v869 = vadd.f32 %v694, %v868
        %870 = vdwg.mxu0
        %v871 = vlaneseq
        %v872 = vand.u32 %v871, 127
        %v873 = vld [vmem:[%s5] sm:$0xff]
        %v874 = vld [vmem:[%s5 + $0x8] sm:$0xff]
        %v875 = vld [vmem:[%s5 + $0x10] sm:$0xff]
        %v876 = vld [vmem:[%s5 + $0x18] sm:$0xff]
        %v877 = vld [vmem:[%s5 + $0x20] sm:$0xff]
        %v878 = vld [vmem:[%s5 + $0x28] sm:$0xff]
        %v879 = vld [vmem:[%s5 + $0x30] sm:$0xff]
        %v880 = vld [vmem:[%s5 + $0x38] sm:$0xff]
        %vm881 = vcmp.ge.s32.totalorder %v872, 0
        %vm882 = vcmp.lt.s32.totalorder %v872, 32
        %vm883 = vmand %vm881, %vm882
        %v884 = vsel %vm883, 1, 0
        %vm885 = vcmp.eq.s32.totalorder %v884, 1
        %898 = vrot.lane.b32.xlu0 %v801, 64
        %v899 = vpop.permute.xlu0 %898
        %900 = vrot.lane.b32.xlu0 %v807, 64
        %v901 = vpop.permute.xlu0 %900
        %902 = vrot.lane.b32.xlu0 %v813, 64
        %v903 = vpop.permute.xlu0 %902
        %904 = vrot.lane.b32.xlu0 %v819, 64
        %v905 = vpop.permute.xlu0 %904
        %906 = vrot.lane.b32.xlu0 %v825, 64
        %v907 = vpop.permute.xlu0 %906
        %908 = vrot.lane.b32.xlu0 %v831, 64
        %v909 = vpop.permute.xlu0 %908
        %910 = vrot.lane.b32.xlu0 %v837, 64
        %v911 = vpop.permute.xlu0 %910
        %912 = vrot.lane.b32.xlu0 %v843, 64
        %v913 = vpop.permute.xlu0 %912
        %914 = vrot.lane.b32.xlu0 %v849, 64
        %v915 = vpop.permute.xlu0 %914
        %916 = vrot.lane.b32.xlu0 %v855, 64
        %v917 = vpop.permute.xlu0 %916
        %918 = vrot.lane.b32.xlu0 %v861, 64
        %v919 = vpop.permute.xlu0 %918
        %920 = vrot.lane.b32.xlu0 %v867, 64
        %v921 = vpop.permute.xlu0 %920
        %v934 = vsel %vm885, %v899, 0.0
        %v935 = vsel %vm885, %v901, 0.0
        %v936 = vsel %vm885, %v903, 0.0
        %v937 = vsel %vm885, %v905, 0.0
        %v938 = vsel %vm885, %v907, 0.0
        %v939 = vsel %vm885, %v909, 0.0
        %v940 = vsel %vm885, %v911, 0.0
        %v941 = vsel %vm885, %v913, 0.0
        %v942 = vsel %vm885, %v915, 0.0
        %v943 = vsel %vm885, %v917, 0.0
        %v944 = vsel %vm885, %v919, 0.0
        %v945 = vsel %vm885, %v921, 0.0
        %v946 = vsel %vm885, %v803, 0.0
        %v947 = vsel %vm885, %v809, 0.0
        %v948 = vsel %vm885, %v815, 0.0
        %v949 = vsel %vm885, %v821, 0.0
        %v950 = vsel %vm885, %v827, 0.0
        %v951 = vsel %vm885, %v833, 0.0
        %v952 = vsel %vm885, %v839, 0.0
        %v953 = vsel %vm885, %v845, 0.0
        %v954 = vsel %vm885, %v851, 0.0
        %v955 = vsel %vm885, %v857, 0.0
        %v956 = vsel %vm885, %v863, 0.0
        %v957 = vsel %vm885, %v869, 0.0
        %v958 = vsel %vm697, %v801, 0
        %v960 = vsel %vm697, %v807, 0
        %v962 = vsel %vm697, %v813, 0
        %v964 = vsel %vm697, %v819, 0
        %v966 = vsel %vm697, %v825, 0
        %v968 = vsel %vm697, %v831, 0
        %v970 = vsel %vm697, %v837, 0
        %v972 = vsel %vm697, %v843, 0
        %v974 = vsel %vm697, %v849, 0
        %v976 = vsel %vm697, %v855, 0
        %v978 = vsel %vm697, %v861, 0
        %v980 = vsel %vm697, %v867, 0
        %v983 = vsel %vm697, %v934, 0
        %v986 = vsel %vm697, %v935, 0
        %v989 = vsel %vm697, %v936, 0
        %v992 = vsel %vm697, %v937, 0
        %v995 = vsel %vm697, %v938, 0
        %v998 = vsel %vm697, %v939, 0
        %v1001 = vsel %vm697, %v940, 0
        %v1004 = vsel %vm697, %v941, 0
        %v1007 = vsel %vm697, %v942, 0
        %v1010 = vsel %vm697, %v943, 0
        %v1013 = vsel %vm697, %v944, 0
        %v1016 = vsel %vm697, %v945, 0
        %1018 = vmatprep.subr.mxu0 0.0
        %1019 = vmatpush1.xpose.msra.mxu0 0.0
        %1020 = vmatprep.subr.mxu0 0.0
        %1021 = vmatpush1.xpose.msra.mxu0 0.0
        %1022 = vmatprep.subr.mxu0 0.0
        %1023 = vmatpush1.xpose.msra.mxu0 0.0
        %1024 = vmatprep.subr.mxu0 0.0
        %1025 = vmatpush1.xpose.msra.mxu0 0.0
        %1026 = vmatprep.subr.mxu0 0.0
        %1027 = vmatpush1.xpose.msra.mxu0 %v1016
        %1028 = vmatprep.subr.mxu0 0.0
        %1029 = vmatpush1.xpose.msra.mxu0 %v1013
        %1030 = vmatprep.subr.mxu0 0.0
        %1031 = vmatpush1.xpose.msra.mxu0 %v1010
        %1032 = vmatprep.subr.mxu0 0.0
        %1033 = vmatpush1.xpose.msra.mxu0 %v1007
        %1034 = vmatprep.subr.mxu0 0.0
        %1035 = vmatpush1.xpose.msra.mxu0 %v1004
        %1036 = vmatprep.subr.mxu0 0.0
        %1037 = vmatpush1.xpose.msra.mxu0 %v1001
        %1038 = vmatprep.subr.mxu0 0.0
        %1039 = vmatpush1.xpose.msra.mxu0 %v998
        %1040 = vmatprep.subr.mxu0 0.0
        %1041 = vmatpush1.xpose.msra.mxu0 %v995
        %1042 = vmatprep.subr.mxu0 0.0
        %1043 = vmatpush1.xpose.msra.mxu0 %v992
        %1044 = vmatprep.subr.mxu0 0.0
        %1045 = vmatpush1.xpose.msra.mxu0 %v989
        %1046 = vmatprep.subr.mxu0 0.0
        %1047 = vmatpush1.xpose.msra.mxu0 %v986
        %1048 = vmatprep.subr.mxu0 0.0
        %1049 = vmatpush1.xpose.msra.mxu0 %v983
        %1050 = vmatprep.subr.mxu0 0.0
        %1051 = vmatpush2.xpose.msra.mxu0 0.0
        %1052 = vmatprep.subr.mxu0 0.0
        %1053 = vmatpush2.xpose.msra.mxu0 0.0
        %1054 = vmatprep.subr.mxu0 0.0
        %1055 = vmatpush2.xpose.msra.mxu0 0.0
        %1056 = vmatprep.subr.mxu0 0.0
        %1057 = vmatpush2.xpose.msra.mxu0 0.0
        %1058 = vmatprep.subr.mxu0 0.0
        %1059 = vmatpush2.xpose.msra.mxu0 0.0
        %1060 = vmatprep.subr.mxu0 0.0
        %1061 = vmatpush2.xpose.msra.mxu0 0.0
        %1062 = vmatprep.subr.mxu0 0.0
        %1063 = vmatpush2.xpose.msra.mxu0 0.0
        %1064 = vmatprep.subr.mxu0 0.0
        %1065 = vmatpush2.xpose.msra.mxu0 0.0
        %1066 = vmatprep.subr.mxu0 0.0
        %1067 = vmatpush2.xpose.msra.mxu0 0.0
        %1068 = vmatprep.subr.mxu0 0.0
        %1069 = vmatpush2.xpose.msra.mxu0 0.0
        %1070 = vmatprep.subr.mxu0 0.0
        %1071 = vmatpush2.xpose.msra.mxu0 0.0
        %1072 = vmatprep.subr.mxu0 0.0
        %1073 = vmatpush2.xpose.msra.mxu0 0.0
        %1074 = vmatprep.subr.mxu0 0.0
        %1075 = vmatpush2.xpose.msra.mxu0 0.0
        %1076 = vmatprep.subr.mxu0 0.0
        %1077 = vmatpush2.xpose.msra.mxu0 0.0
        %1078 = vmatprep.subr.mxu0 0.0
        %1079 = vmatpush2.xpose.msra.mxu0 0.0
        %1080 = vmatprep.subr.mxu0 0.0
        %1081 = vmatpush2.xpose.msra.mxu0 0.0
        %1082 = vmatprep.mubr.f32.mxu0 0.0
        %1083 = vmatmul.mubr.f32.gmra.mxu0 %v958
        %v1084 = vpop.f32.mrf.mxu0
        %v1085 = vadd.f32 0.0, %v1084
        %v1086 = vpop.f32.mrf.mxu0
        %1087 = vmatprep.mubr.f32.mxu0 0.0
        %1088 = vmatmul.mubr.f32.gmra.mxu0 %v960
        %v1089 = vpop.f32.mrf.mxu0
        %v1090 = vadd.f32 0.0, %v1089
        %v1091 = vpop.f32.mrf.mxu0
        %1092 = vmatprep.mubr.f32.mxu0 0.0
        %1093 = vmatmul.mubr.f32.gmra.mxu0 %v962
        %v1094 = vpop.f32.mrf.mxu0
        %v1095 = vadd.f32 0.0, %v1094
        %v1096 = vpop.f32.mrf.mxu0
        %1097 = vmatprep.mubr.f32.mxu0 0.0
        %1098 = vmatmul.mubr.f32.gmra.mxu0 %v964
        %v1099 = vpop.f32.mrf.mxu0
        %v1100 = vadd.f32 0.0, %v1099
        %v1101 = vpop.f32.mrf.mxu0
        %1102 = vmatprep.mubr.f32.mxu0 0.0
        %1103 = vmatmul.mubr.f32.gmra.mxu0 %v966
        %v1104 = vpop.f32.mrf.mxu0
        %v1105 = vadd.f32 0.0, %v1104
        %v1106 = vpop.f32.mrf.mxu0
        %1107 = vmatprep.mubr.f32.mxu0 0.0
        %1108 = vmatmul.mubr.f32.gmra.mxu0 %v968
        %v1109 = vpop.f32.mrf.mxu0
        %v1110 = vadd.f32 0.0, %v1109
        %v1111 = vpop.f32.mrf.mxu0
        %1112 = vmatprep.mubr.f32.mxu0 0.0
        %1113 = vmatmul.mubr.f32.gmra.mxu0 %v970
        %v1114 = vpop.f32.mrf.mxu0
        %v1115 = vadd.f32 0.0, %v1114
        %v1116 = vpop.f32.mrf.mxu0
        %1117 = vmatprep.mubr.f32.mxu0 0.0
        %1118 = vmatmul.mubr.f32.gmra.mxu0 %v972
        %v1119 = vpop.f32.mrf.mxu0
        %v1120 = vadd.f32 0.0, %v1119
        %v1121 = vpop.f32.mrf.mxu0
        %1122 = vmatprep.mubr.f32.mxu0 0.0
        %1123 = vmatmul.mubr.f32.gmra.mxu0 %v974
        %v1124 = vpop.f32.mrf.mxu0
        %v1125 = vadd.f32 0.0, %v1124
        %v1126 = vpop.f32.mrf.mxu0
        %1127 = vmatprep.mubr.f32.mxu0 0.0
        %1128 = vmatmul.mubr.f32.gmra.mxu0 %v976
        %v1129 = vpop.f32.mrf.mxu0
        %v1130 = vadd.f32 0.0, %v1129
        %v1131 = vpop.f32.mrf.mxu0
        %1132 = vmatprep.mubr.f32.mxu0 0.0
        %1133 = vmatmul.mubr.f32.gmra.mxu0 %v978
        %v1134 = vpop.f32.mrf.mxu0
        %v1135 = vadd.f32 0.0, %v1134
        %v1136 = vpop.f32.mrf.mxu0
        %1137 = vmatprep.mubr.f32.mxu0 0.0
        %1138 = vmatmul.mubr.f32.gmra.mxu0 %v980
        %v1139 = vpop.f32.mrf.mxu0
        %v1140 = vadd.f32 0.0, %v1139
        %v1141 = vpop.f32.mrf.mxu0
        %1142 = vdwg.mxu0
        %vm1143 = vcmask 785408
        %v1144 = vsel %vm1143, %v1085, -inf
        %1145 = vmax.xlane.f32.xlu0 %v1144
        %v1146 = vpop.xlane.xlu0 %1145
        %v1147 = vsel %vm1143, %v1090, -inf
        %1148 = vmax.xlane.f32.xlu0 %v1147
        %v1149 = vpop.xlane.xlu0 %1148
        %v1150 = vsel %vm1143, %v1095, -inf
        %1151 = vmax.xlane.f32.xlu0 %v1150
        %v1152 = vpop.xlane.xlu0 %1151
        %v1153 = vsel %vm1143, %v1100, -inf
        %1154 = vmax.xlane.f32.xlu0 %v1153
        %v1155 = vpop.xlane.xlu0 %1154
        %v1156 = vsel %vm1143, %v1105, -inf
        %1157 = vmax.xlane.f32.xlu0 %v1156
        %v1158 = vpop.xlane.xlu0 %1157
        %v1159 = vsel %vm1143, %v1110, -inf
        %1160 = vmax.xlane.f32.xlu0 %v1159
        %v1161 = vpop.xlane.xlu0 %1160
        %v1162 = vsel %vm1143, %v1115, -inf
        %1163 = vmax.xlane.f32.xlu0 %v1162
        %v1164 = vpop.xlane.xlu0 %1163
        %v1165 = vsel %vm1143, %v1120, -inf
        %1166 = vmax.xlane.f32.xlu0 %v1165
        %v1167 = vpop.xlane.xlu0 %1166
        %v1168 = vsel %vm1143, %v1125, -inf
        %1169 = vmax.xlane.f32.xlu0 %v1168
        %v1170 = vpop.xlane.xlu0 %1169
        %v1171 = vsel %vm1143, %v1130, -inf
        %1172 = vmax.xlane.f32.xlu0 %v1171
        %v1173 = vpop.xlane.xlu0 %1172
        %v1174 = vsel %vm1143, %v1135, -inf
        %1175 = vmax.xlane.f32.xlu0 %v1174
        %v1176 = vpop.xlane.xlu0 %1175
        %v1177 = vsel %vm1143, %v1140, -inf
        %1178 = vmax.xlane.f32.xlu0 %v1177
        %v1179 = vpop.xlane.xlu0 %1178
        %v1180 = vsub.f32 %v1085, %v1146
        %v1181 = vsub.f32 %v1090, %v1149
        %v1182 = vsub.f32 %v1095, %v1152
        %v1183 = vsub.f32 %v1100, %v1155
        %v1184 = vsub.f32 %v1105, %v1158
        %v1185 = vsub.f32 %v1110, %v1161
        %v1186 = vsub.f32 %v1115, %v1164
        %v1187 = vsub.f32 %v1120, %v1167
        %v1188 = vsub.f32 %v1125, %v1170
        %v1189 = vsub.f32 %v1130, %v1173
        %v1190 = vsub.f32 %v1135, %v1176
        %v1191 = vsub.f32 %v1140, %v1179
        %v1192 = vmul.f32 %v1180, 1.442695
        %v1193 = vpow.pop %v1192
        %v1194 = vmul.f32 %v1181, 1.442695
        %v1195 = vpow.pop %v1194
        %v1196 = vmul.f32 %v1182, 1.442695
        %v1197 = vpow.pop %v1196
        %v1198 = vmul.f32 %v1183, 1.442695
        %v1199 = vpow.pop %v1198
        %v1200 = vmul.f32 %v1184, 1.442695
        %v1201 = vpow.pop %v1200
        %v1202 = vmul.f32 %v1185, 1.442695
        %v1203 = vpow.pop %v1202
        %v1204 = vmul.f32 %v1186, 1.442695
        %v1205 = vpow.pop %v1204
        %v1206 = vmul.f32 %v1187, 1.442695
        %v1207 = vpow.pop %v1206
        %v1208 = vmul.f32 %v1188, 1.442695
        %v1209 = vpow.pop %v1208
        %v1210 = vmul.f32 %v1189, 1.442695
        %v1211 = vpow.pop %v1210
        %v1212 = vmul.f32 %v1190, 1.442695
        %v1213 = vpow.pop %v1212
        %v1214 = vmul.f32 %v1191, 1.442695
        %v1215 = vpow.pop %v1214
        %v1216 = vsel %vm1143, %v1193, 0.0
        %1217 = vadd.xlane.f32.xlu0 %v1216
        %v1218 = vpop.xlane.xlu0 %1217
        %v1219 = vsel %vm1143, %v1195, 0.0
        %1220 = vadd.xlane.f32.xlu0 %v1219
        %v1221 = vpop.xlane.xlu0 %1220
        %v1222 = vsel %vm1143, %v1197, 0.0
        %1223 = vadd.xlane.f32.xlu0 %v1222
        %v1224 = vpop.xlane.xlu0 %1223
        %v1225 = vsel %vm1143, %v1199, 0.0
        %1226 = vadd.xlane.f32.xlu0 %v1225
        %v1227 = vpop.xlane.xlu0 %1226
        %v1228 = vsel %vm1143, %v1201, 0.0
        %1229 = vadd.xlane.f32.xlu0 %v1228
        %v1230 = vpop.xlane.xlu0 %1229
        %v1231 = vsel %vm1143, %v1203, 0.0
        %1232 = vadd.xlane.f32.xlu0 %v1231
        %v1233 = vpop.xlane.xlu0 %1232
        %v1234 = vsel %vm1143, %v1205, 0.0
        %1235 = vadd.xlane.f32.xlu0 %v1234
        %v1236 = vpop.xlane.xlu0 %1235
        %v1237 = vsel %vm1143, %v1207, 0.0
        %1238 = vadd.xlane.f32.xlu0 %v1237
        %v1239 = vpop.xlane.xlu0 %1238
        %v1240 = vsel %vm1143, %v1209, 0.0
        %1241 = vadd.xlane.f32.xlu0 %v1240
        %v1242 = vpop.xlane.xlu0 %1241
        %v1243 = vsel %vm1143, %v1211, 0.0
        %1244 = vadd.xlane.f32.xlu0 %v1243
        %v1245 = vpop.xlane.xlu0 %1244
        %v1246 = vsel %vm1143, %v1213, 0.0
        %1247 = vadd.xlane.f32.xlu0 %v1246
        %v1248 = vpop.xlane.xlu0 %1247
        %v1249 = vsel %vm1143, %v1215, 0.0
        %1250 = vadd.xlane.f32.xlu0 %v1249
        %v1251 = vpop.xlane.xlu0 %1250
        %v1252 = vrcp.pop %v1218
        %v1253 = vmul.f32 %v1193, %v1252
        %v1254 = vrcp.pop %v1221
        %v1255 = vmul.f32 %v1195, %v1254
        %v1256 = vrcp.pop %v1224
        %v1257 = vmul.f32 %v1197, %v1256
        %v1258 = vrcp.pop %v1227
        %v1259 = vmul.f32 %v1199, %v1258
        %v1260 = vrcp.pop %v1230
        %v1261 = vmul.f32 %v1201, %v1260
        %v1262 = vrcp.pop %v1233
        %v1263 = vmul.f32 %v1203, %v1262
        %v1264 = vrcp.pop %v1236
        %v1265 = vmul.f32 %v1205, %v1264
        %v1266 = vrcp.pop %v1239
        %v1267 = vmul.f32 %v1207, %v1266
        %v1268 = vrcp.pop %v1242
        %v1269 = vmul.f32 %v1209, %v1268
        %v1270 = vrcp.pop %v1245
        %v1271 = vmul.f32 %v1211, %v1270
        %v1272 = vrcp.pop %v1248
        %v1273 = vmul.f32 %v1213, %v1272
        %v1274 = vrcp.pop %v1251
        %v1275 = vmul.f32 %v1215, %v1274
        %v1277 = vsel %vm1143, %v1253, 0
        %v1280 = vsel %vm1143, %v1255, 0
        %v1283 = vsel %vm1143, %v1257, 0
        %v1286 = vsel %vm1143, %v1259, 0
        %v1289 = vsel %vm1143, %v1261, 0
        %v1292 = vsel %vm1143, %v1263, 0
        %v1295 = vsel %vm1143, %v1265, 0
        %v1298 = vsel %vm1143, %v1267, 0
        %v1301 = vsel %vm1143, %v1269, 0
        %v1304 = vsel %vm1143, %v1271, 0
        %v1307 = vsel %vm1143, %v1273, 0
        %v1310 = vsel %vm1143, %v1275, 0
        %1312 = vmatprep.subr.mxu0 0.0
        %1313 = vmatpush1.msra.mxu0 0.0
        %1314 = vmatprep.subr.mxu0 0.0
        %1315 = vmatpush1.msra.mxu0 0.0
        %1316 = vmatprep.subr.mxu0 0.0
        %1317 = vmatpush1.msra.mxu0 0.0
        %1318 = vmatprep.subr.mxu0 0.0
        %1319 = vmatpush1.msra.mxu0 0.0
        %1320 = vmatprep.subr.mxu0 0.0
        %1321 = vmatpush1.msra.mxu0 %v957
        %1322 = vmatprep.subr.mxu0 0.0
        %1323 = vmatpush1.msra.mxu0 %v956
        %1324 = vmatprep.subr.mxu0 0.0
        %1325 = vmatpush1.msra.mxu0 %v955
        %1326 = vmatprep.subr.mxu0 0.0
        %1327 = vmatpush1.msra.mxu0 %v954
        %1328 = vmatprep.subr.mxu0 0.0
        %1329 = vmatpush1.msra.mxu0 %v953
        %1330 = vmatprep.subr.mxu0 0.0
        %1331 = vmatpush1.msra.mxu0 %v952
        %1332 = vmatprep.subr.mxu0 0.0
        %1333 = vmatpush1.msra.mxu0 %v951
        %1334 = vmatprep.subr.mxu0 0.0
        %1335 = vmatpush1.msra.mxu0 %v950
        %1336 = vmatprep.subr.mxu0 0.0
        %1337 = vmatpush1.msra.mxu0 %v949
        %1338 = vmatprep.subr.mxu0 0.0
        %1339 = vmatpush1.msra.mxu0 %v948
        %1340 = vmatprep.subr.mxu0 0.0
        %1341 = vmatpush1.msra.mxu0 %v947
        %1342 = vmatprep.subr.mxu0 0.0
        %1343 = vmatpush1.msra.mxu0 %v946
        %1344 = vmatprep.subr.mxu0 0.0
        %1345 = vmatpush2.msra.mxu0 0.0
        %1346 = vmatprep.subr.mxu0 0.0
        %1347 = vmatpush2.msra.mxu0 0.0
        %1348 = vmatprep.subr.mxu0 0.0
        %1349 = vmatpush2.msra.mxu0 0.0
        %1350 = vmatprep.subr.mxu0 0.0
        %1351 = vmatpush2.msra.mxu0 0.0
        %1352 = vmatprep.subr.mxu0 0.0
        %1353 = vmatpush2.msra.mxu0 0.0
        %1354 = vmatprep.subr.mxu0 0.0
        %1355 = vmatpush2.msra.mxu0 0.0
        %1356 = vmatprep.subr.mxu0 0.0
        %1357 = vmatpush2.msra.mxu0 0.0
        %1358 = vmatprep.subr.mxu0 0.0
        %1359 = vmatpush2.msra.mxu0 0.0
        %1360 = vmatprep.subr.mxu0 0.0
        %1361 = vmatpush2.msra.mxu0 0.0
        %1362 = vmatprep.subr.mxu0 0.0
        %1363 = vmatpush2.msra.mxu0 0.0
        %1364 = vmatprep.subr.mxu0 0.0
        %1365 = vmatpush2.msra.mxu0 0.0
        %1366 = vmatprep.subr.mxu0 0.0
        %1367 = vmatpush2.msra.mxu0 0.0
        %1368 = vmatprep.subr.mxu0 0.0
        %1369 = vmatpush2.msra.mxu0 0.0
        %1370 = vmatprep.subr.mxu0 0.0
        %1371 = vmatpush2.msra.mxu0 0.0
        %1372 = vmatprep.subr.mxu0 0.0
        %1373 = vmatpush2.msra.mxu0 0.0
        %1374 = vmatprep.subr.mxu0 0.0
        %1375 = vmatpush2.msra.mxu0 0.0
        %1376 = vmatprep.mubr.f32.mxu0 0.0
        %1377 = vmatmul.mubr.f32.gmra.mxu0 %v1277
        %v1378 = vpop.f32.mrf.mxu0
        %v1379 = vadd.f32 0.0, %v1378
        %v1380 = vpop.f32.mrf.mxu0
        %1381 = vmatprep.mubr.f32.mxu0 0.0
        %1382 = vmatmul.mubr.f32.gmra.mxu0 %v1280
        %v1383 = vpop.f32.mrf.mxu0
        %v1384 = vadd.f32 0.0, %v1383
        %v1385 = vpop.f32.mrf.mxu0
        %1386 = vmatprep.mubr.f32.mxu0 0.0
        %1387 = vmatmul.mubr.f32.gmra.mxu0 %v1283
        %v1388 = vpop.f32.mrf.mxu0
        %v1389 = vadd.f32 0.0, %v1388
        %v1390 = vpop.f32.mrf.mxu0
        %1391 = vmatprep.mubr.f32.mxu0 0.0
        %1392 = vmatmul.mubr.f32.gmra.mxu0 %v1286
        %v1393 = vpop.f32.mrf.mxu0
        %v1394 = vadd.f32 0.0, %v1393
        %v1395 = vpop.f32.mrf.mxu0
        %1396 = vmatprep.mubr.f32.mxu0 0.0
        %1397 = vmatmul.mubr.f32.gmra.mxu0 %v1289
        %v1398 = vpop.f32.mrf.mxu0
        %v1399 = vadd.f32 0.0, %v1398
        %v1400 = vpop.f32.mrf.mxu0
        %1401 = vmatprep.mubr.f32.mxu0 0.0
        %1402 = vmatmul.mubr.f32.gmra.mxu0 %v1292
        %v1403 = vpop.f32.mrf.mxu0
        %v1404 = vadd.f32 0.0, %v1403
        %v1405 = vpop.f32.mrf.mxu0
        %1406 = vmatprep.mubr.f32.mxu0 0.0
        %1407 = vmatmul.mubr.f32.gmra.mxu0 %v1295
        %v1408 = vpop.f32.mrf.mxu0
        %v1409 = vadd.f32 0.0, %v1408
        %v1410 = vpop.f32.mrf.mxu0
        %1411 = vmatprep.mubr.f32.mxu0 0.0
        %1412 = vmatmul.mubr.f32.gmra.mxu0 %v1298
        %v1413 = vpop.f32.mrf.mxu0
        %v1414 = vadd.f32 0.0, %v1413
        %v1415 = vpop.f32.mrf.mxu0
        %1416 = vmatprep.mubr.f32.mxu0 0.0
        %1417 = vmatmul.mubr.f32.gmra.mxu0 %v1301
        %v1418 = vpop.f32.mrf.mxu0
        %v1419 = vadd.f32 0.0, %v1418
        %v1420 = vpop.f32.mrf.mxu0
        %1421 = vmatprep.mubr.f32.mxu0 0.0
        %1422 = vmatmul.mubr.f32.gmra.mxu0 %v1304
        %v1423 = vpop.f32.mrf.mxu0
        %v1424 = vadd.f32 0.0, %v1423
        %v1425 = vpop.f32.mrf.mxu0
        %1426 = vmatprep.mubr.f32.mxu0 0.0
        %1427 = vmatmul.mubr.f32.gmra.mxu0 %v1307
        %v1428 = vpop.f32.mrf.mxu0
        %v1429 = vadd.f32 0.0, %v1428
        %v1430 = vpop.f32.mrf.mxu0
        %1431 = vmatprep.mubr.f32.mxu0 0.0
        %1432 = vmatmul.mubr.f32.gmra.mxu0 %v1310
        %v1433 = vpop.f32.mrf.mxu0
        %v1434 = vadd.f32 0.0, %v1433
        %v1435 = vpop.f32.mrf.mxu0
        %1436 = vdwg.mxu0
        %vm1437 = vcmp.ge.s32.totalorder %v872, 32
        %vm1438 = vcmp.lt.s32.totalorder %v872, 64
        %vm1439 = vmand %vm1437, %vm1438
        %v1440 = vsel %vm1439, 1, 0
        %vm1441 = vcmp.eq.s32.totalorder %v1440, 1
        %v1442 = vsel %vm1441, %v899, 0.0
        %v1443 = vsel %vm1441, %v901, 0.0
        %v1444 = vsel %vm1441, %v903, 0.0
        %v1445 = vsel %vm1441, %v905, 0.0
        %v1446 = vsel %vm1441, %v907, 0.0
        %v1447 = vsel %vm1441, %v909, 0.0
        %v1448 = vsel %vm1441, %v911, 0.0
        %v1449 = vsel %vm1441, %v913, 0.0
        %v1450 = vsel %vm1441, %v915, 0.0
        %v1451 = vsel %vm1441, %v917, 0.0
        %v1452 = vsel %vm1441, %v919, 0.0
        %v1453 = vsel %vm1441, %v921, 0.0
        %v1454 = vsel %vm1441, %v803, 0.0
        %v1455 = vsel %vm1441, %v809, 0.0
        %v1456 = vsel %vm1441, %v815, 0.0
        %v1457 = vsel %vm1441, %v821, 0.0
        %v1458 = vsel %vm1441, %v827, 0.0
        %v1459 = vsel %vm1441, %v833, 0.0
        %v1460 = vsel %vm1441, %v839, 0.0
        %v1461 = vsel %vm1441, %v845, 0.0
        %v1462 = vsel %vm1441, %v851, 0.0
        %v1463 = vsel %vm1441, %v857, 0.0
        %v1464 = vsel %vm1441, %v863, 0.0
        %v1465 = vsel %vm1441, %v869, 0.0
        %v1467 = vsel %vm697, %v1442, 0
        %v1470 = vsel %vm697, %v1443, 0
        %v1473 = vsel %vm697, %v1444, 0
        %v1476 = vsel %vm697, %v1445, 0
        %v1479 = vsel %vm697, %v1446, 0
        %v1482 = vsel %vm697, %v1447, 0
        %v1485 = vsel %vm697, %v1448, 0
        %v1488 = vsel %vm697, %v1449, 0
        %v1491 = vsel %vm697, %v1450, 0
        %v1494 = vsel %vm697, %v1451, 0
        %v1497 = vsel %vm697, %v1452, 0
        %v1500 = vsel %vm697, %v1453, 0
        %1502 = vmatprep.subr.mxu0 0.0
        %1503 = vmatpush1.xpose.msra.mxu0 0.0
        %1504 = vmatprep.subr.mxu0 0.0
        %1505 = vmatpush1.xpose.msra.mxu0 0.0
        %1506 = vmatprep.subr.mxu0 0.0
        %1507 = vmatpush1.xpose.msra.mxu0 0.0
        %1508 = vmatprep.subr.mxu0 0.0
        %1509 = vmatpush1.xpose.msra.mxu0 0.0
        %1510 = vmatprep.subr.mxu0 0.0
        %1511 = vmatpush1.xpose.msra.mxu0 %v1500
        %1512 = vmatprep.subr.mxu0 0.0
        %1513 = vmatpush1.xpose.msra.mxu0 %v1497
        %1514 = vmatprep.subr.mxu0 0.0
        %1515 = vmatpush1.xpose.msra.mxu0 %v1494
        %1516 = vmatprep.subr.mxu0 0.0
        %1517 = vmatpush1.xpose.msra.mxu0 %v1491
        %1518 = vmatprep.subr.mxu0 0.0
        %1519 = vmatpush1.xpose.msra.mxu0 %v1488
        %1520 = vmatprep.subr.mxu0 0.0
        %1521 = vmatpush1.xpose.msra.mxu0 %v1485
        %1522 = vmatprep.subr.mxu0 0.0
        %1523 = vmatpush1.xpose.msra.mxu0 %v1482
        %1524 = vmatprep.subr.mxu0 0.0
        %1525 = vmatpush1.xpose.msra.mxu0 %v1479
        %1526 = vmatprep.subr.mxu0 0.0
        %1527 = vmatpush1.xpose.msra.mxu0 %v1476
        %1528 = vmatprep.subr.mxu0 0.0
        %1529 = vmatpush1.xpose.msra.mxu0 %v1473
        %1530 = vmatprep.subr.mxu0 0.0
        %1531 = vmatpush1.xpose.msra.mxu0 %v1470
        %1532 = vmatprep.subr.mxu0 0.0
        %1533 = vmatpush1.xpose.msra.mxu0 %v1467
        %1534 = vmatprep.subr.mxu0 0.0
        %1535 = vmatpush2.xpose.msra.mxu0 0.0
        %1536 = vmatprep.subr.mxu0 0.0
        %1537 = vmatpush2.xpose.msra.mxu0 0.0
        %1538 = vmatprep.subr.mxu0 0.0
        %1539 = vmatpush2.xpose.msra.mxu0 0.0
        %1540 = vmatprep.subr.mxu0 0.0
        %1541 = vmatpush2.xpose.msra.mxu0 0.0
        %1542 = vmatprep.subr.mxu0 0.0
        %1543 = vmatpush2.xpose.msra.mxu0 0.0
        %1544 = vmatprep.subr.mxu0 0.0
        %1545 = vmatpush2.xpose.msra.mxu0 0.0
        %1546 = vmatprep.subr.mxu0 0.0
        %1547 = vmatpush2.xpose.msra.mxu0 0.0
        %1548 = vmatprep.subr.mxu0 0.0
        %1549 = vmatpush2.xpose.msra.mxu0 0.0
        %1550 = vmatprep.subr.mxu0 0.0
        %1551 = vmatpush2.xpose.msra.mxu0 0.0
        %1552 = vmatprep.subr.mxu0 0.0
        %1553 = vmatpush2.xpose.msra.mxu0 0.0
        %1554 = vmatprep.subr.mxu0 0.0
        %1555 = vmatpush2.xpose.msra.mxu0 0.0
        %1556 = vmatprep.subr.mxu0 0.0
        %1557 = vmatpush2.xpose.msra.mxu0 0.0
        %1558 = vmatprep.subr.mxu0 0.0
        %1559 = vmatpush2.xpose.msra.mxu0 0.0
        %1560 = vmatprep.subr.mxu0 0.0
        %1561 = vmatpush2.xpose.msra.mxu0 0.0
        %1562 = vmatprep.subr.mxu0 0.0
        %1563 = vmatpush2.xpose.msra.mxu0 0.0
        %1564 = vmatprep.subr.mxu0 0.0
        %1565 = vmatpush2.xpose.msra.mxu0 0.0
        %1566 = vmatprep.mubr.f32.mxu0 0.0
        %1567 = vmatmul.mubr.f32.gmra.mxu0 %v958
        %v1568 = vpop.f32.mrf.mxu0
        %v1569 = vadd.f32 0.0, %v1568
        %v1570 = vpop.f32.mrf.mxu0
        %1571 = vmatprep.mubr.f32.mxu0 0.0
        %1572 = vmatmul.mubr.f32.gmra.mxu0 %v960
        %v1573 = vpop.f32.mrf.mxu0
        %v1574 = vadd.f32 0.0, %v1573
        %v1575 = vpop.f32.mrf.mxu0
        %1576 = vmatprep.mubr.f32.mxu0 0.0
        %1577 = vmatmul.mubr.f32.gmra.mxu0 %v962
        %v1578 = vpop.f32.mrf.mxu0
        %v1579 = vadd.f32 0.0, %v1578
        %v1580 = vpop.f32.mrf.mxu0
        %1581 = vmatprep.mubr.f32.mxu0 0.0
        %1582 = vmatmul.mubr.f32.gmra.mxu0 %v964
        %v1583 = vpop.f32.mrf.mxu0
        %v1584 = vadd.f32 0.0, %v1583
        %v1585 = vpop.f32.mrf.mxu0
        %1586 = vmatprep.mubr.f32.mxu0 0.0
        %1587 = vmatmul.mubr.f32.gmra.mxu0 %v966
        %v1588 = vpop.f32.mrf.mxu0
        %v1589 = vadd.f32 0.0, %v1588
        %v1590 = vpop.f32.mrf.mxu0
        %1591 = vmatprep.mubr.f32.mxu0 0.0
        %1592 = vmatmul.mubr.f32.gmra.mxu0 %v968
        %v1593 = vpop.f32.mrf.mxu0
        %v1594 = vadd.f32 0.0, %v1593
        %v1595 = vpop.f32.mrf.mxu0
        %1596 = vmatprep.mubr.f32.mxu0 0.0
        %1597 = vmatmul.mubr.f32.gmra.mxu0 %v970
        %v1598 = vpop.f32.mrf.mxu0
        %v1599 = vadd.f32 0.0, %v1598
        %v1600 = vpop.f32.mrf.mxu0
        %1601 = vmatprep.mubr.f32.mxu0 0.0
        %1602 = vmatmul.mubr.f32.gmra.mxu0 %v972
        %v1603 = vpop.f32.mrf.mxu0
        %v1604 = vadd.f32 0.0, %v1603
        %v1605 = vpop.f32.mrf.mxu0
        %1606 = vmatprep.mubr.f32.mxu0 0.0
        %1607 = vmatmul.mubr.f32.gmra.mxu0 %v974
        %v1608 = vpop.f32.mrf.mxu0
        %v1609 = vadd.f32 0.0, %v1608
        %v1610 = vpop.f32.mrf.mxu0
        %1611 = vmatprep.mubr.f32.mxu0 0.0
        %1612 = vmatmul.mubr.f32.gmra.mxu0 %v976
        %v1613 = vpop.f32.mrf.mxu0
        %v1614 = vadd.f32 0.0, %v1613
        %v1615 = vpop.f32.mrf.mxu0
        %1616 = vmatprep.mubr.f32.mxu0 0.0
        %1617 = vmatmul.mubr.f32.gmra.mxu0 %v978
        %v1618 = vpop.f32.mrf.mxu0
        %v1619 = vadd.f32 0.0, %v1618
        %v1620 = vpop.f32.mrf.mxu0
        %1621 = vmatprep.mubr.f32.mxu0 0.0
        %1622 = vmatmul.mubr.f32.gmra.mxu0 %v980
        %v1623 = vpop.f32.mrf.mxu0
        %v1624 = vadd.f32 0.0, %v1623
        %v1625 = vpop.f32.mrf.mxu0
        %1626 = vdwg.mxu0
        %v1627 = vsel %vm1143, %v1569, -inf
        %1628 = vmax.xlane.f32.xlu0 %v1627
        %v1629 = vpop.xlane.xlu0 %1628
        %v1630 = vsel %vm1143, %v1574, -inf
        %1631 = vmax.xlane.f32.xlu0 %v1630
        %v1632 = vpop.xlane.xlu0 %1631
        %v1633 = vsel %vm1143, %v1579, -inf
        %1634 = vmax.xlane.f32.xlu0 %v1633
        %v1635 = vpop.xlane.xlu0 %1634
        %v1636 = vsel %vm1143, %v1584, -inf
        %1637 = vmax.xlane.f32.xlu0 %v1636
        %v1638 = vpop.xlane.xlu0 %1637
        %v1639 = vsel %vm1143, %v1589, -inf
        %1640 = vmax.xlane.f32.xlu0 %v1639
        %v1641 = vpop.xlane.xlu0 %1640
        %v1642 = vsel %vm1143, %v1594, -inf
        %1643 = vmax.xlane.f32.xlu0 %v1642
        %v1644 = vpop.xlane.xlu0 %1643
        %v1645 = vsel %vm1143, %v1599, -inf
        %1646 = vmax.xlane.f32.xlu0 %v1645
        %v1647 = vpop.xlane.xlu0 %1646
        %v1648 = vsel %vm1143, %v1604, -inf
        %1649 = vmax.xlane.f32.xlu0 %v1648
        %v1650 = vpop.xlane.xlu0 %1649
        %v1651 = vsel %vm1143, %v1609, -inf
        %1652 = vmax.xlane.f32.xlu0 %v1651
        %v1653 = vpop.xlane.xlu0 %1652
        %v1654 = vsel %vm1143, %v1614, -inf
        %1655 = vmax.xlane.f32.xlu0 %v1654
        %v1656 = vpop.xlane.xlu0 %1655
        %v1657 = vsel %vm1143, %v1619, -inf
        %1658 = vmax.xlane.f32.xlu0 %v1657
        %v1659 = vpop.xlane.xlu0 %1658
        %v1660 = vsel %vm1143, %v1624, -inf
        %1661 = vmax.xlane.f32.xlu0 %v1660
        %v1662 = vpop.xlane.xlu0 %1661
        %v1663 = vsub.f32 %v1569, %v1629
        %v1664 = vsub.f32 %v1574, %v1632
        %v1665 = vsub.f32 %v1579, %v1635
        %v1666 = vsub.f32 %v1584, %v1638
        %v1667 = vsub.f32 %v1589, %v1641
        %v1668 = vsub.f32 %v1594, %v1644
        %v1669 = vsub.f32 %v1599, %v1647
        %v1670 = vsub.f32 %v1604, %v1650
        %v1671 = vsub.f32 %v1609, %v1653
        %v1672 = vsub.f32 %v1614, %v1656
        %v1673 = vsub.f32 %v1619, %v1659
        %v1674 = vsub.f32 %v1624, %v1662
        %v1675 = vmul.f32 %v1663, 1.442695
        %v1676 = vpow.pop %v1675
        %v1677 = vmul.f32 %v1664, 1.442695
        %v1678 = vpow.pop %v1677
        %v1679 = vmul.f32 %v1665, 1.442695
        %v1680 = vpow.pop %v1679
        %v1681 = vmul.f32 %v1666, 1.442695
        %v1682 = vpow.pop %v1681
        %v1683 = vmul.f32 %v1667, 1.442695
        %v1684 = vpow.pop %v1683
        %v1685 = vmul.f32 %v1668, 1.442695
        %v1686 = vpow.pop %v1685
        %v1687 = vmul.f32 %v1669, 1.442695
        %v1688 = vpow.pop %v1687
        %v1689 = vmul.f32 %v1670, 1.442695
        %v1690 = vpow.pop %v1689
        %v1691 = vmul.f32 %v1671, 1.442695
        %v1692 = vpow.pop %v1691
        %v1693 = vmul.f32 %v1672, 1.442695
        %v1694 = vpow.pop %v1693
        %v1695 = vmul.f32 %v1673, 1.442695
        %v1696 = vpow.pop %v1695
        %v1697 = vmul.f32 %v1674, 1.442695
        %v1698 = vpow.pop %v1697
        %v1699 = vsel %vm1143, %v1676, 0.0
        %1700 = vadd.xlane.f32.xlu0 %v1699
        %v1701 = vpop.xlane.xlu0 %1700
        %v1702 = vsel %vm1143, %v1678, 0.0
        %1703 = vadd.xlane.f32.xlu0 %v1702
        %v1704 = vpop.xlane.xlu0 %1703
        %v1705 = vsel %vm1143, %v1680, 0.0
        %1706 = vadd.xlane.f32.xlu0 %v1705
        %v1707 = vpop.xlane.xlu0 %1706
        %v1708 = vsel %vm1143, %v1682, 0.0
        %1709 = vadd.xlane.f32.xlu0 %v1708
        %v1710 = vpop.xlane.xlu0 %1709
        %v1711 = vsel %vm1143, %v1684, 0.0
        %1712 = vadd.xlane.f32.xlu0 %v1711
        %v1713 = vpop.xlane.xlu0 %1712
        %v1714 = vsel %vm1143, %v1686, 0.0
        %1715 = vadd.xlane.f32.xlu0 %v1714
        %v1716 = vpop.xlane.xlu0 %1715
        %v1717 = vsel %vm1143, %v1688, 0.0
        %1718 = vadd.xlane.f32.xlu0 %v1717
        %v1719 = vpop.xlane.xlu0 %1718
        %v1720 = vsel %vm1143, %v1690, 0.0
        %1721 = vadd.xlane.f32.xlu0 %v1720
        %v1722 = vpop.xlane.xlu0 %1721
        %v1723 = vsel %vm1143, %v1692, 0.0
        %1724 = vadd.xlane.f32.xlu0 %v1723
        %v1725 = vpop.xlane.xlu0 %1724
        %v1726 = vsel %vm1143, %v1694, 0.0
        %1727 = vadd.xlane.f32.xlu0 %v1726
        %v1728 = vpop.xlane.xlu0 %1727
        %v1729 = vsel %vm1143, %v1696, 0.0
        %1730 = vadd.xlane.f32.xlu0 %v1729
        %v1731 = vpop.xlane.xlu0 %1730
        %v1732 = vsel %vm1143, %v1698, 0.0
        %1733 = vadd.xlane.f32.xlu0 %v1732
        %v1734 = vpop.xlane.xlu0 %1733
        %v1735 = vrcp.pop %v1701
        %v1736 = vmul.f32 %v1676, %v1735
        %v1737 = vrcp.pop %v1704
        %v1738 = vmul.f32 %v1678, %v1737
        %v1739 = vrcp.pop %v1707
        %v1740 = vmul.f32 %v1680, %v1739
        %v1741 = vrcp.pop %v1710
        %v1742 = vmul.f32 %v1682, %v1741
        %v1743 = vrcp.pop %v1713
        %v1744 = vmul.f32 %v1684, %v1743
        %v1745 = vrcp.pop %v1716
        %v1746 = vmul.f32 %v1686, %v1745
        %v1747 = vrcp.pop %v1719
        %v1748 = vmul.f32 %v1688, %v1747
        %v1749 = vrcp.pop %v1722
        %v1750 = vmul.f32 %v1690, %v1749
        %v1751 = vrcp.pop %v1725
        %v1752 = vmul.f32 %v1692, %v1751
        %v1753 = vrcp.pop %v1728
        %v1754 = vmul.f32 %v1694, %v1753
        %v1755 = vrcp.pop %v1731
        %v1756 = vmul.f32 %v1696, %v1755
        %v1757 = vrcp.pop %v1734
        %v1758 = vmul.f32 %v1698, %v1757
        %v1760 = vsel %vm1143, %v1736, 0
        %v1763 = vsel %vm1143, %v1738, 0
        %v1766 = vsel %vm1143, %v1740, 0
        %v1769 = vsel %vm1143, %v1742, 0
        %v1772 = vsel %vm1143, %v1744, 0
        %v1775 = vsel %vm1143, %v1746, 0
        %v1778 = vsel %vm1143, %v1748, 0
        %v1781 = vsel %vm1143, %v1750, 0
        %v1784 = vsel %vm1143, %v1752, 0
        %v1787 = vsel %vm1143, %v1754, 0
        %v1790 = vsel %vm1143, %v1756, 0
        %v1793 = vsel %vm1143, %v1758, 0
        %1795 = vmatprep.subr.mxu0 0.0
        %1796 = vmatpush1.msra.mxu0 0.0
        %1797 = vmatprep.subr.mxu0 0.0
        %1798 = vmatpush1.msra.mxu0 0.0
        %1799 = vmatprep.subr.mxu0 0.0
        %1800 = vmatpush1.msra.mxu0 0.0
        %1801 = vmatprep.subr.mxu0 0.0
        %1802 = vmatpush1.msra.mxu0 0.0
        %1803 = vmatprep.subr.mxu0 0.0
        %1804 = vmatpush1.msra.mxu0 %v1465
        %1805 = vmatprep.subr.mxu0 0.0
        %1806 = vmatpush1.msra.mxu0 %v1464
        %1807 = vmatprep.subr.mxu0 0.0
        %1808 = vmatpush1.msra.mxu0 %v1463
        %1809 = vmatprep.subr.mxu0 0.0
        %1810 = vmatpush1.msra.mxu0 %v1462
        %1811 = vmatprep.subr.mxu0 0.0
        %1812 = vmatpush1.msra.mxu0 %v1461
        %1813 = vmatprep.subr.mxu0 0.0
        %1814 = vmatpush1.msra.mxu0 %v1460
        %1815 = vmatprep.subr.mxu0 0.0
        %1816 = vmatpush1.msra.mxu0 %v1459
        %1817 = vmatprep.subr.mxu0 0.0
        %1818 = vmatpush1.msra.mxu0 %v1458
        %1819 = vmatprep.subr.mxu0 0.0
        %1820 = vmatpush1.msra.mxu0 %v1457
        %1821 = vmatprep.subr.mxu0 0.0
        %1822 = vmatpush1.msra.mxu0 %v1456
        %1823 = vmatprep.subr.mxu0 0.0
        %1824 = vmatpush1.msra.mxu0 %v1455
        %1825 = vmatprep.subr.mxu0 0.0
        %1826 = vmatpush1.msra.mxu0 %v1454
        %1827 = vmatprep.subr.mxu0 0.0
        %1828 = vmatpush2.msra.mxu0 0.0
        %1829 = vmatprep.subr.mxu0 0.0
        %1830 = vmatpush2.msra.mxu0 0.0
        %1831 = vmatprep.subr.mxu0 0.0
        %1832 = vmatpush2.msra.mxu0 0.0
        %1833 = vmatprep.subr.mxu0 0.0
        %1834 = vmatpush2.msra.mxu0 0.0
        %1835 = vmatprep.subr.mxu0 0.0
        %1836 = vmatpush2.msra.mxu0 0.0
        %1837 = vmatprep.subr.mxu0 0.0
        %1838 = vmatpush2.msra.mxu0 0.0
        %1839 = vmatprep.subr.mxu0 0.0
        %1840 = vmatpush2.msra.mxu0 0.0
        %1841 = vmatprep.subr.mxu0 0.0
        %1842 = vmatpush2.msra.mxu0 0.0
        %1843 = vmatprep.subr.mxu0 0.0
        %1844 = vmatpush2.msra.mxu0 0.0
        %1845 = vmatprep.subr.mxu0 0.0
        %1846 = vmatpush2.msra.mxu0 0.0
        %1847 = vmatprep.subr.mxu0 0.0
        %1848 = vmatpush2.msra.mxu0 0.0
        %1849 = vmatprep.subr.mxu0 0.0
        %1850 = vmatpush2.msra.mxu0 0.0
        %1851 = vmatprep.subr.mxu0 0.0
        %1852 = vmatpush2.msra.mxu0 0.0
        %1853 = vmatprep.subr.mxu0 0.0
        %1854 = vmatpush2.msra.mxu0 0.0
        %1855 = vmatprep.subr.mxu0 0.0
        %1856 = vmatpush2.msra.mxu0 0.0
        %1857 = vmatprep.subr.mxu0 0.0
        %1858 = vmatpush2.msra.mxu0 0.0
        %1859 = vmatprep.mubr.f32.mxu0 0.0
        %1860 = vmatmul.mubr.f32.gmra.mxu0 %v1760
        %v1861 = vpop.f32.mrf.mxu0
        %v1862 = vadd.f32 0.0, %v1861
        %v1863 = vpop.f32.mrf.mxu0
        %1864 = vmatprep.mubr.f32.mxu0 0.0
        %1865 = vmatmul.mubr.f32.gmra.mxu0 %v1763
        %v1866 = vpop.f32.mrf.mxu0
        %v1867 = vadd.f32 0.0, %v1866
        %v1868 = vpop.f32.mrf.mxu0
        %1869 = vmatprep.mubr.f32.mxu0 0.0
        %1870 = vmatmul.mubr.f32.gmra.mxu0 %v1766
        %v1871 = vpop.f32.mrf.mxu0
        %v1872 = vadd.f32 0.0, %v1871
        %v1873 = vpop.f32.mrf.mxu0
        %1874 = vmatprep.mubr.f32.mxu0 0.0
        %1875 = vmatmul.mubr.f32.gmra.mxu0 %v1769
        %v1876 = vpop.f32.mrf.mxu0
        %v1877 = vadd.f32 0.0, %v1876
        %v1878 = vpop.f32.mrf.mxu0
        %1879 = vmatprep.mubr.f32.mxu0 0.0
        %1880 = vmatmul.mubr.f32.gmra.mxu0 %v1772
        %v1881 = vpop.f32.mrf.mxu0
        %v1882 = vadd.f32 0.0, %v1881
        %v1883 = vpop.f32.mrf.mxu0
        %1884 = vmatprep.mubr.f32.mxu0 0.0
        %1885 = vmatmul.mubr.f32.gmra.mxu0 %v1775
        %v1886 = vpop.f32.mrf.mxu0
        %v1887 = vadd.f32 0.0, %v1886
        %v1888 = vpop.f32.mrf.mxu0
        %1889 = vmatprep.mubr.f32.mxu0 0.0
        %1890 = vmatmul.mubr.f32.gmra.mxu0 %v1778
        %v1891 = vpop.f32.mrf.mxu0
        %v1892 = vadd.f32 0.0, %v1891
        %v1893 = vpop.f32.mrf.mxu0
        %1894 = vmatprep.mubr.f32.mxu0 0.0
        %1895 = vmatmul.mubr.f32.gmra.mxu0 %v1781
        %v1896 = vpop.f32.mrf.mxu0
        %v1897 = vadd.f32 0.0, %v1896
        %v1898 = vpop.f32.mrf.mxu0
        %1899 = vmatprep.mubr.f32.mxu0 0.0
        %1900 = vmatmul.mubr.f32.gmra.mxu0 %v1784
        %v1901 = vpop.f32.mrf.mxu0
        %v1902 = vadd.f32 0.0, %v1901
        %v1903 = vpop.f32.mrf.mxu0
        %1904 = vmatprep.mubr.f32.mxu0 0.0
        %1905 = vmatmul.mubr.f32.gmra.mxu0 %v1787
        %v1906 = vpop.f32.mrf.mxu0
        %v1907 = vadd.f32 0.0, %v1906
        %v1908 = vpop.f32.mrf.mxu0
        %1909 = vmatprep.mubr.f32.mxu0 0.0
        %1910 = vmatmul.mubr.f32.gmra.mxu0 %v1790
        %v1911 = vpop.f32.mrf.mxu0
        %v1912 = vadd.f32 0.0, %v1911
        %v1913 = vpop.f32.mrf.mxu0
        %1914 = vmatprep.mubr.f32.mxu0 0.0
        %1915 = vmatmul.mubr.f32.gmra.mxu0 %v1793
        %v1916 = vpop.f32.mrf.mxu0
        %v1917 = vadd.f32 0.0, %v1916
        %v1918 = vpop.f32.mrf.mxu0
        %1919 = vdwg.mxu0
        %v1921 = vsel %vm697, %v1862, 0
        %v1924 = vsel %vm697, %v1867, 0
        %v1927 = vsel %vm697, %v1872, 0
        %v1930 = vsel %vm697, %v1877, 0
        %v1933 = vsel %vm697, %v1882, 0
        %v1936 = vsel %vm697, %v1887, 0
        %v1939 = vsel %vm697, %v1892, 0
        %v1942 = vsel %vm697, %v1897, 0
        %v1945 = vsel %vm697, %v1902, 0
        %v1948 = vsel %vm697, %v1907, 0
        %v1951 = vsel %vm697, %v1912, 0
        %v1954 = vsel %vm697, %v1917, 0
        %1956 = vmatprep.subr.mxu0 0.0
        %1957 = vmatpush1.msra.mxu0 0.0
        %1958 = vmatprep.subr.mxu0 0.0
        %1959 = vmatpush1.msra.mxu0 0.0
        %1960 = vmatprep.subr.mxu0 0.0
        %1961 = vmatpush1.msra.mxu0 0.0
        %1962 = vmatprep.subr.mxu0 0.0
        %1963 = vmatpush1.msra.mxu0 0.0
        %1964 = vmatprep.subr.mxu0 0.0
        %1965 = vmatpush1.msra.mxu0 0.0
        %1966 = vmatprep.subr.mxu0 0.0
        %1967 = vmatpush1.msra.mxu0 0.0
        %1968 = vmatprep.subr.mxu0 0.0
        %1969 = vmatpush1.msra.mxu0 0.0
        %1970 = vmatprep.subr.mxu0 0.0
        %1971 = vmatpush1.msra.mxu0 0.0
        %1972 = vmatprep.subr.mxu0 0.0
        %1973 = vmatpush1.msra.mxu0 %v880
        %1974 = vmatprep.subr.mxu0 0.0
        %1975 = vmatpush1.msra.mxu0 %v879
        %1976 = vmatprep.subr.mxu0 0.0
        %1977 = vmatpush1.msra.mxu0 %v878
        %1978 = vmatprep.subr.mxu0 0.0
        %1979 = vmatpush1.msra.mxu0 %v877
        %1980 = vmatprep.subr.mxu0 0.0
        %1981 = vmatpush1.msra.mxu0 %v876
        %1982 = vmatprep.subr.mxu0 0.0
        %1983 = vmatpush1.msra.mxu0 %v875
        %1984 = vmatprep.subr.mxu0 0.0
        %1985 = vmatpush1.msra.mxu0 %v874
        %1986 = vmatprep.subr.mxu0 0.0
        %1987 = vmatpush1.msra.mxu0 %v873
        %1988 = vmatprep.subr.mxu0 0.0
        %1989 = vmatpush2.msra.mxu0 0.0
        %1990 = vmatprep.subr.mxu0 0.0
        %1991 = vmatpush2.msra.mxu0 0.0
        %1992 = vmatprep.subr.mxu0 0.0
        %1993 = vmatpush2.msra.mxu0 0.0
        %1994 = vmatprep.subr.mxu0 0.0
        %1995 = vmatpush2.msra.mxu0 0.0
        %1996 = vmatprep.subr.mxu0 0.0
        %1997 = vmatpush2.msra.mxu0 0.0
        %1998 = vmatprep.subr.mxu0 0.0
        %1999 = vmatpush2.msra.mxu0 0.0
        %2000 = vmatprep.subr.mxu0 0.0
        %2001 = vmatpush2.msra.mxu0 0.0
        %2002 = vmatprep.subr.mxu0 0.0
        %2003 = vmatpush2.msra.mxu0 0.0
        %2004 = vmatprep.subr.mxu0 0.0
        %2005 = vmatpush2.msra.mxu0 0.0
        %2006 = vmatprep.subr.mxu0 0.0
        %2007 = vmatpush2.msra.mxu0 0.0
        %2008 = vmatprep.subr.mxu0 0.0
        %2009 = vmatpush2.msra.mxu0 0.0
        %2010 = vmatprep.subr.mxu0 0.0
        %2011 = vmatpush2.msra.mxu0 0.0
        %2012 = vmatprep.subr.mxu0 0.0
        %2013 = vmatpush2.msra.mxu0 0.0
        %2014 = vmatprep.subr.mxu0 0.0
        %2015 = vmatpush2.msra.mxu0 0.0
        %2016 = vmatprep.subr.mxu0 0.0
        %2017 = vmatpush2.msra.mxu0 0.0
        %2018 = vmatprep.subr.mxu0 0.0
        %2019 = vmatpush2.msra.mxu0 0.0
        %2020 = vmatprep.mubr.f32.mxu0 0.0
        %2021 = vmatmul.mubr.f32.gmra.mxu0 %v1921
        %v2022 = vpop.f32.mrf.mxu0
        %v2023 = vadd.f32 0.0, %v2022
        %v2024 = vpop.f32.mrf.mxu0
        %2025 = vmatprep.mubr.f32.mxu0 0.0
        %2026 = vmatmul.mubr.f32.gmra.mxu0 %v1924
        %v2027 = vpop.f32.mrf.mxu0
        %v2028 = vadd.f32 0.0, %v2027
        %v2029 = vpop.f32.mrf.mxu0
        %2030 = vmatprep.mubr.f32.mxu0 0.0
        %2031 = vmatmul.mubr.f32.gmra.mxu0 %v1927
        %v2032 = vpop.f32.mrf.mxu0
        %v2033 = vadd.f32 0.0, %v2032
        %v2034 = vpop.f32.mrf.mxu0
        %2035 = vmatprep.mubr.f32.mxu0 0.0
        %2036 = vmatmul.mubr.f32.gmra.mxu0 %v1930
        %v2037 = vpop.f32.mrf.mxu0
        %v2038 = vadd.f32 0.0, %v2037
        %v2039 = vpop.f32.mrf.mxu0
        %2040 = vmatprep.mubr.f32.mxu0 0.0
        %2041 = vmatmul.mubr.f32.gmra.mxu0 %v1933
        %v2042 = vpop.f32.mrf.mxu0
        %v2043 = vadd.f32 0.0, %v2042
        %v2044 = vpop.f32.mrf.mxu0
        %2045 = vmatprep.mubr.f32.mxu0 0.0
        %2046 = vmatmul.mubr.f32.gmra.mxu0 %v1936
        %v2047 = vpop.f32.mrf.mxu0
        %v2048 = vadd.f32 0.0, %v2047
        %v2049 = vpop.f32.mrf.mxu0
        %2050 = vmatprep.mubr.f32.mxu0 0.0
        %2051 = vmatmul.mubr.f32.gmra.mxu0 %v1939
        %v2052 = vpop.f32.mrf.mxu0
        %v2053 = vadd.f32 0.0, %v2052
        %v2054 = vpop.f32.mrf.mxu0
        %2055 = vmatprep.mubr.f32.mxu0 0.0
        %2056 = vmatmul.mubr.f32.gmra.mxu0 %v1942
        %v2057 = vpop.f32.mrf.mxu0
        %v2058 = vadd.f32 0.0, %v2057
        %v2059 = vpop.f32.mrf.mxu0
        %2060 = vmatprep.mubr.f32.mxu0 0.0
        %2061 = vmatmul.mubr.f32.gmra.mxu0 %v1945
        %v2062 = vpop.f32.mrf.mxu0
        %v2063 = vadd.f32 0.0, %v2062
        %v2064 = vpop.f32.mrf.mxu0
        %2065 = vmatprep.mubr.f32.mxu0 0.0
        %2066 = vmatmul.mubr.f32.gmra.mxu0 %v1948
        %v2067 = vpop.f32.mrf.mxu0
        %v2068 = vadd.f32 0.0, %v2067
        %v2069 = vpop.f32.mrf.mxu0
        %2070 = vmatprep.mubr.f32.mxu0 0.0
        %2071 = vmatmul.mubr.f32.gmra.mxu0 %v1951
        %v2072 = vpop.f32.mrf.mxu0
        %v2073 = vadd.f32 0.0, %v2072
        %v2074 = vpop.f32.mrf.mxu0
        %2075 = vmatprep.mubr.f32.mxu0 0.0
        %2076 = vmatmul.mubr.f32.gmra.mxu0 %v1954
        %v2077 = vpop.f32.mrf.mxu0
        %v2078 = vadd.f32 0.0, %v2077
        %v2079 = vpop.f32.mrf.mxu0
        %2080 = vdwg.mxu0
        %v2082 = vsel %vm697, %v1379, 0
        %v2085 = vsel %vm697, %v1384, 0
        %v2088 = vsel %vm697, %v1389, 0
        %v2091 = vsel %vm697, %v1394, 0
        %v2094 = vsel %vm697, %v1399, 0
        %v2097 = vsel %vm697, %v1404, 0
        %v2100 = vsel %vm697, %v1409, 0
        %v2103 = vsel %vm697, %v1414, 0
        %v2106 = vsel %vm697, %v1419, 0
        %v2109 = vsel %vm697, %v1424, 0
        %v2112 = vsel %vm697, %v1429, 0
        %v2115 = vsel %vm697, %v1434, 0
        %2117 = vmatprep.subr.mxu0 0.0
        %2118 = vmatpush1.msra.mxu0 0.0
        %2119 = vmatprep.subr.mxu0 0.0
        %2120 = vmatpush1.msra.mxu0 0.0
        %2121 = vmatprep.subr.mxu0 0.0
        %2122 = vmatpush1.msra.mxu0 0.0
        %2123 = vmatprep.subr.mxu0 0.0
        %2124 = vmatpush1.msra.mxu0 0.0
        %2125 = vmatprep.subr.mxu0 0.0
        %2126 = vmatpush1.msra.mxu0 0.0
        %2127 = vmatprep.subr.mxu0 0.0
        %2128 = vmatpush1.msra.mxu0 0.0
        %2129 = vmatprep.subr.mxu0 0.0
        %2130 = vmatpush1.msra.mxu0 0.0
        %2131 = vmatprep.subr.mxu0 0.0
        %2132 = vmatpush1.msra.mxu0 0.0
        %2133 = vmatprep.subr.mxu0 0.0
        %2134 = vmatpush1.msra.mxu0 %v880
        %2135 = vmatprep.subr.mxu0 0.0
        %2136 = vmatpush1.msra.mxu0 %v879
        %2137 = vmatprep.subr.mxu0 0.0
        %2138 = vmatpush1.msra.mxu0 %v878
        %2139 = vmatprep.subr.mxu0 0.0
        %2140 = vmatpush1.msra.mxu0 %v877
        %2141 = vmatprep.subr.mxu0 0.0
        %2142 = vmatpush1.msra.mxu0 %v876
        %2143 = vmatprep.subr.mxu0 0.0
        %2144 = vmatpush1.msra.mxu0 %v875
        %2145 = vmatprep.subr.mxu0 0.0
        %2146 = vmatpush1.msra.mxu0 %v874
        %2147 = vmatprep.subr.mxu0 0.0
        %2148 = vmatpush1.msra.mxu0 %v873
        %2149 = vmatprep.subr.mxu0 0.0
        %2150 = vmatpush2.msra.mxu0 0.0
        %2151 = vmatprep.subr.mxu0 0.0
        %2152 = vmatpush2.msra.mxu0 0.0
        %2153 = vmatprep.subr.mxu0 0.0
        %2154 = vmatpush2.msra.mxu0 0.0
        %2155 = vmatprep.subr.mxu0 0.0
        %2156 = vmatpush2.msra.mxu0 0.0
        %2157 = vmatprep.subr.mxu0 0.0
        %2158 = vmatpush2.msra.mxu0 0.0
        %2159 = vmatprep.subr.mxu0 0.0
        %2160 = vmatpush2.msra.mxu0 0.0
        %2161 = vmatprep.subr.mxu0 0.0
        %2162 = vmatpush2.msra.mxu0 0.0
        %2163 = vmatprep.subr.mxu0 0.0
        %2164 = vmatpush2.msra.mxu0 0.0
        %2165 = vmatprep.subr.mxu0 0.0
        %2166 = vmatpush2.msra.mxu0 0.0
        %2167 = vmatprep.subr.mxu0 0.0
        %2168 = vmatpush2.msra.mxu0 0.0
        %2169 = vmatprep.subr.mxu0 0.0
        %2170 = vmatpush2.msra.mxu0 0.0
        %2171 = vmatprep.subr.mxu0 0.0
        %2172 = vmatpush2.msra.mxu0 0.0
        %2173 = vmatprep.subr.mxu0 0.0
        %2174 = vmatpush2.msra.mxu0 0.0
        %2175 = vmatprep.subr.mxu0 0.0
        %2176 = vmatpush2.msra.mxu0 0.0
        %2177 = vmatprep.subr.mxu0 0.0
        %2178 = vmatpush2.msra.mxu0 0.0
        %2179 = vmatprep.subr.mxu0 0.0
        %2180 = vmatpush2.msra.mxu0 0.0
        %2181 = vmatprep.mubr.f32.mxu0 0.0
        %2182 = vmatmul.mubr.f32.gmra.mxu0 %v2082
        %v2183 = vpop.f32.mrf.mxu0
        %v2184 = vadd.f32 %v2023, %v2183
        %v2185 = vpop.f32.mrf.mxu0
        %2186 = vmatprep.mubr.f32.mxu0 0.0
        %2187 = vmatmul.mubr.f32.gmra.mxu0 %v2085
        %v2188 = vpop.f32.mrf.mxu0
        %v2189 = vadd.f32 %v2028, %v2188
        %v2190 = vpop.f32.mrf.mxu0
        %2191 = vmatprep.mubr.f32.mxu0 0.0
        %2192 = vmatmul.mubr.f32.gmra.mxu0 %v2088
        %v2193 = vpop.f32.mrf.mxu0
        %v2194 = vadd.f32 %v2033, %v2193
        %v2195 = vpop.f32.mrf.mxu0
        %2196 = vmatprep.mubr.f32.mxu0 0.0
        %2197 = vmatmul.mubr.f32.gmra.mxu0 %v2091
        %v2198 = vpop.f32.mrf.mxu0
        %v2199 = vadd.f32 %v2038, %v2198
        %v2200 = vpop.f32.mrf.mxu0
        %2201 = vmatprep.mubr.f32.mxu0 0.0
        %2202 = vmatmul.mubr.f32.gmra.mxu0 %v2094
        %v2203 = vpop.f32.mrf.mxu0
        %v2204 = vadd.f32 %v2043, %v2203
        %v2205 = vpop.f32.mrf.mxu0
        %2206 = vmatprep.mubr.f32.mxu0 0.0
        %2207 = vmatmul.mubr.f32.gmra.mxu0 %v2097
        %v2208 = vpop.f32.mrf.mxu0
        %v2209 = vadd.f32 %v2048, %v2208
        %v2210 = vpop.f32.mrf.mxu0
        %2211 = vmatprep.mubr.f32.mxu0 0.0
        %2212 = vmatmul.mubr.f32.gmra.mxu0 %v2100
        %v2213 = vpop.f32.mrf.mxu0
        %v2214 = vadd.f32 %v2053, %v2213
        %v2215 = vpop.f32.mrf.mxu0
        %2216 = vmatprep.mubr.f32.mxu0 0.0
        %2217 = vmatmul.mubr.f32.gmra.mxu0 %v2103
        %v2218 = vpop.f32.mrf.mxu0
        %v2219 = vadd.f32 %v2058, %v2218
        %v2220 = vpop.f32.mrf.mxu0
        %2221 = vmatprep.mubr.f32.mxu0 0.0
        %2222 = vmatmul.mubr.f32.gmra.mxu0 %v2106
        %v2223 = vpop.f32.mrf.mxu0
        %v2224 = vadd.f32 %v2063, %v2223
        %v2225 = vpop.f32.mrf.mxu0
        %2226 = vmatprep.mubr.f32.mxu0 0.0
        %2227 = vmatmul.mubr.f32.gmra.mxu0 %v2109
        %v2228 = vpop.f32.mrf.mxu0
        %v2229 = vadd.f32 %v2068, %v2228
        %v2230 = vpop.f32.mrf.mxu0
        %2231 = vmatprep.mubr.f32.mxu0 0.0
        %2232 = vmatmul.mubr.f32.gmra.mxu0 %v2112
        %v2233 = vpop.f32.mrf.mxu0
        %v2234 = vadd.f32 %v2073, %v2233
        %v2235 = vpop.f32.mrf.mxu0
        %2236 = vmatprep.mubr.f32.mxu0 0.0
        %2237 = vmatmul.mubr.f32.gmra.mxu0 %v2115
        %v2238 = vpop.f32.mrf.mxu0
        %v2239 = vadd.f32 %v2078, %v2238
        %v2240 = vpop.f32.mrf.mxu0
        %2241 = vdwg.mxu0
        %v2242 = vld [vmem:[%s6] sm:$0x1]
        %v2244 = vlaneseq
        %v2245 = vshrl.u32 %v2244, 7
        %v2246 = vsub.s32 0, %v2245
        %v2247 = vrot.slane %v2242, %v2246
        %v2249 = vadd.f32 %v2184, %v2247
        %v2250 = vadd.f32 %v2189, %v2247
        %v2251 = vadd.f32 %v2194, %v2247
        %v2252 = vadd.f32 %v2199, %v2247
        %v2253 = vadd.f32 %v2204, %v2247
        %v2254 = vadd.f32 %v2209, %v2247
        %v2255 = vadd.f32 %v2214, %v2247
        %v2256 = vadd.f32 %v2219, %v2247
        %v2257 = vadd.f32 %v2224, %v2247
        %v2258 = vadd.f32 %v2229, %v2247
        %v2259 = vadd.f32 %v2234, %v2247
        %v2260 = vadd.f32 %v2239, %v2247
        %v2261 = vld [vmem:[%s7] sm:$0xff]
        %v2262 = vld [vmem:[%s7 + $0x8] sm:$0xff]
        %v2263 = vld [vmem:[%s7 + $0x10] sm:$0xff]
        %v2264 = vld [vmem:[%s7 + $0x18] sm:$0xff]
        %v2265 = vld [vmem:[%s7 + $0x20] sm:$0xff]
        %v2266 = vld [vmem:[%s7 + $0x28] sm:$0xff]
        %v2267 = vld [vmem:[%s7 + $0x30] sm:$0xff]
        %v2268 = vld [vmem:[%s7 + $0x38] sm:$0xff]
        %v2269 = vld [vmem:[%s8] sm:$0x1]
        %v2271 = vlaneseq
        %v2272 = vshrl.u32 %v2271, 7
        %v2273 = vsub.s32 0, %v2272
        %v2274 = vrot.slane %v2269, %v2273
        %v2277 = vsel %vm697, %v2249, 0
        %v2280 = vsel %vm697, %v2250, 0
        %v2283 = vsel %vm697, %v2251, 0
        %v2286 = vsel %vm697, %v2252, 0
        %v2289 = vsel %vm697, %v2253, 0
        %v2292 = vsel %vm697, %v2254, 0
        %v2295 = vsel %vm697, %v2255, 0
        %v2298 = vsel %vm697, %v2256, 0
        %v2301 = vsel %vm697, %v2257, 0
        %v2304 = vsel %vm697, %v2258, 0
        %v2307 = vsel %vm697, %v2259, 0
        %v2310 = vsel %vm697, %v2260, 0
        %2312 = vmatprep.subr.mxu0 0.0
        %2313 = vmatpush1.msra.mxu0 0.0
        %2314 = vmatprep.subr.mxu0 0.0
        %2315 = vmatpush1.msra.mxu0 0.0
        %2316 = vmatprep.subr.mxu0 0.0
        %2317 = vmatpush1.msra.mxu0 0.0
        %2318 = vmatprep.subr.mxu0 0.0
        %2319 = vmatpush1.msra.mxu0 0.0
        %2320 = vmatprep.subr.mxu0 0.0
        %2321 = vmatpush1.msra.mxu0 0.0
        %2322 = vmatprep.subr.mxu0 0.0
        %2323 = vmatpush1.msra.mxu0 0.0
        %2324 = vmatprep.subr.mxu0 0.0
        %2325 = vmatpush1.msra.mxu0 0.0
        %2326 = vmatprep.subr.mxu0 0.0
        %2327 = vmatpush1.msra.mxu0 0.0
        %2328 = vmatprep.subr.mxu0 0.0
        %2329 = vmatpush1.msra.mxu0 %v2268
        %2330 = vmatprep.subr.mxu0 0.0
        %2331 = vmatpush1.msra.mxu0 %v2267
        %2332 = vmatprep.subr.mxu0 0.0
        %2333 = vmatpush1.msra.mxu0 %v2266
        %2334 = vmatprep.subr.mxu0 0.0
        %2335 = vmatpush1.msra.mxu0 %v2265
        %2336 = vmatprep.subr.mxu0 0.0
        %2337 = vmatpush1.msra.mxu0 %v2264
        %2338 = vmatprep.subr.mxu0 0.0
        %2339 = vmatpush1.msra.mxu0 %v2263
        %2340 = vmatprep.subr.mxu0 0.0
        %2341 = vmatpush1.msra.mxu0 %v2262
        %2342 = vmatprep.subr.mxu0 0.0
        %2343 = vmatpush1.msra.mxu0 %v2261
        %2344 = vmatprep.subr.mxu0 0.0
        %2345 = vmatpush2.msra.mxu0 0.0
        %2346 = vmatprep.subr.mxu0 0.0
        %2347 = vmatpush2.msra.mxu0 0.0
        %2348 = vmatprep.subr.mxu0 0.0
        %2349 = vmatpush2.msra.mxu0 0.0
        %2350 = vmatprep.subr.mxu0 0.0
        %2351 = vmatpush2.msra.mxu0 0.0
        %2352 = vmatprep.subr.mxu0 0.0
        %2353 = vmatpush2.msra.mxu0 0.0
        %2354 = vmatprep.subr.mxu0 0.0
        %2355 = vmatpush2.msra.mxu0 0.0
        %2356 = vmatprep.subr.mxu0 0.0
        %2357 = vmatpush2.msra.mxu0 0.0
        %2358 = vmatprep.subr.mxu0 0.0
        %2359 = vmatpush2.msra.mxu0 0.0
        %2360 = vmatprep.subr.mxu0 0.0
        %2361 = vmatpush2.msra.mxu0 0.0
        %2362 = vmatprep.subr.mxu0 0.0
        %2363 = vmatpush2.msra.mxu0 0.0
        %2364 = vmatprep.subr.mxu0 0.0
        %2365 = vmatpush2.msra.mxu0 0.0
        %2366 = vmatprep.subr.mxu0 0.0
        %2367 = vmatpush2.msra.mxu0 0.0
        %2368 = vmatprep.subr.mxu0 0.0
        %2369 = vmatpush2.msra.mxu0 0.0
        %2370 = vmatprep.subr.mxu0 0.0
        %2371 = vmatpush2.msra.mxu0 0.0
        %2372 = vmatprep.subr.mxu0 0.0
        %2373 = vmatpush2.msra.mxu0 0.0
        %2374 = vmatprep.subr.mxu0 0.0
        %2375 = vmatpush2.msra.mxu0 0.0
        %2376 = vmatprep.mubr.f32.mxu0 0.0
        %2377 = vmatmul.mubr.f32.gmra.mxu0 %v2277
        %v2378 = vpop.f32.mrf.mxu0
        %v2379 = vadd.f32 %v2274, %v2378
        %v2380 = vpop.f32.mrf.mxu0
        %2381 = vmatprep.mubr.f32.mxu0 0.0
        %2382 = vmatmul.mubr.f32.gmra.mxu0 %v2280
        %v2383 = vpop.f32.mrf.mxu0
        %v2384 = vadd.f32 %v2274, %v2383
        %v2385 = vpop.f32.mrf.mxu0
        %2386 = vmatprep.mubr.f32.mxu0 0.0
        %2387 = vmatmul.mubr.f32.gmra.mxu0 %v2283
        %v2388 = vpop.f32.mrf.mxu0
        %v2389 = vadd.f32 %v2274, %v2388
        %v2390 = vpop.f32.mrf.mxu0
        %2391 = vmatprep.mubr.f32.mxu0 0.0
        %2392 = vmatmul.mubr.f32.gmra.mxu0 %v2286
        %v2393 = vpop.f32.mrf.mxu0
        %v2394 = vadd.f32 %v2274, %v2393
        %v2395 = vpop.f32.mrf.mxu0
        %2396 = vmatprep.mubr.f32.mxu0 0.0
        %2397 = vmatmul.mubr.f32.gmra.mxu0 %v2289
        %v2398 = vpop.f32.mrf.mxu0
        %v2399 = vadd.f32 %v2274, %v2398
        %v2400 = vpop.f32.mrf.mxu0
        %2401 = vmatprep.mubr.f32.mxu0 0.0
        %2402 = vmatmul.mubr.f32.gmra.mxu0 %v2292
        %v2403 = vpop.f32.mrf.mxu0
        %v2404 = vadd.f32 %v2274, %v2403
        %v2405 = vpop.f32.mrf.mxu0
        %2406 = vmatprep.mubr.f32.mxu0 0.0
        %2407 = vmatmul.mubr.f32.gmra.mxu0 %v2295
        %v2408 = vpop.f32.mrf.mxu0
        %v2409 = vadd.f32 %v2274, %v2408
        %v2410 = vpop.f32.mrf.mxu0
        %2411 = vmatprep.mubr.f32.mxu0 0.0
        %2412 = vmatmul.mubr.f32.gmra.mxu0 %v2298
        %v2413 = vpop.f32.mrf.mxu0
        %v2414 = vadd.f32 %v2274, %v2413
        %v2415 = vpop.f32.mrf.mxu0
        %2416 = vmatprep.mubr.f32.mxu0 0.0
        %2417 = vmatmul.mubr.f32.gmra.mxu0 %v2301
        %v2418 = vpop.f32.mrf.mxu0
        %v2419 = vadd.f32 %v2274, %v2418
        %v2420 = vpop.f32.mrf.mxu0
        %2421 = vmatprep.mubr.f32.mxu0 0.0
        %2422 = vmatmul.mubr.f32.gmra.mxu0 %v2304
        %v2423 = vpop.f32.mrf.mxu0
        %v2424 = vadd.f32 %v2274, %v2423
        %v2425 = vpop.f32.mrf.mxu0
        %2426 = vmatprep.mubr.f32.mxu0 0.0
        %2427 = vmatmul.mubr.f32.gmra.mxu0 %v2307
        %v2428 = vpop.f32.mrf.mxu0
        %v2429 = vadd.f32 %v2274, %v2428
        %v2430 = vpop.f32.mrf.mxu0
        %2431 = vmatprep.mubr.f32.mxu0 0.0
        %2432 = vmatmul.mubr.f32.gmra.mxu0 %v2310
        %v2433 = vpop.f32.mrf.mxu0
        %v2434 = vadd.f32 %v2274, %v2433
        %v2435 = vpop.f32.mrf.mxu0
        %2436 = vdwg.mxu0
        %v2437 = vmax.f32 %v2379, 0.0
        %v2438 = vmax.f32 %v2384, 0.0
        %v2439 = vmax.f32 %v2389, 0.0
        %v2440 = vmax.f32 %v2394, 0.0
        %v2441 = vmax.f32 %v2399, 0.0
        %v2442 = vmax.f32 %v2404, 0.0
        %v2443 = vmax.f32 %v2409, 0.0
        %v2444 = vmax.f32 %v2414, 0.0
        %v2445 = vmax.f32 %v2419, 0.0
        %v2446 = vmax.f32 %v2424, 0.0
        %v2447 = vmax.f32 %v2429, 0.0
        %v2448 = vmax.f32 %v2434, 0.0
        %v2449 = vld [vmem:[%s9] sm:$0x1]
        %v2450 = vld [vmem:[#allocation2] sm:$0x1]
        %2452 = vset.pattern.permute.xlu0 0
        %2453 = vperm.xlu0 %2452, %v2450
        %v2454 = vpop.permute.xlu0 %2453
        %v2456 = vlaneseq
        %v2457 = vshrl.u32 %v2456, 7
        %v2458 = vsub.s32 0, %v2457
        %v2459 = vrot.slane %v2454, %v2458
        %vm2460 = vcmask 261120
        %v2462 = vsel %vm2460, %v2449, 0
        %v2465 = vsel %vm2460, %v2437, 0
        %v2468 = vsel %vm2460, %v2438, 0
        %v2471 = vsel %vm2460, %v2439, 0
        %v2474 = vsel %vm2460, %v2440, 0
        %v2477 = vsel %vm2460, %v2441, 0
        %v2480 = vsel %vm2460, %v2442, 0
        %v2483 = vsel %vm2460, %v2443, 0
        %v2486 = vsel %vm2460, %v2444, 0
        %v2489 = vsel %vm2460, %v2445, 0
        %v2492 = vsel %vm2460, %v2446, 0
        %v2495 = vsel %vm2460, %v2447, 0
        %v2498 = vsel %vm2460, %v2448, 0
        %2500 = vmatprep.subr.mxu0 0.0
        %2501 = vmatpush1.xpose.msra.mxu0 0.0
        %2502 = vmatprep.subr.mxu0 0.0
        %2503 = vmatpush1.xpose.msra.mxu0 0.0
        %2504 = vmatprep.subr.mxu0 0.0
        %2505 = vmatpush1.xpose.msra.mxu0 0.0
        %2506 = vmatprep.subr.mxu0 0.0
        %2507 = vmatpush1.xpose.msra.mxu0 0.0
        %2508 = vmatprep.subr.mxu0 0.0
        %2509 = vmatpush1.xpose.msra.mxu0 %v2498
        %2510 = vmatprep.subr.mxu0 0.0
        %2511 = vmatpush1.xpose.msra.mxu0 %v2495
        %2512 = vmatprep.subr.mxu0 0.0
        %2513 = vmatpush1.xpose.msra.mxu0 %v2492
        %2514 = vmatprep.subr.mxu0 0.0
        %2515 = vmatpush1.xpose.msra.mxu0 %v2489
        %2516 = vmatprep.subr.mxu0 0.0
        %2517 = vmatpush1.xpose.msra.mxu0 %v2486
        %2518 = vmatprep.subr.mxu0 0.0
        %2519 = vmatpush1.xpose.msra.mxu0 %v2483
        %2520 = vmatprep.subr.mxu0 0.0
        %2521 = vmatpush1.xpose.msra.mxu0 %v2480
        %2522 = vmatprep.subr.mxu0 0.0
        %2523 = vmatpush1.xpose.msra.mxu0 %v2477
        %2524 = vmatprep.subr.mxu0 0.0
        %2525 = vmatpush1.xpose.msra.mxu0 %v2474
        %2526 = vmatprep.subr.mxu0 0.0
        %2527 = vmatpush1.xpose.msra.mxu0 %v2471
        %2528 = vmatprep.subr.mxu0 0.0
        %2529 = vmatpush1.xpose.msra.mxu0 %v2468
        %2530 = vmatprep.subr.mxu0 0.0
        %2531 = vmatpush1.xpose.msra.mxu0 %v2465
        %2532 = vmatprep.subr.mxu0 0.0
        %2533 = vmatpush2.xpose.msra.mxu0 0.0
        %2534 = vmatprep.subr.mxu0 0.0
        %2535 = vmatpush2.xpose.msra.mxu0 0.0
        %2536 = vmatprep.subr.mxu0 0.0
        %2537 = vmatpush2.xpose.msra.mxu0 0.0
        %2538 = vmatprep.subr.mxu0 0.0
        %2539 = vmatpush2.xpose.msra.mxu0 0.0
        %2540 = vmatprep.subr.mxu0 0.0
        %2541 = vmatpush2.xpose.msra.mxu0 0.0
        %2542 = vmatprep.subr.mxu0 0.0
        %2543 = vmatpush2.xpose.msra.mxu0 0.0
        %2544 = vmatprep.subr.mxu0 0.0
        %2545 = vmatpush2.xpose.msra.mxu0 0.0
        %2546 = vmatprep.subr.mxu0 0.0
        %2547 = vmatpush2.xpose.msra.mxu0 0.0
        %2548 = vmatprep.subr.mxu0 0.0
        %2549 = vmatpush2.xpose.msra.mxu0 0.0
        %2550 = vmatprep.subr.mxu0 0.0
        %2551 = vmatpush2.xpose.msra.mxu0 0.0
        %2552 = vmatprep.subr.mxu0 0.0
        %2553 = vmatpush2.xpose.msra.mxu0 0.0
        %2554 = vmatprep.subr.mxu0 0.0
        %2555 = vmatpush2.xpose.msra.mxu0 0.0
        %2556 = vmatprep.subr.mxu0 0.0
        %2557 = vmatpush2.xpose.msra.mxu0 0.0
        %2558 = vmatprep.subr.mxu0 0.0
        %2559 = vmatpush2.xpose.msra.mxu0 0.0
        %2560 = vmatprep.subr.mxu0 0.0
        %2561 = vmatpush2.xpose.msra.mxu0 0.0
        %2562 = vmatprep.subr.mxu0 0.0
        %2563 = vmatpush2.xpose.msra.mxu0 0.0
        %2564 = vmatprep.mubr.f32.mxu0 0.0
        %2565 = vmatmul.mubr.f32.gmra.mxu0 %v2462
        %v2566 = vpop.f32.mrf.mxu0
        %v2567 = vadd.f32 %v2459, %v2566
        %v2568 = vpop.f32.mrf.mxu0
        %2569 = vdwg.mxu0
        %v2570 = vxor.u32 %v2567, 2147483648
        %v2571 = vmul.f32 %v2570, 1.442695
        %v2572 = vpow.pop %v2571
        %v2573 = vadd.f32 %v2572, 1.0
        %v2574 = vrcp.pop %v2573
        %v2575 = vmul.f32 1.0, %v2574
        %vm2576 = vcmask 778240
        %2577 = vst.msk [vmem:[%s470] sm:$0x1] %vm2576, %v2575
        %v2578 = vlaneseq
        %v2579 = vshrl.u32 %v2578, 7
        %v2580 = vadd.s32 %v2579, 8
        %v2581 = vadd.s32 %v2579, 16
        %v2582 = vadd.s32 %v2579, 24
        %v2583 = vadd.s32 %v2579, 32
        %v2584 = vadd.s32 %v2579, 40
        %v2585 = vadd.s32 %v2579, 48
        %v2586 = vadd.s32 %v2579, 56
        %v2587 = vadd.s32 %v2579, 64
        %v2588 = vadd.s32 %v2579, 72
        %v2589 = vadd.s32 %v2579, 80
        %v2590 = vadd.s32 %v2579, 88
        %vm2591 = vcmp.eq.s32.totalorder %v872, 0
        %vm2592 = vcmp.gt.f32.partialorder %v2575, 0.2
        %vm2593 = vcmp.ge.s32.totalorder %v872, 1
        %vm2594 = vmand %vm2592, %vm2593
        %vm2595 = vcmp.le.s32.totalorder %v872, 94
        %vm2596 = vmand %vm2594, %vm2595
        %vm2597 = vmor %vm2591, %vm2596
        %v2598 = vsel %vm2597, 1.0, 0.0
        %vm2599 = vcmp.le.s32.totalorder %v2579, %v872
        %vm2600 = vcmp.le.s32.totalorder %v2580, %v872
        %vm2601 = vcmp.le.s32.totalorder %v2581, %v872
        %vm2602 = vcmp.le.s32.totalorder %v2582, %v872
        %vm2603 = vcmp.le.s32.totalorder %v2583, %v872
        %vm2604 = vcmp.le.s32.totalorder %v2584, %v872
        %vm2605 = vcmp.le.s32.totalorder %v2585, %v872
        %vm2606 = vcmp.le.s32.totalorder %v2586, %v872
        %vm2607 = vcmp.le.s32.totalorder %v2587, %v872
        %vm2608 = vcmp.le.s32.totalorder %v2588, %v872
        %vm2609 = vcmp.le.s32.totalorder %v2589, %v872
        %vm2610 = vcmp.le.s32.totalorder %v2590, %v872
        %v2611 = vsel %vm2599, 1.0, 0.0
        %v2612 = vsel %vm2600, 1.0, 0.0
        %v2613 = vsel %vm2601, 1.0, 0.0
        %v2614 = vsel %vm2602, 1.0, 0.0
        %v2615 = vsel %vm2603, 1.0, 0.0
        %v2616 = vsel %vm2604, 1.0, 0.0
        %v2617 = vsel %vm2605, 1.0, 0.0
        %v2618 = vsel %vm2606, 1.0, 0.0
        %v2619 = vsel %vm2607, 1.0, 0.0
        %v2620 = vsel %vm2608, 1.0, 0.0
        %v2621 = vsel %vm2609, 1.0, 0.0
        %v2622 = vsel %vm2610, 1.0, 0.0
        %v2624 = vsel %vm1143, %v2598, 0
        %2626 = vmatprep.subr.mxu0 0.0
        %2627 = vmatpush1.msra.mxu0 0.0
        %2628 = vmatprep.subr.mxu0 0.0
        %2629 = vmatpush1.msra.mxu0 0.0
        %2630 = vmatprep.subr.mxu0 0.0
        %2631 = vmatpush1.msra.mxu0 0.0
        %2632 = vmatprep.subr.mxu0 0.0
        %2633 = vmatpush1.msra.mxu0 0.0
        %2634 = vmatprep.subr.mxu0 0.0
        %2635 = vmatpush1.msra.mxu0 %v2622
        %2636 = vmatprep.subr.mxu0 0.0
        %2637 = vmatpush1.msra.mxu0 %v2621
        %2638 = vmatprep.subr.mxu0 0.0
        %2639 = vmatpush1.msra.mxu0 %v2620
        %2640 = vmatprep.subr.mxu0 0.0
        %2641 = vmatpush1.msra.mxu0 %v2619
        %2642 = vmatprep.subr.mxu0 0.0
        %2643 = vmatpush1.msra.mxu0 %v2618
        %2644 = vmatprep.subr.mxu0 0.0
        %2645 = vmatpush1.msra.mxu0 %v2617
        %2646 = vmatprep.subr.mxu0 0.0
        %2647 = vmatpush1.msra.mxu0 %v2616
        %2648 = vmatprep.subr.mxu0 0.0
        %2649 = vmatpush1.msra.mxu0 %v2615
        %2650 = vmatprep.subr.mxu0 0.0
        %2651 = vmatpush1.msra.mxu0 %v2614
        %2652 = vmatprep.subr.mxu0 0.0
        %2653 = vmatpush1.msra.mxu0 %v2613
        %2654 = vmatprep.subr.mxu0 0.0
        %2655 = vmatpush1.msra.mxu0 %v2612
        %2656 = vmatprep.subr.mxu0 0.0
        %2657 = vmatpush1.msra.mxu0 %v2611
        %2658 = vmatprep.subr.mxu0 0.0
        %2659 = vmatpush2.msra.mxu0 0.0
        %2660 = vmatprep.subr.mxu0 0.0
        %2661 = vmatpush2.msra.mxu0 0.0
        %2662 = vmatprep.subr.mxu0 0.0
        %2663 = vmatpush2.msra.mxu0 0.0
        %2664 = vmatprep.subr.mxu0 0.0
        %2665 = vmatpush2.msra.mxu0 0.0
        %2666 = vmatprep.subr.mxu0 0.0
        %2667 = vmatpush2.msra.mxu0 0.0
        %2668 = vmatprep.subr.mxu0 0.0
        %2669 = vmatpush2.msra.mxu0 0.0
        %2670 = vmatprep.subr.mxu0 0.0
        %2671 = vmatpush2.msra.mxu0 0.0
        %2672 = vmatprep.subr.mxu0 0.0
        %2673 = vmatpush2.msra.mxu0 0.0
        %2674 = vmatprep.subr.mxu0 0.0
        %2675 = vmatpush2.msra.mxu0 0.0
        %2676 = vmatprep.subr.mxu0 0.0
        %2677 = vmatpush2.msra.mxu0 0.0
        %2678 = vmatprep.subr.mxu0 0.0
        %2679 = vmatpush2.msra.mxu0 0.0
        %2680 = vmatprep.subr.mxu0 0.0
        %2681 = vmatpush2.msra.mxu0 0.0
        %2682 = vmatprep.subr.mxu0 0.0
        %2683 = vmatpush2.msra.mxu0 0.0
        %2684 = vmatprep.subr.mxu0 0.0
        %2685 = vmatpush2.msra.mxu0 0.0
        %2686 = vmatprep.subr.mxu0 0.0
        %2687 = vmatpush2.msra.mxu0 0.0
        %2688 = vmatprep.subr.mxu0 0.0
        %2689 = vmatpush2.msra.mxu0 0.0
        %2690 = vmatprep.mubr.f32.mxu0 0.0
        %2691 = vmatmul.mubr.f32.gmra.mxu0 %v2624
        %v2692 = vpop.f32.mrf.mxu0
        %v2693 = vadd.f32 0.5, %v2692
        %v2694 = vpop.f32.mrf.mxu0
        %2695 = vdwg.mxu0
        %v2696 = vcvt.f32.s32.to.zero.pseudo %v2693
        %v2697 = vsub.s32 %v2696, 1
        %v2698 = vlaneseq
        %v2699 = vshrl.u32 %v2698, 7
        %v2700 = vsub.s32 0, %v2699
        %v2701 = vrot.slane %v2697, %v2700
        %vm2702 = vcmp.eq.s32.totalorder %v2701, %v2579
        %vm2703 = vcmp.eq.s32.totalorder %v2701, %v2580
        %vm2704 = vcmp.eq.s32.totalorder %v2701, %v2581
        %vm2705 = vcmp.eq.s32.totalorder %v2701, %v2582
        %vm2706 = vcmp.eq.s32.totalorder %v2701, %v2583
        %vm2707 = vcmp.eq.s32.totalorder %v2701, %v2584
        %vm2708 = vcmp.eq.s32.totalorder %v2701, %v2585
        %vm2709 = vcmp.eq.s32.totalorder %v2701, %v2586
        %vm2710 = vcmp.eq.s32.totalorder %v2701, %v2587
        %vm2711 = vcmp.eq.s32.totalorder %v2701, %v2588
        %vm2712 = vcmp.eq.s32.totalorder %v2701, %v2589
        %vm2713 = vcmp.eq.s32.totalorder %v2701, %v2590
        %v2714 = vsel %vm2702, 1.0, 0.0
        %v2715 = vsel %vm2703, 1.0, 0.0
        %v2716 = vsel %vm2704, 1.0, 0.0
        %v2717 = vsel %vm2705, 1.0, 0.0
        %v2718 = vsel %vm2706, 1.0, 0.0
        %v2719 = vsel %vm2707, 1.0, 0.0
        %v2720 = vsel %vm2708, 1.0, 0.0
        %v2721 = vsel %vm2709, 1.0, 0.0
        %v2722 = vsel %vm2710, 1.0, 0.0
        %v2723 = vsel %vm2711, 1.0, 0.0
        %v2724 = vsel %vm2712, 1.0, 0.0
        %v2725 = vsel %vm2713, 1.0, 0.0
        %v2727 = vsel %vm1143, %v2714, 0
        %v2730 = vsel %vm1143, %v2715, 0
        %v2733 = vsel %vm1143, %v2716, 0
        %v2736 = vsel %vm1143, %v2717, 0
        %v2739 = vsel %vm1143, %v2718, 0
        %v2742 = vsel %vm1143, %v2719, 0
        %v2745 = vsel %vm1143, %v2720, 0
        %v2748 = vsel %vm1143, %v2721, 0
        %v2751 = vsel %vm1143, %v2722, 0
        %v2754 = vsel %vm1143, %v2723, 0
        %v2757 = vsel %vm1143, %v2724, 0
        %v2760 = vsel %vm1143, %v2725, 0
        %2762 = vmatprep.subr.mxu0 0.0
        %2763 = vmatpush1.msra.mxu0 0.0
        %2764 = vmatprep.subr.mxu0 0.0
        %2765 = vmatpush1.msra.mxu0 0.0
        %2766 = vmatprep.subr.mxu0 0.0
        %2767 = vmatpush1.msra.mxu0 0.0
        %2768 = vmatprep.subr.mxu0 0.0
        %2769 = vmatpush1.msra.mxu0 0.0
        %2770 = vmatprep.subr.mxu0 0.0
        %2771 = vmatpush1.msra.mxu0 %v2260
        %2772 = vmatprep.subr.mxu0 0.0
        %2773 = vmatpush1.msra.mxu0 %v2259
        %2774 = vmatprep.subr.mxu0 0.0
        %2775 = vmatpush1.msra.mxu0 %v2258
        %2776 = vmatprep.subr.mxu0 0.0
        %2777 = vmatpush1.msra.mxu0 %v2257
        %2778 = vmatprep.subr.mxu0 0.0
        %2779 = vmatpush1.msra.mxu0 %v2256
        %2780 = vmatprep.subr.mxu0 0.0
        %2781 = vmatpush1.msra.mxu0 %v2255
        %2782 = vmatprep.subr.mxu0 0.0
        %2783 = vmatpush1.msra.mxu0 %v2254
        %2784 = vmatprep.subr.mxu0 0.0
        %2785 = vmatpush1.msra.mxu0 %v2253
        %2786 = vmatprep.subr.mxu0 0.0
        %2787 = vmatpush1.msra.mxu0 %v2252
        %2788 = vmatprep.subr.mxu0 0.0
        %2789 = vmatpush1.msra.mxu0 %v2251
        %2790 = vmatprep.subr.mxu0 0.0
        %2791 = vmatpush1.msra.mxu0 %v2250
        %2792 = vmatprep.subr.mxu0 0.0
        %2793 = vmatpush1.msra.mxu0 %v2249
        %2794 = vmatprep.subr.mxu0 0.0
        %2795 = vmatpush2.msra.mxu0 0.0
        %2796 = vmatprep.subr.mxu0 0.0
        %2797 = vmatpush2.msra.mxu0 0.0
        %2798 = vmatprep.subr.mxu0 0.0
        %2799 = vmatpush2.msra.mxu0 0.0
        %2800 = vmatprep.subr.mxu0 0.0
        %2801 = vmatpush2.msra.mxu0 0.0
        %2802 = vmatprep.subr.mxu0 0.0
        %2803 = vmatpush2.msra.mxu0 0.0
        %2804 = vmatprep.subr.mxu0 0.0
        %2805 = vmatpush2.msra.mxu0 0.0
        %2806 = vmatprep.subr.mxu0 0.0
        %2807 = vmatpush2.msra.mxu0 0.0
        %2808 = vmatprep.subr.mxu0 0.0
        %2809 = vmatpush2.msra.mxu0 0.0
        %2810 = vmatprep.subr.mxu0 0.0
        %2811 = vmatpush2.msra.mxu0 0.0
        %2812 = vmatprep.subr.mxu0 0.0
        %2813 = vmatpush2.msra.mxu0 0.0
        %2814 = vmatprep.subr.mxu0 0.0
        %2815 = vmatpush2.msra.mxu0 0.0
        %2816 = vmatprep.subr.mxu0 0.0
        %2817 = vmatpush2.msra.mxu0 0.0
        %2818 = vmatprep.subr.mxu0 0.0
        %2819 = vmatpush2.msra.mxu0 0.0
        %2820 = vmatprep.subr.mxu0 0.0
        %2821 = vmatpush2.msra.mxu0 0.0
        %2822 = vmatprep.subr.mxu0 0.0
        %2823 = vmatpush2.msra.mxu0 0.0
        %2824 = vmatprep.subr.mxu0 0.0
        %2825 = vmatpush2.msra.mxu0 0.0
        %2826 = vmatprep.mubr.f32.mxu0 0.0
        %2827 = vmatmul.mubr.f32.gmra.mxu0 %v2727
        %v2828 = vpop.f32.mrf.mxu0
        %v2829 = vadd.f32 0.0, %v2828
        %v2830 = vpop.f32.mrf.mxu0
        %2831 = vmatprep.mubr.f32.mxu0 0.0
        %2832 = vmatmul.mubr.f32.gmra.mxu0 %v2730
        %v2833 = vpop.f32.mrf.mxu0
        %v2834 = vadd.f32 0.0, %v2833
        %v2835 = vpop.f32.mrf.mxu0
        %2836 = vmatprep.mubr.f32.mxu0 0.0
        %2837 = vmatmul.mubr.f32.gmra.mxu0 %v2733
        %v2838 = vpop.f32.mrf.mxu0
        %v2839 = vadd.f32 0.0, %v2838
        %v2840 = vpop.f32.mrf.mxu0
        %2841 = vmatprep.mubr.f32.mxu0 0.0
        %2842 = vmatmul.mubr.f32.gmra.mxu0 %v2736
        %v2843 = vpop.f32.mrf.mxu0
        %v2844 = vadd.f32 0.0, %v2843
        %v2845 = vpop.f32.mrf.mxu0
        %2846 = vmatprep.mubr.f32.mxu0 0.0
        %2847 = vmatmul.mubr.f32.gmra.mxu0 %v2739
        %v2848 = vpop.f32.mrf.mxu0
        %v2849 = vadd.f32 0.0, %v2848
        %v2850 = vpop.f32.mrf.mxu0
        %2851 = vmatprep.mubr.f32.mxu0 0.0
        %2852 = vmatmul.mubr.f32.gmra.mxu0 %v2742
        %v2853 = vpop.f32.mrf.mxu0
        %v2854 = vadd.f32 0.0, %v2853
        %v2855 = vpop.f32.mrf.mxu0
        %2856 = vmatprep.mubr.f32.mxu0 0.0
        %2857 = vmatmul.mubr.f32.gmra.mxu0 %v2745
        %v2858 = vpop.f32.mrf.mxu0
        %v2859 = vadd.f32 0.0, %v2858
        %v2860 = vpop.f32.mrf.mxu0
        %2861 = vmatprep.mubr.f32.mxu0 0.0
        %2862 = vmatmul.mubr.f32.gmra.mxu0 %v2748
        %v2863 = vpop.f32.mrf.mxu0
        %v2864 = vadd.f32 0.0, %v2863
        %v2865 = vpop.f32.mrf.mxu0
        %2866 = vmatprep.mubr.f32.mxu0 0.0
        %2867 = vmatmul.mubr.f32.gmra.mxu0 %v2751
        %v2868 = vpop.f32.mrf.mxu0
        %v2869 = vadd.f32 0.0, %v2868
        %v2870 = vpop.f32.mrf.mxu0
        %2871 = vmatprep.mubr.f32.mxu0 0.0
        %2872 = vmatmul.mubr.f32.gmra.mxu0 %v2754
        %v2873 = vpop.f32.mrf.mxu0
        %v2874 = vadd.f32 0.0, %v2873
        %v2875 = vpop.f32.mrf.mxu0
        %2876 = vmatprep.mubr.f32.mxu0 0.0
        %2877 = vmatmul.mubr.f32.gmra.mxu0 %v2757
        %v2878 = vpop.f32.mrf.mxu0
        %v2879 = vadd.f32 0.0, %v2878
        %v2880 = vpop.f32.mrf.mxu0
        %2881 = vmatprep.mubr.f32.mxu0 0.0
        %2882 = vmatmul.mubr.f32.gmra.mxu0 %v2760
        %v2883 = vpop.f32.mrf.mxu0
        %v2884 = vadd.f32 0.0, %v2883
        %v2885 = vpop.f32.mrf.mxu0
        %2886 = vdwg.mxu0
        %v2887 = vsel %vm1143, %v2714, 0.0
        %2888 = vadd.xlane.f32.xlu0 %v2887
        %v2889 = vpop.xlane.xlu0 %2888
        %v2890 = vsel %vm1143, %v2715, 0.0
        %2891 = vadd.xlane.f32.xlu0 %v2890
        %v2892 = vpop.xlane.xlu0 %2891
        %v2893 = vsel %vm1143, %v2716, 0.0
        %2894 = vadd.xlane.f32.xlu0 %v2893
        %v2895 = vpop.xlane.xlu0 %2894
        %v2896 = vsel %vm1143, %v2717, 0.0
        %2897 = vadd.xlane.f32.xlu0 %v2896
        %v2898 = vpop.xlane.xlu0 %2897
        %v2899 = vsel %vm1143, %v2718, 0.0
        %2900 = vadd.xlane.f32.xlu0 %v2899
        %v2901 = vpop.xlane.xlu0 %2900
        %v2902 = vsel %vm1143, %v2719, 0.0
        %2903 = vadd.xlane.f32.xlu0 %v2902
        %v2904 = vpop.xlane.xlu0 %2903
        %v2905 = vsel %vm1143, %v2720, 0.0
        %2906 = vadd.xlane.f32.xlu0 %v2905
        %v2907 = vpop.xlane.xlu0 %2906
        %v2908 = vsel %vm1143, %v2721, 0.0
        %2909 = vadd.xlane.f32.xlu0 %v2908
        %v2910 = vpop.xlane.xlu0 %2909
        %v2911 = vsel %vm1143, %v2722, 0.0
        %2912 = vadd.xlane.f32.xlu0 %v2911
        %v2913 = vpop.xlane.xlu0 %2912
        %v2914 = vsel %vm1143, %v2723, 0.0
        %2915 = vadd.xlane.f32.xlu0 %v2914
        %v2916 = vpop.xlane.xlu0 %2915
        %v2917 = vsel %vm1143, %v2724, 0.0
        %2918 = vadd.xlane.f32.xlu0 %v2917
        %v2919 = vpop.xlane.xlu0 %2918
        %v2920 = vsel %vm1143, %v2725, 0.0
        %2921 = vadd.xlane.f32.xlu0 %v2920
        %v2922 = vpop.xlane.xlu0 %2921
        %v2923 = vmax.f32 %v2889, 1.0
        %v2924 = vmax.f32 %v2892, 1.0
        %v2925 = vmax.f32 %v2895, 1.0
        %v2926 = vmax.f32 %v2898, 1.0
        %v2927 = vmax.f32 %v2901, 1.0
        %v2928 = vmax.f32 %v2904, 1.0
        %v2929 = vmax.f32 %v2907, 1.0
        %v2930 = vmax.f32 %v2910, 1.0
        %v2931 = vmax.f32 %v2913, 1.0
        %v2932 = vmax.f32 %v2916, 1.0
        %v2933 = vmax.f32 %v2919, 1.0
        %v2934 = vmax.f32 %v2922, 1.0
        %v2935 = vrcp.pop %v2923
        %v2936 = vmul.f32 1.0, %v2935
        %v2937 = vrcp.pop %v2924
        %v2938 = vmul.f32 1.0, %v2937
        %v2939 = vrcp.pop %v2925
        %v2940 = vmul.f32 1.0, %v2939
        %v2941 = vrcp.pop %v2926
        %v2942 = vmul.f32 1.0, %v2941
        %v2943 = vrcp.pop %v2927
        %v2944 = vmul.f32 1.0, %v2943
        %v2945 = vrcp.pop %v2928
        %v2946 = vmul.f32 1.0, %v2945
        %v2947 = vrcp.pop %v2929
        %v2948 = vmul.f32 1.0, %v2947
        %v2949 = vrcp.pop %v2930
        %v2950 = vmul.f32 1.0, %v2949
        %v2951 = vrcp.pop %v2931
        %v2952 = vmul.f32 1.0, %v2951
        %v2953 = vrcp.pop %v2932
        %v2954 = vmul.f32 1.0, %v2953
        %v2955 = vrcp.pop %v2933
        %v2956 = vmul.f32 1.0, %v2955
        %v2957 = vrcp.pop %v2934
        %v2958 = vmul.f32 1.0, %v2957
        %v2959 = vmul.f32 %v2829, %v2936
        %v2960 = vmul.f32 %v2834, %v2938
        %v2961 = vmul.f32 %v2839, %v2940
        %v2962 = vmul.f32 %v2844, %v2942
        %v2963 = vmul.f32 %v2849, %v2944
        %v2964 = vmul.f32 %v2854, %v2946
        %v2965 = vmul.f32 %v2859, %v2948
        %v2966 = vmul.f32 %v2864, %v2950
        %v2967 = vmul.f32 %v2869, %v2952
        %v2968 = vmul.f32 %v2874, %v2954
        %v2969 = vmul.f32 %v2879, %v2956
        %v2970 = vmul.f32 %v2884, %v2958
        %v2971 = vld [vmem:[%s11] sm:$0xff]
        %v2972 = vld [vmem:[%s11 + $0x8] sm:$0xff]
        %v2973 = vld [vmem:[%s11 + $0x10] sm:$0xff]
        %v2974 = vld [vmem:[%s11 + $0x18] sm:$0xff]
        %v2975 = vld [vmem:[%s11 + $0x20] sm:$0xff]
        %v2976 = vld [vmem:[%s11 + $0x28] sm:$0xff]
        %v2977 = vld [vmem:[%s11 + $0x30] sm:$0xff]
        %v2978 = vld [vmem:[%s11 + $0x38] sm:$0xff]
        %v2979 = vld [vmem:[%s12] sm:$0x1]
        %v2981 = vlaneseq
        %v2982 = vshrl.u32 %v2981, 7
        %v2983 = vsub.s32 0, %v2982
        %v2984 = vrot.slane %v2979, %v2983
        %v2987 = vsel %vm697, %v2959, 0
        %v2990 = vsel %vm697, %v2960, 0
        %v2993 = vsel %vm697, %v2961, 0
        %v2996 = vsel %vm697, %v2962, 0
        %v2999 = vsel %vm697, %v2963, 0
        %v3002 = vsel %vm697, %v2964, 0
        %v3005 = vsel %vm697, %v2965, 0
        %v3008 = vsel %vm697, %v2966, 0
        %v3011 = vsel %vm697, %v2967, 0
        %v3014 = vsel %vm697, %v2968, 0
        %v3017 = vsel %vm697, %v2969, 0
        %v3020 = vsel %vm697, %v2970, 0
        %3022 = vmatprep.subr.mxu0 0.0
        %3023 = vmatpush1.msra.mxu0 0.0
        %3024 = vmatprep.subr.mxu0 0.0
        %3025 = vmatpush1.msra.mxu0 0.0
        %3026 = vmatprep.subr.mxu0 0.0
        %3027 = vmatpush1.msra.mxu0 0.0
        %3028 = vmatprep.subr.mxu0 0.0
        %3029 = vmatpush1.msra.mxu0 0.0
        %3030 = vmatprep.subr.mxu0 0.0
        %3031 = vmatpush1.msra.mxu0 0.0
        %3032 = vmatprep.subr.mxu0 0.0
        %3033 = vmatpush1.msra.mxu0 0.0
        %3034 = vmatprep.subr.mxu0 0.0
        %3035 = vmatpush1.msra.mxu0 0.0
        %3036 = vmatprep.subr.mxu0 0.0
        %3037 = vmatpush1.msra.mxu0 0.0
        %3038 = vmatprep.subr.mxu0 0.0
        %3039 = vmatpush1.msra.mxu0 %v2978
        %3040 = vmatprep.subr.mxu0 0.0
        %3041 = vmatpush1.msra.mxu0 %v2977
        %3042 = vmatprep.subr.mxu0 0.0
        %3043 = vmatpush1.msra.mxu0 %v2976
        %3044 = vmatprep.subr.mxu0 0.0
        %3045 = vmatpush1.msra.mxu0 %v2975
        %3046 = vmatprep.subr.mxu0 0.0
        %3047 = vmatpush1.msra.mxu0 %v2974
        %3048 = vmatprep.subr.mxu0 0.0
        %3049 = vmatpush1.msra.mxu0 %v2973
        %3050 = vmatprep.subr.mxu0 0.0
        %3051 = vmatpush1.msra.mxu0 %v2972
        %3052 = vmatprep.subr.mxu0 0.0
        %3053 = vmatpush1.msra.mxu0 %v2971
        %3054 = vmatprep.subr.mxu0 0.0
        %3055 = vmatpush2.msra.mxu0 0.0
        %3056 = vmatprep.subr.mxu0 0.0
        %3057 = vmatpush2.msra.mxu0 0.0
        %3058 = vmatprep.subr.mxu0 0.0
        %3059 = vmatpush2.msra.mxu0 0.0
        %3060 = vmatprep.subr.mxu0 0.0
        %3061 = vmatpush2.msra.mxu0 0.0
        %3062 = vmatprep.subr.mxu0 0.0
        %3063 = vmatpush2.msra.mxu0 0.0
        %3064 = vmatprep.subr.mxu0 0.0
        %3065 = vmatpush2.msra.mxu0 0.0
        %3066 = vmatprep.subr.mxu0 0.0
        %3067 = vmatpush2.msra.mxu0 0.0
        %3068 = vmatprep.subr.mxu0 0.0
        %3069 = vmatpush2.msra.mxu0 0.0
        %3070 = vmatprep.subr.mxu0 0.0
        %3071 = vmatpush2.msra.mxu0 0.0
        %3072 = vmatprep.subr.mxu0 0.0
        %3073 = vmatpush2.msra.mxu0 0.0
        %3074 = vmatprep.subr.mxu0 0.0
        %3075 = vmatpush2.msra.mxu0 0.0
        %3076 = vmatprep.subr.mxu0 0.0
        %3077 = vmatpush2.msra.mxu0 0.0
        %3078 = vmatprep.subr.mxu0 0.0
        %3079 = vmatpush2.msra.mxu0 0.0
        %3080 = vmatprep.subr.mxu0 0.0
        %3081 = vmatpush2.msra.mxu0 0.0
        %3082 = vmatprep.subr.mxu0 0.0
        %3083 = vmatpush2.msra.mxu0 0.0
        %3084 = vmatprep.subr.mxu0 0.0
        %3085 = vmatpush2.msra.mxu0 0.0
        %3086 = vmatprep.mubr.f32.mxu0 0.0
        %3087 = vmatmul.mubr.f32.gmra.mxu0 %v2987
        %v3088 = vpop.f32.mrf.mxu0
        %v3089 = vadd.f32 %v2984, %v3088
        %v3090 = vpop.f32.mrf.mxu0
        %3091 = vmatprep.mubr.f32.mxu0 0.0
        %3092 = vmatmul.mubr.f32.gmra.mxu0 %v2990
        %v3093 = vpop.f32.mrf.mxu0
        %v3094 = vadd.f32 %v2984, %v3093
        %v3095 = vpop.f32.mrf.mxu0
        %3096 = vmatprep.mubr.f32.mxu0 0.0
        %3097 = vmatmul.mubr.f32.gmra.mxu0 %v2993
        %v3098 = vpop.f32.mrf.mxu0
        %v3099 = vadd.f32 %v2984, %v3098
        %v3100 = vpop.f32.mrf.mxu0
        %3101 = vmatprep.mubr.f32.mxu0 0.0
        %3102 = vmatmul.mubr.f32.gmra.mxu0 %v2996
        %v3103 = vpop.f32.mrf.mxu0
        %v3104 = vadd.f32 %v2984, %v3103
        %v3105 = vpop.f32.mrf.mxu0
        %3106 = vmatprep.mubr.f32.mxu0 0.0
        %3107 = vmatmul.mubr.f32.gmra.mxu0 %v2999
        %v3108 = vpop.f32.mrf.mxu0
        %v3109 = vadd.f32 %v2984, %v3108
        %v3110 = vpop.f32.mrf.mxu0
        %3111 = vmatprep.mubr.f32.mxu0 0.0
        %3112 = vmatmul.mubr.f32.gmra.mxu0 %v3002
        %v3113 = vpop.f32.mrf.mxu0
        %v3114 = vadd.f32 %v2984, %v3113
        %v3115 = vpop.f32.mrf.mxu0
        %3116 = vmatprep.mubr.f32.mxu0 0.0
        %3117 = vmatmul.mubr.f32.gmra.mxu0 %v3005
        %v3118 = vpop.f32.mrf.mxu0
        %v3119 = vadd.f32 %v2984, %v3118
        %v3120 = vpop.f32.mrf.mxu0
        %3121 = vmatprep.mubr.f32.mxu0 0.0
        %3122 = vmatmul.mubr.f32.gmra.mxu0 %v3008
        %v3123 = vpop.f32.mrf.mxu0
        %v3124 = vadd.f32 %v2984, %v3123
        %v3125 = vpop.f32.mrf.mxu0
        %3126 = vmatprep.mubr.f32.mxu0 0.0
        %3127 = vmatmul.mubr.f32.gmra.mxu0 %v3011
        %v3128 = vpop.f32.mrf.mxu0
        %v3129 = vadd.f32 %v2984, %v3128
        %v3130 = vpop.f32.mrf.mxu0
        %3131 = vmatprep.mubr.f32.mxu0 0.0
        %3132 = vmatmul.mubr.f32.gmra.mxu0 %v3014
        %v3133 = vpop.f32.mrf.mxu0
        %v3134 = vadd.f32 %v2984, %v3133
        %v3135 = vpop.f32.mrf.mxu0
        %3136 = vmatprep.mubr.f32.mxu0 0.0
        %3137 = vmatmul.mubr.f32.gmra.mxu0 %v3017
        %v3138 = vpop.f32.mrf.mxu0
        %v3139 = vadd.f32 %v2984, %v3138
        %v3140 = vpop.f32.mrf.mxu0
        %3141 = vmatprep.mubr.f32.mxu0 0.0
        %3142 = vmatmul.mubr.f32.gmra.mxu0 %v3020
        %v3143 = vpop.f32.mrf.mxu0
        %v3144 = vadd.f32 %v2984, %v3143
        %v3145 = vpop.f32.mrf.mxu0
        %3146 = vdwg.mxu0
        %3147 = vst.msk [vmem:[%s481] sm:$0xff] %vm697, %v3089
        %3148 = vst.msk [vmem:[%s481 + $0x8] sm:$0xff] %vm697, %v3094
        %3149 = vst.msk [vmem:[%s481 + $0x10] sm:$0xff] %vm697, %v3099
        %3150 = vst.msk [vmem:[%s481 + $0x18] sm:$0xff] %vm697, %v3104
        %3151 = vst.msk [vmem:[%s481 + $0x20] sm:$0xff] %vm697, %v3109
        %3152 = vst.msk [vmem:[%s481 + $0x28] sm:$0xff] %vm697, %v3114
        %3153 = vst.msk [vmem:[%s481 + $0x30] sm:$0xff] %vm697, %v3119
        %3154 = vst.msk [vmem:[%s481 + $0x38] sm:$0xff] %vm697, %v3124
        %3155 = vst.msk [vmem:[%s481 + $0x40] sm:$0xff] %vm697, %v3129
        %3156 = vst.msk [vmem:[%s481 + $0x48] sm:$0xff] %vm697, %v3134
        %3157 = vst.msk [vmem:[%s481 + $0x50] sm:$0xff] %vm697, %v3139
        %3158 = vst.msk [vmem:[%s481 + $0x58] sm:$0xff] %vm697, %v3144
        %s3159 = smul.u32 12, %s31
        %p3160 = scmp.lt.s32.totalorder %s3159, 23
        %s3161 = scalar_select %p3160, %s3159, 23
        %s3162 = smul.addr %s3161, 8
        %s3163 = scalar_lea.vmem %s13, %s3162
        %s3164 = sand.u32 %s343, 1
        %s3165 = scalar_lea.sflag [#allocation4], %s3164
        %s3166 = sand.u32 %s343, 1
        %s3167 = scalar_lea.vmem [#allocation3], %s3166
        // Predicated region
        $region73: #{tpu_custom_call.1} parent=71 // pred_check
          %p3168 = pneg %p327
        $region74: #{tpu_custom_call.1} parent=71 // pred_check_branch
          %3170 = sbr.rel (%p3168) target = $region76
        $region75: #{tpu_custom_call.1} parent=71 // pred_region
          %s3171 = smul.u32 12, %s31
        $region76: #{tpu_custom_call.1} parent=71 // pred_fallthru
          _
        // Predicated region
        $region77: #{tpu_custom_call.1} parent=71 // pred_check
          %p3172 = pneg %p353
        $region78: #{tpu_custom_call.1} parent=71 // pred_check_branch
          %3174 = sbr.rel (%p3172) target = $region80
        $region79: #{tpu_custom_call.1} parent=71 // pred_region
          %s3176 = ssub.s32 16, 16
          %3177 = vsyncadd %s3165, %s3176
          %s3178 = smul.addr %s31, 16
          %s3179 = scalar_lea.hbm %s14, %s3178
          %s3181 = sshll.u32 %s3167, 4
          %s3182 = int_to_ptr.vmem [resolvable:$true] %s3181
          %3184 = dma.vmem_to_hbm [thread:$0]  %s3182, 16, %s3179, %s3165
        $region80: #{tpu_custom_call.1} parent=71 // pred_fallthru
          _
      $region72: #{tpu_custom_call.1} parent=5 // pred_fallthru
        _
      %p3185 = scmp.le.s32.totalorder 2, %s26
      // Predicated region
      $region81: #{tpu_custom_call.1} parent=5 // pred_check
        %p3186 = pneg %p3185
      $region82: #{tpu_custom_call.1} parent=5 // pred_check_branch
        %3188 = sbr.rel (%p3186) target = $region84
      $region83: #{tpu_custom_call.1} parent=5 // pred_region
        %s3189 = ssub.s32 %s26, 2
        // Predicated region
        $region85: #{tpu_custom_call.1} parent=83 // pred_check
          %p3190 = pneg %p333
        $region86: #{tpu_custom_call.1} parent=83 // pred_check_branch
          %3192 = sbr.rel (%p3190) target = $region88
        $region87: #{tpu_custom_call.1} parent=83 // pred_region
          %s3193 = smul.u32 12, %s32
          %p3194 = scmp.lt.s32.totalorder %s3193, 23
          %s3195 = scalar_select %p3194, %s3193, 23
          %s3196 = smul.addr %s3195, 8
          %s3197 = scalar_lea.vmem %s13, %s3196
        $region88: #{tpu_custom_call.1} parent=83 // pred_fallthru
          _
        // Predicated region
        $region89: #{tpu_custom_call.1} parent=83 // pred_check
          %p3198 = pneg %p359
        $region90: #{tpu_custom_call.1} parent=83 // pred_check_branch
          %3200 = sbr.rel (%p3198) target = $region92
        $region91: #{tpu_custom_call.1} parent=83 // pred_region
          %s3201 = sand.u32 %s344, 1
          %s3202 = scalar_lea.sflag [#allocation4], %s3201
          %s3203 = sand.u32 %s344, 1
          %s3204 = scalar_lea.vmem [#allocation3], %s3203
          %3205 = dma.done %s3202, 16
        $region92: #{tpu_custom_call.1} parent=83 // pred_fallthru
          _
      $region84: #{tpu_custom_call.1} parent=5 // pred_fallthru
        _
    $region6: #{tpu_custom_call.1} parent=1 // loop_footer
      %s30 = sadd.s32 1, %s26
    $region7: #{tpu_custom_call.1} parent=1 // loop_footer_branch
      %25 = sbr.rel target = $region3
    $region8: #{tpu_custom_call.1} parent=1 // loop_exit
      _
    %3206 = vsyncpa [#allocation4], 1
    %s3207 = scalar_lea.sflag [#allocation4], 1
    %3208 = vsyncpa %s3207, 1

</llo_original>
